<compile_context>
chip_gen: v6e
topology: v6e:2x2x1
jax: 0.10.0
libtpu: 0.0.40
codegen_flags: <defaults>
</compile_context>

<pallas_src>
import math
import functools

import jax
import jax.numpy as jnp
from jax.experimental import pallas as pl
from jax.experimental.pallas import tpu as pltpu


def _round_up(x, m):
    return (x + m - 1) // m * m


def _pad_to(x, shape):
    pads = [(0, t - s) for s, t in zip(x.shape, shape)]
    return jnp.pad(x, pads)


def _encoder_layer_kernel(
    x_ref,                      # (1, S, Dp) input block for batch b (zero-padded lanes)
    g1_ref, b1_ref,             # (1, Dp) norm1 gamma/beta (zero-padded)
    wq_ref, bq_ref,             # (H, Dp, hd), (H, 1, hd)  per-head Q proj (scaling folded in)
    wk_ref, bk_ref,             # (H, Dp, hd), (H, 1, hd)
    wv_ref, bv_ref,             # (H, Dp, hd), (H, 1, hd)
    wo_ref, bo_ref,             # (H, hd, Dp), (1, Dp)     per-head out proj (lane-padded output)
    g2_ref, b2_ref,             # (1, Dp) norm2 gamma/beta
    w1_ref, b1f_ref,            # (Dp, F), (1, F)          linear1 (pre-transposed)
    w2_ref, b2f_ref,            # (F, Dp), (1, Dp)         linear2 (pre-transposed)
    o_ref,                      # (1, S, Dp) output block
    *, d_model, eps,
):
    x = x_ref[0]                                  # (S, Dp) float32
    S, Dp = x.shape
    H = wq_ref.shape[0]

    # Lane mask so LayerNorm statistics only see the real d_model features.
    if d_model == Dp:
        mask = None
    else:
        lane = jax.lax.broadcasted_iota(jnp.int32, (1, Dp), 1)
        mask = (lane < d_model).astype(jnp.float32)
    inv_d = 1.0 / float(d_model)

    def layernorm(y, g, b):
        # y's padded lanes are guaranteed zero, so the plain sum is the true mean.
        mu = jnp.sum(y, axis=-1, keepdims=True) * inv_d
        diff = y - mu
        if mask is not None:
            diff = diff * mask                    # zero out padded lanes exactly
        var = jnp.sum(diff * diff, axis=-1, keepdims=True) * inv_d
        return diff * jax.lax.rsqrt(var + eps) * g + b

    # ---- norm1 ----
    xn = layernorm(x, g1_ref[...], b1_ref[...])   # (S, Dp); padded lanes == 0

    # ---- multi-head self-attention (q = k = v = xn), heads batched on axis 0 ----
    xn_h = jnp.broadcast_to(xn, (H, S, Dp))       # (H, S, Dp)
    q = jnp.einsum("hse,hef->hsf", xn_h, wq_ref[...],
                   preferred_element_type=jnp.float32) + bq_ref[...]   # (H, S, hd)
    k = jnp.einsum("hse,hef->hsf", xn_h, wk_ref[...],
                   preferred_element_type=jnp.float32) + bk_ref[...]
    v = jnp.einsum("hse,hef->hsf", xn_h, wv_ref[...],
                   preferred_element_type=jnp.float32) + bv_ref[...]

    scores = jnp.einsum("hqf,hkf->hqk", q, k,
                        preferred_element_type=jnp.float32)            # (H, S, S)
    scores = scores - jnp.max(scores, axis=-1, keepdims=True)
    p = jnp.exp(scores)
    p = p * pl.reciprocal(jnp.sum(p, axis=-1, keepdims=True), approx=True)
    ctx = jnp.einsum("hqk,hkf->hqf", p, v,
                     preferred_element_type=jnp.float32)               # (H, S, hd)

    # Head-concat folded into the output projection (no lane concatenate).
    attn_h = jnp.einsum("hqf,hfe->hqe", ctx, wo_ref[...],
                        preferred_element_type=jnp.float32)            # (H, S, Dp)
    attn_out = jnp.sum(attn_h, axis=0) + bo_ref[...]                   # (S, Dp)

    # residual 1 (dropout1 = identity in eval)
    src = x + attn_out

    # ---- norm2 + feed-forward: linear2(relu(linear1(xn2))) ----
    xn2 = layernorm(src, g2_ref[...], b2_ref[...])
    h1 = jnp.dot(xn2, w1_ref[...], preferred_element_type=jnp.float32) + b1f_ref[...]
    h1 = jnp.maximum(h1, 0.0)                                          # relu
    ff = jnp.dot(h1, w2_ref[...], preferred_element_type=jnp.float32) + b2f_ref[...]

    # residual 2 (dropout2 = identity in eval)
    o_ref[0] = (src + ff).astype(o_ref.dtype)


def transformer_encoder_layer_residual(src_sbd, params, *, nhead, eps=1e-5):
    """src_sbd: (S, B, D) float32, matching the PyTorch module's (seq, batch, d_model)."""
    S, B, D = src_sbd.shape
    hd = D // nhead
    F = params["w1"].shape[0]

    Dp = _round_up(D, 128)

    # ---- host-side layout work: transpose to (B,S,D), pad lanes, pre-transpose weights ----
    x_bsd = _pad_to(jnp.transpose(src_sbd, (1, 0, 2)), (B, S, Dp))

    g1 = _pad_to(params["g1"], (1, Dp)); b1 = _pad_to(params["b1"], (1, Dp))
    g2 = _pad_to(params["g2"], (1, Dp)); b2 = _pad_to(params["b2"], (1, Dp))

    wqkv = params["wqkv"]                       # (3D, D): rows [0:D)=Wq, [D:2D)=Wk, [2D:3D)=Wv
    bqkv = params["bqkv"][0]                    # (3D,)
    scaling = 1.0 / math.sqrt(hd)

    def head_proj(w, b, scale=1.0):
        # w: (D_out=D, D_in=D) PyTorch layout; projection is x @ w.T + b.
        # Only the contraction dim is padded (to match the padded activations);
        # the head dim stays unpadded (block dim == full dim is legal).
        wt = (w.T * scale).reshape(D, nhead, hd).transpose(1, 0, 2)   # (H, D_in, hd)
        wt = _pad_to(wt, (nhead, Dp, hd))
        bh = (b * scale).reshape(nhead, 1, hd)
        return wt, bh

    wq, bq = head_proj(wqkv[:D], bqkv[:D], scaling)      # 1/sqrt(hd) folded into Q
    wk, bk = head_proj(wqkv[D:2 * D], bqkv[D:2 * D])
    wv, bv = head_proj(wqkv[2 * D:], bqkv[2 * D:])

    # out_proj: attn @ Wo^T + bo, split row-blocks of Wo^T per head.
    # Output lanes are zero-padded so the residual / layernorm padding invariant holds.
    wo_h = _pad_to(params["wo"].T.reshape(nhead, hd, D), (nhead, hd, Dp))
    bo = _pad_to(params["bo"], (1, Dp))

    w1_t = _pad_to(params["w1"].T, (Dp, F)); b1f = params["b1f"]          # (Dp, F), (1, F)
    w2_t = _pad_to(params["w2"].T, (F, Dp)); b2f = _pad_to(params["b2f"], (1, Dp))

    full = lambda shape: pl.BlockSpec(shape, lambda b: (0,) * len(shape))

    kernel = functools.partial(_encoder_layer_kernel, d_model=D, eps=eps)

    out_bsd = pl.pallas_call(
        kernel,
        out_shape=jax.ShapeDtypeStruct((B, S, Dp), jnp.float32),
        grid_spec=pltpu.PrefetchScalarGridSpec(
            num_scalar_prefetch=0,
            grid=(B,),
            in_specs=[
                pl.BlockSpec((1, S, Dp), lambda b: (b, 0, 0)),       # x
                full((1, Dp)), full((1, Dp)),                        # norm1
                full((nhead, Dp, hd)), full((nhead, 1, hd)),         # Q
                full((nhead, Dp, hd)), full((nhead, 1, hd)),         # K
                full((nhead, Dp, hd)), full((nhead, 1, hd)),         # V
                full((nhead, hd, Dp)), full((1, Dp)),                # out proj
                full((1, Dp)), full((1, Dp)),                        # norm2
                full((Dp, F)), full((1, F)),                         # linear1
                full((F, Dp)), full((1, Dp)),                        # linear2
            ],
            out_specs=pl.BlockSpec((1, S, Dp), lambda b: (b, 0, 0)),
        ),
        compiler_params=pltpu.CompilerParams(
            dimension_semantics=("parallel",),
            vmem_limit_bytes=32 * 1024 * 1024,
        ),
    )(
        x_bsd,
        g1, b1,
        wq, bq, wk, bk, wv, bv,
        wo_h, bo,
        g2, b2,
        w1_t, b1f, w2_t, b2f,
    )
    return jnp.transpose(out_bsd[:, :, :D], (1, 0, 2))   # back to (S, B, D)


def _reference(src_sbd, params, *, nhead):
    """Pure-JAX reference with identical semantics (for correctness check)."""
    S, B, D = src_sbd.shape
    hd = D // nhead
    eps = 1e-5

    def ln(x, g, b):
        mu = jnp.mean(x, -1, keepdims=True)
        var = jnp.mean((x - mu) ** 2, -1, keepdims=True)
        return (x - mu) / jnp.sqrt(var + eps) * g + b

    x = src_sbd
    xn = ln(x, params["g1"][0], params["b1"][0])                   # (S,B,D)
    qkv = jnp.einsum("sbd,ed->sbe", xn, params["wqkv"]) + params["bqkv"][0]
    q, k, v = qkv[..., :D], qkv[..., D:2 * D], qkv[..., 2 * D:]
    q = q.reshape(S, B, nhead, hd) / math.sqrt(hd)
    k = k.reshape(S, B, nhead, hd)
    v = v.reshape(S, B, nhead, hd)
    scores = jnp.einsum("qbhd,kbhd->bhqk", q, k)
    p = jax.nn.softmax(scores, axis=-1)
    attn = jnp.einsum("bhqk,kbhd->qbhd", p, v).reshape(S, B, D)
    attn = jnp.einsum("sbd,ed->sbe", attn, params["wo"]) + params["bo"][0]
    src = x + attn
    xn2 = ln(src, params["g2"][0], params["b2"][0])
    h1 = jax.nn.relu(jnp.einsum("sbd,fd->sbf", xn2, params["w1"]) + params["b1f"][0])
    ff = jnp.einsum("sbf,df->sbd", h1, params["w2"]) + params["b2f"][0]
    return src + ff


if __name__ == "__main__":
    # Small shapes consistent with the module: seq=8, batch=2, d_model=32, nhead=4, dim_feedforward=64
    S, B, D, NHEAD, FF = 8, 2, 32, 4, 64

    key = jax.random.PRNGKey(0)
    ks = jax.random.split(key, 12)

    params = {
        "g1":   jnp.ones((1, D), jnp.float32),
        "b1":   jnp.zeros((1, D), jnp.float32),
        "wqkv": 0.1 * jax.random.normal(ks[0], (3 * D, D), jnp.float32),
        "bqkv": 0.1 * jax.random.normal(ks[1], (1, 3 * D), jnp.float32),
        "wo":   0.1 * jax.random.normal(ks[2], (D, D), jnp.float32),
        "bo":   0.1 * jax.random.normal(ks[3], (1, D), jnp.float32),
        "g2":   jnp.ones((1, D), jnp.float32) + 0.05 * jax.random.normal(ks[4], (1, D), jnp.float32),
        "b2":   0.05 * jax.random.normal(ks[5], (1, D), jnp.float32),
        "w1":   0.1 * jax.random.normal(ks[6], (FF, D), jnp.float32),
        "b1f":  0.1 * jax.random.normal(ks[7], (1, FF), jnp.float32),
        "w2":   0.1 * jax.random.normal(ks[8], (D, FF), jnp.float32),
        "b2f":  0.1 * jax.random.normal(ks[9], (1, D), jnp.float32),
    }

    src = jax.random.normal(ks[10], (S, B, D), jnp.float32)

    out = transformer_encoder_layer_residual(src, params, nhead=NHEAD)
    out = jax.block_until_ready(out)

    ref = _reference(src, params, nhead=NHEAD)
    assert out.shape == (S, B, D)
    # Slightly relaxed tolerance: softmax denominator uses the EUP approximate reciprocal.
    assert jnp.allclose(out, ref, atol=5e-3, rtol=5e-3), (
        f"max abs err {jnp.max(jnp.abs(out - ref))}"
    )
    print("KERNEL_OK")
</pallas_src>

<mosaic_0001>
module attributes {stable_mosaic.version = 11 : i64} {
  func.func @_encoder_layer_kernel(%arg0: i32, %arg1: memref<1x8x128xf32, #tpu.memory_space<vmem>>, %arg2: memref<1x128xf32, #tpu.memory_space<vmem>>, %arg3: memref<1x128xf32, #tpu.memory_space<vmem>>, %arg4: memref<4x128x8xf32, #tpu.memory_space<vmem>>, %arg5: memref<4x1x8xf32, #tpu.memory_space<vmem>>, %arg6: memref<4x128x8xf32, #tpu.memory_space<vmem>>, %arg7: memref<4x1x8xf32, #tpu.memory_space<vmem>>, %arg8: memref<4x128x8xf32, #tpu.memory_space<vmem>>, %arg9: memref<4x1x8xf32, #tpu.memory_space<vmem>>, %arg10: memref<4x8x128xf32, #tpu.memory_space<vmem>>, %arg11: memref<1x128xf32, #tpu.memory_space<vmem>>, %arg12: memref<1x128xf32, #tpu.memory_space<vmem>>, %arg13: memref<1x128xf32, #tpu.memory_space<vmem>>, %arg14: memref<128x64xf32, #tpu.memory_space<vmem>>, %arg15: memref<1x64xf32, #tpu.memory_space<vmem>>, %arg16: memref<64x128xf32, #tpu.memory_space<vmem>>, %arg17: memref<1x128xf32, #tpu.memory_space<vmem>>, %arg18: memref<1x8x128xf32, #tpu.memory_space<vmem>>) attributes {dimension_semantics = [#tpu.dimension_semantics<parallel>], iteration_bounds = array<i64: 2>, scalar_prefetch = 0 : i64, scratch_operands = 0 : i64, tpu.core_type = #tpu.core_type<tc>, window_params = [{transform_indices = @transform_0, window_bounds = array<i64: 1, 8, 128>}, {pipeline_mode = #tpu.pipeline_mode<synchronous>, transform_indices = @transform_1, window_bounds = array<i64: 1, 128>}, {pipeline_mode = #tpu.pipeline_mode<synchronous>, transform_indices = @transform_2, window_bounds = array<i64: 1, 128>}, {pipeline_mode = #tpu.pipeline_mode<synchronous>, transform_indices = @transform_3, window_bounds = array<i64: 4, 128, 8>}, {pipeline_mode = #tpu.pipeline_mode<synchronous>, transform_indices = @transform_4, window_bounds = array<i64: 4, 1, 8>}, {pipeline_mode = #tpu.pipeline_mode<synchronous>, transform_indices = @transform_5, window_bounds = array<i64: 4, 128, 8>}, {pipeline_mode = #tpu.pipeline_mode<synchronous>, transform_indices = @transform_6, window_bounds = array<i64: 4, 1, 8>}, {pipeline_mode = #tpu.pipeline_mode<synchronous>, transform_indices = @transform_7, window_bounds = array<i64: 4, 128, 8>}, {pipeline_mode = #tpu.pipeline_mode<synchronous>, transform_indices = @transform_8, window_bounds = array<i64: 4, 1, 8>}, {pipeline_mode = #tpu.pipeline_mode<synchronous>, transform_indices = @transform_9, window_bounds = array<i64: 4, 8, 128>}, {pipeline_mode = #tpu.pipeline_mode<synchronous>, transform_indices = @transform_10, window_bounds = array<i64: 1, 128>}, {pipeline_mode = #tpu.pipeline_mode<synchronous>, transform_indices = @transform_11, window_bounds = array<i64: 1, 128>}, {pipeline_mode = #tpu.pipeline_mode<synchronous>, transform_indices = @transform_12, window_bounds = array<i64: 1, 128>}, {pipeline_mode = #tpu.pipeline_mode<synchronous>, transform_indices = @transform_13, window_bounds = array<i64: 128, 64>}, {pipeline_mode = #tpu.pipeline_mode<synchronous>, transform_indices = @transform_14, window_bounds = array<i64: 1, 64>}, {pipeline_mode = #tpu.pipeline_mode<synchronous>, transform_indices = @transform_15, window_bounds = array<i64: 64, 128>}, {pipeline_mode = #tpu.pipeline_mode<synchronous>, transform_indices = @transform_16, window_bounds = array<i64: 1, 128>}, {transform_indices = @transform_17, window_bounds = array<i64: 1, 8, 128>}]} {
    %c0 = arith.constant 0 : index
    %c0_0 = arith.constant 0 : index
    %c0_1 = arith.constant 0 : index
    %0 = vector.load %arg1[%c0, %c0_0, %c0_1] : memref<1x8x128xf32, #tpu.memory_space<vmem>>, vector<1x8x128xf32>
    %1 = vector.shape_cast %0 : vector<1x8x128xf32> to vector<8x128xf32>
    %2 = tpu.iota {dimensions = array<i32: 1>} : vector<1x128xi32>
    %c32_i32 = arith.constant 32 : i32
    %3 = vector.broadcast %c32_i32 : i32 to vector<1x128xi32>
    %4 = arith.cmpi slt, %2, %3 : vector<1x128xi32>
    %5 = arith.extui %4 : vector<1x128xi1> to vector<1x128xi32>
    %6 = arith.sitofp %5 : vector<1x128xi32> to vector<1x128xf32>
    %c0_2 = arith.constant 0 : index
    %c0_3 = arith.constant 0 : index
    %7 = vector.load %arg2[%c0_2, %c0_3] : memref<1x128xf32, #tpu.memory_space<vmem>>, vector<1x128xf32>
    %c0_4 = arith.constant 0 : index
    %c0_5 = arith.constant 0 : index
    %8 = vector.load %arg3[%c0_4, %c0_5] : memref<1x128xf32, #tpu.memory_space<vmem>>, vector<1x128xf32>
    %cst = arith.constant dense<0.000000e+00> : vector<8xf32>
    %9 = vector.multi_reduction <add>, %1, %cst [1] : vector<8x128xf32> to vector<8xf32>
    %10 = vector.shape_cast %9 : vector<8xf32> to vector<8x1xf32>
    %cst_6 = arith.constant 3.125000e-02 : f32
    %11 = vector.broadcast %cst_6 : f32 to vector<8x1xf32>
    %12 = arith.mulf %10, %11 : vector<8x1xf32>
    %13 = vector.broadcast %12 : vector<8x1xf32> to vector<8x128xf32>
    %14 = arith.subf %1, %13 : vector<8x128xf32>
    %15 = vector.broadcast %6 : vector<1x128xf32> to vector<8x128xf32>
    %16 = arith.mulf %14, %15 : vector<8x128xf32>
    %17 = arith.mulf %16, %16 : vector<8x128xf32>
    %cst_7 = arith.constant dense<0.000000e+00> : vector<8xf32>
    %18 = vector.multi_reduction <add>, %17, %cst_7 [1] : vector<8x128xf32> to vector<8xf32>
    %19 = vector.shape_cast %18 : vector<8xf32> to vector<8x1xf32>
    %cst_8 = arith.constant 3.125000e-02 : f32
    %20 = vector.broadcast %cst_8 : f32 to vector<8x1xf32>
    %21 = arith.mulf %19, %20 : vector<8x1xf32>
    %cst_9 = arith.constant 9.99999974E-6 : f32
    %22 = vector.broadcast %cst_9 : f32 to vector<8x1xf32>
    %23 = arith.addf %21, %22 : vector<8x1xf32>
    %24 = math.rsqrt %23 : vector<8x1xf32>
    %25 = vector.broadcast %24 : vector<8x1xf32> to vector<8x128xf32>
    %26 = arith.mulf %16, %25 : vector<8x128xf32>
    %27 = vector.broadcast %7 : vector<1x128xf32> to vector<8x128xf32>
    %28 = arith.mulf %26, %27 : vector<8x128xf32>
    %29 = vector.broadcast %8 : vector<1x128xf32> to vector<8x128xf32>
    %30 = arith.addf %28, %29 : vector<8x128xf32>
    %31 = vector.shape_cast %30 : vector<8x128xf32> to vector<1x8x128xf32>
    %32 = vector.broadcast %31 : vector<1x8x128xf32> to vector<4x8x128xf32>
    %c0_10 = arith.constant 0 : index
    %c0_11 = arith.constant 0 : index
    %c0_12 = arith.constant 0 : index
    %33 = vector.load %arg4[%c0_10, %c0_11, %c0_12] : memref<4x128x8xf32, #tpu.memory_space<vmem>>, vector<4x128x8xf32>
    "tpu.trace_start"() <{level = 10 : i32, message = "hse,hef->hsf"}> : () -> ()
    %cst_13 = arith.constant dense<0.000000e+00> : vector<4x8x8xf32>
    %34 = tpu.matmul %32, %33, %cst_13 {dimension_numbers = #tpu.dot_dimension_numbers<[2], [1], [1], [2], [0, 0, 0, 1, 1, 2], [0], [0]>} : vector<4x8x128xf32>, vector<4x128x8xf32>, vector<4x8x8xf32> -> vector<4x8x8xf32>
    "tpu.trace_stop"() : () -> ()
    %c0_14 = arith.constant 0 : index
    %c0_15 = arith.constant 0 : index
    %c0_16 = arith.constant 0 : index
    %35 = vector.load %arg5[%c0_14, %c0_15, %c0_16] : memref<4x1x8xf32, #tpu.memory_space<vmem>>, vector<4x1x8xf32>
    %36 = vector.broadcast %35 : vector<4x1x8xf32> to vector<4x8x8xf32>
    %37 = arith.addf %34, %36 : vector<4x8x8xf32>
    %c0_17 = arith.constant 0 : index
    %c0_18 = arith.constant 0 : index
    %c0_19 = arith.constant 0 : index
    %38 = vector.load %arg6[%c0_17, %c0_18, %c0_19] : memref<4x128x8xf32, #tpu.memory_space<vmem>>, vector<4x128x8xf32>
    "tpu.trace_start"() <{level = 10 : i32, message = "hse,hef->hsf"}> : () -> ()
    %cst_20 = arith.constant dense<0.000000e+00> : vector<4x8x8xf32>
    %39 = tpu.matmul %32, %38, %cst_20 {dimension_numbers = #tpu.dot_dimension_numbers<[2], [1], [1], [2], [0, 0, 0, 1, 1, 2], [0], [0]>} : vector<4x8x128xf32>, vector<4x128x8xf32>, vector<4x8x8xf32> -> vector<4x8x8xf32>
    "tpu.trace_stop"() : () -> ()
    %c0_21 = arith.constant 0 : index
    %c0_22 = arith.constant 0 : index
    %c0_23 = arith.constant 0 : index
    %40 = vector.load %arg7[%c0_21, %c0_22, %c0_23] : memref<4x1x8xf32, #tpu.memory_space<vmem>>, vector<4x1x8xf32>
    %41 = vector.broadcast %40 : vector<4x1x8xf32> to vector<4x8x8xf32>
    %42 = arith.addf %39, %41 : vector<4x8x8xf32>
    %c0_24 = arith.constant 0 : index
    %c0_25 = arith.constant 0 : index
    %c0_26 = arith.constant 0 : index
    %43 = vector.load %arg8[%c0_24, %c0_25, %c0_26] : memref<4x128x8xf32, #tpu.memory_space<vmem>>, vector<4x128x8xf32>
    "tpu.trace_start"() <{level = 10 : i32, message = "hse,hef->hsf"}> : () -> ()
    %cst_27 = arith.constant dense<0.000000e+00> : vector<4x8x8xf32>
    %44 = tpu.matmul %32, %43, %cst_27 {dimension_numbers = #tpu.dot_dimension_numbers<[2], [1], [1], [2], [0, 0, 0, 1, 1, 2], [0], [0]>} : vector<4x8x128xf32>, vector<4x128x8xf32>, vector<4x8x8xf32> -> vector<4x8x8xf32>
    "tpu.trace_stop"() : () -> ()
    %c0_28 = arith.constant 0 : index
    %c0_29 = arith.constant 0 : index
    %c0_30 = arith.constant 0 : index
    %45 = vector.load %arg9[%c0_28, %c0_29, %c0_30] : memref<4x1x8xf32, #tpu.memory_space<vmem>>, vector<4x1x8xf32>
    %46 = vector.broadcast %45 : vector<4x1x8xf32> to vector<4x8x8xf32>
    %47 = arith.addf %44, %46 : vector<4x8x8xf32>
    "tpu.trace_start"() <{level = 10 : i32, message = "hqf,hkf->hqk"}> : () -> ()
    %cst_31 = arith.constant dense<0.000000e+00> : vector<4x8x8xf32>
    %48 = tpu.matmul %37, %42, %cst_31 {dimension_numbers = #tpu.dot_dimension_numbers<[2], [2], [1], [1], [0, 0, 0, 1, 1, 1], [0], [0]>} : vector<4x8x8xf32>, vector<4x8x8xf32>, vector<4x8x8xf32> -> vector<4x8x8xf32>
    "tpu.trace_stop"() : () -> ()
    %cst_32 = arith.constant dense<0xFF800000> : vector<4x8xf32>
    %49 = vector.multi_reduction <maximumf>, %48, %cst_32 [2] : vector<4x8x8xf32> to vector<4x8xf32>
    %50 = vector.shape_cast %49 : vector<4x8xf32> to vector<4x8x1xf32>
    %51 = vector.broadcast %50 : vector<4x8x1xf32> to vector<4x8x8xf32>
    %52 = arith.subf %48, %51 : vector<4x8x8xf32>
    %53 = math.exp %52 : vector<4x8x8xf32>
    %cst_33 = arith.constant dense<0.000000e+00> : vector<4x8xf32>
    %54 = vector.multi_reduction <add>, %53, %cst_33 [2] : vector<4x8x8xf32> to vector<4x8xf32>
    %55 = vector.shape_cast %54 : vector<4x8xf32> to vector<4x8x1xf32>
    %56 = tpu.reciprocal %55 {approx = true} : vector<4x8x1xf32> -> vector<4x8x1xf32>
    %57 = vector.broadcast %56 : vector<4x8x1xf32> to vector<4x8x8xf32>
    %58 = arith.mulf %53, %57 : vector<4x8x8xf32>
    "tpu.trace_start"() <{level = 10 : i32, message = "hqk,hkf->hqf"}> : () -> ()
    %cst_34 = arith.constant dense<0.000000e+00> : vector<4x8x8xf32>
    %59 = tpu.matmul %58, %47, %cst_34 {dimension_numbers = #tpu.dot_dimension_numbers<[2], [1], [1], [2], [0, 0, 0, 1, 1, 2], [0], [0]>} : vector<4x8x8xf32>, vector<4x8x8xf32>, vector<4x8x8xf32> -> vector<4x8x8xf32>
    "tpu.trace_stop"() : () -> ()
    %c0_35 = arith.constant 0 : index
    %c0_36 = arith.constant 0 : index
    %c0_37 = arith.constant 0 : index
    %60 = vector.load %arg10[%c0_35, %c0_36, %c0_37] : memref<4x8x128xf32, #tpu.memory_space<vmem>>, vector<4x8x128xf32>
    "tpu.trace_start"() <{level = 10 : i32, message = "hqf,hfe->hqe"}> : () -> ()
    %cst_38 = arith.constant dense<0.000000e+00> : vector<4x8x128xf32>
    %61 = tpu.matmul %59, %60, %cst_38 {dimension_numbers = #tpu.dot_dimension_numbers<[2], [1], [1], [2], [0, 0, 0, 1, 1, 2], [0], [0]>} : vector<4x8x8xf32>, vector<4x8x128xf32>, vector<4x8x128xf32> -> vector<4x8x128xf32>
    "tpu.trace_stop"() : () -> ()
    %cst_39 = arith.constant dense<0.000000e+00> : vector<8x128xf32>
    %62 = vector.multi_reduction <add>, %61, %cst_39 [0] : vector<4x8x128xf32> to vector<8x128xf32>
    %c0_40 = arith.constant 0 : index
    %c0_41 = arith.constant 0 : index
    %63 = vector.load %arg11[%c0_40, %c0_41] : memref<1x128xf32, #tpu.memory_space<vmem>>, vector<1x128xf32>
    %64 = vector.broadcast %63 : vector<1x128xf32> to vector<8x128xf32>
    %65 = arith.addf %62, %64 : vector<8x128xf32>
    %66 = arith.addf %1, %65 : vector<8x128xf32>
    %c0_42 = arith.constant 0 : index
    %c0_43 = arith.constant 0 : index
    %67 = vector.load %arg12[%c0_42, %c0_43] : memref<1x128xf32, #tpu.memory_space<vmem>>, vector<1x128xf32>
    %c0_44 = arith.constant 0 : index
    %c0_45 = arith.constant 0 : index
    %68 = vector.load %arg13[%c0_44, %c0_45] : memref<1x128xf32, #tpu.memory_space<vmem>>, vector<1x128xf32>
    %cst_46 = arith.constant dense<0.000000e+00> : vector<8xf32>
    %69 = vector.multi_reduction <add>, %66, %cst_46 [1] : vector<8x128xf32> to vector<8xf32>
    %70 = vector.shape_cast %69 : vector<8xf32> to vector<8x1xf32>
    %cst_47 = arith.constant 3.125000e-02 : f32
    %71 = vector.broadcast %cst_47 : f32 to vector<8x1xf32>
    %72 = arith.mulf %70, %71 : vector<8x1xf32>
    %73 = vector.broadcast %72 : vector<8x1xf32> to vector<8x128xf32>
    %74 = arith.subf %66, %73 : vector<8x128xf32>
    %75 = vector.broadcast %6 : vector<1x128xf32> to vector<8x128xf32>
    %76 = arith.mulf %74, %75 : vector<8x128xf32>
    %77 = arith.mulf %76, %76 : vector<8x128xf32>
    %cst_48 = arith.constant dense<0.000000e+00> : vector<8xf32>
    %78 = vector.multi_reduction <add>, %77, %cst_48 [1] : vector<8x128xf32> to vector<8xf32>
    %79 = vector.shape_cast %78 : vector<8xf32> to vector<8x1xf32>
    %cst_49 = arith.constant 3.125000e-02 : f32
    %80 = vector.broadcast %cst_49 : f32 to vector<8x1xf32>
    %81 = arith.mulf %79, %80 : vector<8x1xf32>
    %cst_50 = arith.constant 9.99999974E-6 : f32
    %82 = vector.broadcast %cst_50 : f32 to vector<8x1xf32>
    %83 = arith.addf %81, %82 : vector<8x1xf32>
    %84 = math.rsqrt %83 : vector<8x1xf32>
    %85 = vector.broadcast %84 : vector<8x1xf32> to vector<8x128xf32>
    %86 = arith.mulf %76, %85 : vector<8x128xf32>
    %87 = vector.broadcast %67 : vector<1x128xf32> to vector<8x128xf32>
    %88 = arith.mulf %86, %87 : vector<8x128xf32>
    %89 = vector.broadcast %68 : vector<1x128xf32> to vector<8x128xf32>
    %90 = arith.addf %88, %89 : vector<8x128xf32>
    %c0_51 = arith.constant 0 : index
    %c0_52 = arith.constant 0 : index
    %91 = vector.load %arg14[%c0_51, %c0_52] : memref<128x64xf32, #tpu.memory_space<vmem>>, vector<128x64xf32>
    %cst_53 = arith.constant dense<0.000000e+00> : vector<8x64xf32>
    %92 = tpu.matmul %90, %91, %cst_53 {dimension_numbers = #tpu.dot_dimension_numbers<[1], [0], [0], [1], [0, 0, 1, 1], [], []>} : vector<8x128xf32>, vector<128x64xf32>, vector<8x64xf32> -> vector<8x64xf32>
    %c0_54 = arith.constant 0 : index
    %c0_55 = arith.constant 0 : index
    %93 = vector.load %arg15[%c0_54, %c0_55] : memref<1x64xf32, #tpu.memory_space<vmem>>, vector<1x64xf32>
    %94 = vector.broadcast %93 : vector<1x64xf32> to vector<8x64xf32>
    %95 = arith.addf %92, %94 : vector<8x64xf32>
    %cst_56 = arith.constant 0.000000e+00 : f32
    %96 = vector.broadcast %cst_56 : f32 to vector<8x64xf32>
    %97 = arith.maximumf %95, %96 : vector<8x64xf32>
    %c0_57 = arith.constant 0 : index
    %c0_58 = arith.constant 0 : index
    %98 = vector.load %arg16[%c0_57, %c0_58] : memref<64x128xf32, #tpu.memory_space<vmem>>, vector<64x128xf32>
    %cst_59 = arith.constant dense<0.000000e+00> : vector<8x128xf32>
    %99 = tpu.matmul %97, %98, %cst_59 {dimension_numbers = #tpu.dot_dimension_numbers<[1], [0], [0], [1], [0, 0, 1, 1], [], []>} : vector<8x64xf32>, vector<64x128xf32>, vector<8x128xf32> -> vector<8x128xf32>
    %c0_60 = arith.constant 0 : index
    %c0_61 = arith.constant 0 : index
    %100 = vector.load %arg17[%c0_60, %c0_61] : memref<1x128xf32, #tpu.memory_space<vmem>>, vector<1x128xf32>
    %101 = vector.broadcast %100 : vector<1x128xf32> to vector<8x128xf32>
    %102 = arith.addf %99, %101 : vector<8x128xf32>
    %103 = arith.addf %66, %102 : vector<8x128xf32>
    %c0_62 = arith.constant 0 : index
    %c0_63 = arith.constant 0 : index
    %c0_64 = arith.constant 0 : index
    %104 = vector.load %arg18[%c0_62, %c0_63, %c0_64] : memref<1x8x128xf32, #tpu.memory_space<vmem>>, vector<1x8x128xf32>
    %105 = vector.shape_cast %104 : vector<1x8x128xf32> to vector<8x128xf32>
    %106 = vector.shape_cast %103 : vector<8x128xf32> to vector<1x8x128xf32>
    tpu.vector_store %arg18[%c0_62, %c0_63, %c0_64], %106 {strides = array<i32>} : memref<1x8x128xf32, #tpu.memory_space<vmem>>, vector<1x8x128xf32>,
    return
  }
  func.func @transform_0(%arg0: i32) -> (i32, i32, i32) {
    %c0_i32 = arith.constant 0 : i32
    %c0_i32_0 = arith.constant 0 : i32
    %c0_i32_1 = arith.constant 0 : i32
    return %arg0, %c0_i32, %c0_i32_0 : i32, i32, i32
  }
  func.func @transform_1(%arg0: i32) -> (i32, i32) {
    %c0_i32 = arith.constant 0 : i32
    %c0_i32_0 = arith.constant 0 : i32
    %c0_i32_1 = arith.constant 0 : i32
    return %c0_i32, %c0_i32_0 : i32, i32
  }
  func.func @transform_2(%arg0: i32) -> (i32, i32) {
    %c0_i32 = arith.constant 0 : i32
    %c0_i32_0 = arith.constant 0 : i32
    %c0_i32_1 = arith.constant 0 : i32
    return %c0_i32, %c0_i32_0 : i32, i32
  }
  func.func @transform_3(%arg0: i32) -> (i32, i32, i32) {
    %c0_i32 = arith.constant 0 : i32
    %c0_i32_0 = arith.constant 0 : i32
    %c0_i32_1 = arith.constant 0 : i32
    %c0_i32_2 = arith.constant 0 : i32
    return %c0_i32, %c0_i32_0, %c0_i32_1 : i32, i32, i32
  }
  func.func @transform_4(%arg0: i32) -> (i32, i32, i32) {
    %c0_i32 = arith.constant 0 : i32
    %c0_i32_0 = arith.constant 0 : i32
    %c0_i32_1 = arith.constant 0 : i32
    %c0_i32_2 = arith.constant 0 : i32
    return %c0_i32, %c0_i32_0, %c0_i32_1 : i32, i32, i32
  }
  func.func @transform_5(%arg0: i32) -> (i32, i32, i32) {
    %c0_i32 = arith.constant 0 : i32
    %c0_i32_0 = arith.constant 0 : i32
    %c0_i32_1 = arith.constant 0 : i32
    %c0_i32_2 = arith.constant 0 : i32
    return %c0_i32, %c0_i32_0, %c0_i32_1 : i32, i32, i32
  }
  func.func @transform_6(%arg0: i32) -> (i32, i32, i32) {
    %c0_i32 = arith.constant 0 : i32
    %c0_i32_0 = arith.constant 0 : i32
    %c0_i32_1 = arith.constant 0 : i32
    %c0_i32_2 = arith.constant 0 : i32
    return %c0_i32, %c0_i32_0, %c0_i32_1 : i32, i32, i32
  }
  func.func @transform_7(%arg0: i32) -> (i32, i32, i32) {
    %c0_i32 = arith.constant 0 : i32
    %c0_i32_0 = arith.constant 0 : i32
    %c0_i32_1 = arith.constant 0 : i32
    %c0_i32_2 = arith.constant 0 : i32
    return %c0_i32, %c0_i32_0, %c0_i32_1 : i32, i32, i32
  }
  func.func @transform_8(%arg0: i32) -> (i32, i32, i32) {
    %c0_i32 = arith.constant 0 : i32
    %c0_i32_0 = arith.constant 0 : i32
    %c0_i32_1 = arith.constant 0 : i32
    %c0_i32_2 = arith.constant 0 : i32
    return %c0_i32, %c0_i32_0, %c0_i32_1 : i32, i32, i32
  }
  func.func @transform_9(%arg0: i32) -> (i32, i32, i32) {
    %c0_i32 = arith.constant 0 : i32
    %c0_i32_0 = arith.constant 0 : i32
    %c0_i32_1 = arith.constant 0 : i32
    %c0_i32_2 = arith.constant 0 : i32
    return %c0_i32, %c0_i32_0, %c0_i32_1 : i32, i32, i32
  }
  func.func @transform_10(%arg0: i32) -> (i32, i32) {
    %c0_i32 = arith.constant 0 : i32
    %c0_i32_0 = arith.constant 0 : i32
    %c0_i32_1 = arith.constant 0 : i32
    return %c0_i32, %c0_i32_0 : i32, i32
  }
  func.func @transform_11(%arg0: i32) -> (i32, i32) {
    %c0_i32 = arith.constant 0 : i32
    %c0_i32_0 = arith.constant 0 : i32
    %c0_i32_1 = arith.constant 0 : i32
    return %c0_i32, %c0_i32_0 : i32, i32
  }
  func.func @transform_12(%arg0: i32) -> (i32, i32) {
    %c0_i32 = arith.constant 0 : i32
    %c0_i32_0 = arith.constant 0 : i32
    %c0_i32_1 = arith.constant 0 : i32
    return %c0_i32, %c0_i32_0 : i32, i32
  }
  func.func @transform_13(%arg0: i32) -> (i32, i32) {
    %c0_i32 = arith.constant 0 : i32
    %c0_i32_0 = arith.constant 0 : i32
    %c0_i32_1 = arith.constant 0 : i32
    return %c0_i32, %c0_i32_0 : i32, i32
  }
  func.func @transform_14(%arg0: i32) -> (i32, i32) {
    %c0_i32 = arith.constant 0 : i32
    %c0_i32_0 = arith.constant 0 : i32
    %c0_i32_1 = arith.constant 0 : i32
    return %c0_i32, %c0_i32_0 : i32, i32
  }
  func.func @transform_15(%arg0: i32) -> (i32, i32) {
    %c0_i32 = arith.constant 0 : i32
    %c0_i32_0 = arith.constant 0 : i32
    %c0_i32_1 = arith.constant 0 : i32
    return %c0_i32, %c0_i32_0 : i32, i32
  }
  func.func @transform_16(%arg0: i32) -> (i32, i32) {
    %c0_i32 = arith.constant 0 : i32
    %c0_i32_0 = arith.constant 0 : i32
    %c0_i32_1 = arith.constant 0 : i32
    return %c0_i32, %c0_i32_0 : i32, i32
  }
  func.func @transform_17(%arg0: i32) -> (i32, i32, i32) {
    %c0_i32 = arith.constant 0 : i32
    %c0_i32_0 = arith.constant 0 : i32
    %c0_i32_1 = arith.constant 0 : i32
    return %arg0, %c0_i32, %c0_i32_0 : i32, i32, i32
  }
}

</mosaic_0001>

<llo_original>
// kernel: tpu_custom_call.1
$region0: #{tpu_custom_call.1}
  #allocation0 [shape = 'u32[]', space=smem, size = 0x4, offset = 0x4, fixed_abs, tag = 'smem constant byte address 0x4 - core index']
  #allocation1 [shape = 'u32[144,128]{1,0:T(1,128)}', space=vmem, size = 0x12000, scoped, tag = 'internal scratch']
  %s0 = inlined_call_operand.vmem [shape: f32[2,8,128], index: 0, kind: input, shape index: {}]
  %s1 = inlined_call_operand.vmem [shape: f32[1,128], index: 1, kind: input, shape index: {}]
  %s2 = inlined_call_operand.vmem [shape: f32[1,128], index: 2, kind: input, shape index: {}]
  %s3 = inlined_call_operand.vmem [shape: f32[4,128,8], index: 3, kind: input, shape index: {}]
  %s4 = inlined_call_operand.vmem [shape: f32[4,1,8], index: 4, kind: input, shape index: {}]
  %s5 = inlined_call_operand.vmem [shape: f32[4,128,8], index: 5, kind: input, shape index: {}]
  %s6 = inlined_call_operand.vmem [shape: f32[4,1,8], index: 6, kind: input, shape index: {}]
  %s7 = inlined_call_operand.vmem [shape: f32[4,128,8], index: 7, kind: input, shape index: {}]
  %s8 = inlined_call_operand.vmem [shape: f32[4,1,8], index: 8, kind: input, shape index: {}]
  %s9 = inlined_call_operand.vmem [shape: f32[4,8,128], index: 9, kind: input, shape index: {}]
  %s10 = inlined_call_operand.vmem [shape: f32[1,128], index: 10, kind: input, shape index: {}]
  %s11 = inlined_call_operand.vmem [shape: f32[1,128], index: 11, kind: input, shape index: {}]
  %s12 = inlined_call_operand.vmem [shape: f32[1,128], index: 12, kind: input, shape index: {}]
  %s13 = inlined_call_operand.vmem [shape: f32[128,64], index: 13, kind: input, shape index: {}]
  %s14 = inlined_call_operand.vmem [shape: f32[1,64], index: 14, kind: input, shape index: {}]
  %s15 = inlined_call_operand.vmem [shape: f32[64,128], index: 15, kind: input, shape index: {}]
  %s16 = inlined_call_operand.vmem [shape: f32[1,128], index: 16, kind: input, shape index: {}]
  %s17 = inlined_call_operand.hbm [shape: f32[2,8,128], index: 17, kind: output, shape index: {}]
  %s18 = sld [smem:[#allocation0]]
  $region101: #{tpu_custom_call.1} parent=0
    _
  %s20 = ssub.s32 1, %s18
  %s21 = scalar_select 0, %s20, %s18
  $region1: #{tpu_custom_call.1} parent=0
    #allocation2 [shape = 'u8[8192]{0}', space=vmem, size = 0x2000, scoped, tag = 'output window, operand 0']
    #allocation3 [shape = 's32[2]{0}', space=sflag, size = 0x8, scoped, tag = 'scoped memory for tpu_custom_call.1']
    %22 = vsyncpa [#allocation3], 0
    %s23 = scalar_lea.sflag [#allocation3], 1
    %24 = vsyncpa %s23, 0
    loop: start=0, step=1, limit=4
    $region2: #{tpu_custom_call.1} parent=1 // loop_pre_header
      _
    $region3: #{tpu_custom_call.1} parent=1 // loop_header
      %s26 = sphi 0, %s30
      %p27 = scmp.ge.s32.totalorder %s26, 4
      %s36 = sphi 0, %s38
      %s39 = sphi 0, %s36
      %s40 = sphi 0, %s39
      %s56 = sphi 0, %s40
      %s60 = sphi 0, %s60
      %s62 = sphi 0, %s60
      %s63 = sphi 0, %s62
      %s77 = sphi 0, %s63
      %s81 = sphi 0, %s81
      %s83 = sphi 0, %s81
      %s84 = sphi 0, %s83
      %s98 = sphi 0, %s84
      %s102 = sphi 0, %s102
      %s104 = sphi 0, %s102
      %s105 = sphi 0, %s104
      %s119 = sphi 0, %s105
      %s123 = sphi 0, %s123
      %s125 = sphi 0, %s123
      %s126 = sphi 0, %s125
      %s140 = sphi 0, %s126
      %s144 = sphi 0, %s144
      %s146 = sphi 0, %s144
      %s147 = sphi 0, %s146
      %s161 = sphi 0, %s147
      %s165 = sphi 0, %s165
      %s167 = sphi 0, %s165
      %s168 = sphi 0, %s167
      %s182 = sphi 0, %s168
      %s186 = sphi 0, %s186
      %s188 = sphi 0, %s186
      %s189 = sphi 0, %s188
      %s203 = sphi 0, %s189
      %s207 = sphi 0, %s207
      %s209 = sphi 0, %s207
      %s210 = sphi 0, %s209
      %s224 = sphi 0, %s210
      %s228 = sphi 0, %s228
      %s230 = sphi 0, %s228
      %s231 = sphi 0, %s230
      %s245 = sphi 0, %s231
      %s249 = sphi 0, %s249
      %s251 = sphi 0, %s249
      %s252 = sphi 0, %s251
      %s266 = sphi 0, %s252
      %s270 = sphi 0, %s270
      %s272 = sphi 0, %s270
      %s273 = sphi 0, %s272
      %s287 = sphi 0, %s273
      %s291 = sphi 0, %s291
      %s293 = sphi 0, %s291
      %s294 = sphi 0, %s293
      %s308 = sphi 0, %s294
      %s312 = sphi 0, %s312
      %s314 = sphi 0, %s312
      %s315 = sphi 0, %s314
      %s329 = sphi 0, %s315
      %s333 = sphi 0, %s333
      %s335 = sphi 0, %s333
      %s336 = sphi 0, %s335
      %s350 = sphi 0, %s336
      %s354 = sphi 0, %s354
      %s356 = sphi 0, %s354
      %s357 = sphi 0, %s356
      %s371 = sphi 0, %s357
      %s375 = sphi 0, %s375
      %s377 = sphi 0, %s375
      %s378 = sphi 0, %s377
      %s392 = sphi 0, %s378
      %s398 = sphi 0, %s400
      %s401 = sphi 0, %s398
      %s402 = sphi 0, %s401
      %s418 = sphi 0, %s402
    $region4: #{tpu_custom_call.1} parent=1 // loop_header_branch
      %29 = sbr.rel (%p27) target = $region8
    $region5: #{tpu_custom_call.1} parent=1 // loop_body
      %s31 = ssub.s32 %s26, 1
      %s32 = ssub.s32 %s26, 2
      %s33 = sadd.s32 %s26, 1
      %s34 = ssub.s32 %s26, %s33
      %p35 = scmp.eq.s32.totalorder %s34, 0
      %s37 = sadd.s32 %s36, 1
      %s38 = scalar_select %p35, %s36, %s37
      %p41 = pneg %p35
      %p42 = scmp.eq.s32.totalorder %s26, 1
      %p43 = por %p41, %p42
      %p44 = scmp.ne.s32.totalorder %s36, %s39
      %p45 = scmp.eq.s32.totalorder %s26, 0
      %p46 = por %p44, %p45
      %p47 = scmp.ne.s32.totalorder %s36, %s39
      %p48 = scmp.eq.s32.totalorder %s31, 1
      %p49 = por %p47, %p48
      %p50 = scmp.ne.s32.totalorder %s39, %s40
      %p51 = scmp.eq.s32.totalorder %s31, 0
      %p52 = por %p50, %p51
      %p53 = scmp.ne.s32.totalorder %s39, %s40
      %p54 = scmp.eq.s32.totalorder %s32, 1
      %p55 = por %p53, %p54
      %p57 = scmp.ne.s32.totalorder %s40, %s56
      %p58 = scmp.eq.s32.totalorder %s32, 0
      %p59 = por %p57, %p58
      %s61 = sadd.s32 %s60, 1
      %p64 = scmp.eq.s32.totalorder %s26, 1
      %p65 = scmp.ne.s32.totalorder %s60, %s62
      %p66 = scmp.eq.s32.totalorder %s26, 0
      %p67 = por %p65, %p66
      %p68 = scmp.ne.s32.totalorder %s60, %s62
      %p69 = scmp.eq.s32.totalorder %s31, 1
      %p70 = por %p68, %p69
      %p71 = scmp.ne.s32.totalorder %s62, %s63
      %p72 = scmp.eq.s32.totalorder %s31, 0
      %p73 = por %p71, %p72
      %p74 = scmp.ne.s32.totalorder %s62, %s63
      %p75 = scmp.eq.s32.totalorder %s32, 1
      %p76 = por %p74, %p75
      %p78 = scmp.ne.s32.totalorder %s63, %s77
      %p79 = scmp.eq.s32.totalorder %s32, 0
      %p80 = por %p78, %p79
      %s82 = sadd.s32 %s81, 1
      %p85 = scmp.eq.s32.totalorder %s26, 1
      %p86 = scmp.ne.s32.totalorder %s81, %s83
      %p87 = scmp.eq.s32.totalorder %s26, 0
      %p88 = por %p86, %p87
      %p89 = scmp.ne.s32.totalorder %s81, %s83
      %p90 = scmp.eq.s32.totalorder %s31, 1
      %p91 = por %p89, %p90
      %p92 = scmp.ne.s32.totalorder %s83, %s84
      %p93 = scmp.eq.s32.totalorder %s31, 0
      %p94 = por %p92, %p93
      %p95 = scmp.ne.s32.totalorder %s83, %s84
      %p96 = scmp.eq.s32.totalorder %s32, 1
      %p97 = por %p95, %p96
      %p99 = scmp.ne.s32.totalorder %s84, %s98
      %p100 = scmp.eq.s32.totalorder %s32, 0
      %p101 = por %p99, %p100
      %s103 = sadd.s32 %s102, 1
      %p106 = scmp.eq.s32.totalorder %s26, 1
      %p107 = scmp.ne.s32.totalorder %s102, %s104
      %p108 = scmp.eq.s32.totalorder %s26, 0
      %p109 = por %p107, %p108
      %p110 = scmp.ne.s32.totalorder %s102, %s104
      %p111 = scmp.eq.s32.totalorder %s31, 1
      %p112 = por %p110, %p111
      %p113 = scmp.ne.s32.totalorder %s104, %s105
      %p114 = scmp.eq.s32.totalorder %s31, 0
      %p115 = por %p113, %p114
      %p116 = scmp.ne.s32.totalorder %s104, %s105
      %p117 = scmp.eq.s32.totalorder %s32, 1
      %p118 = por %p116, %p117
      %p120 = scmp.ne.s32.totalorder %s105, %s119
      %p121 = scmp.eq.s32.totalorder %s32, 0
      %p122 = por %p120, %p121
      %s124 = sadd.s32 %s123, 1
      %p127 = scmp.eq.s32.totalorder %s26, 1
      %p128 = scmp.ne.s32.totalorder %s123, %s125
      %p129 = scmp.eq.s32.totalorder %s26, 0
      %p130 = por %p128, %p129
      %p131 = scmp.ne.s32.totalorder %s123, %s125
      %p132 = scmp.eq.s32.totalorder %s31, 1
      %p133 = por %p131, %p132
      %p134 = scmp.ne.s32.totalorder %s125, %s126
      %p135 = scmp.eq.s32.totalorder %s31, 0
      %p136 = por %p134, %p135
      %p137 = scmp.ne.s32.totalorder %s125, %s126
      %p138 = scmp.eq.s32.totalorder %s32, 1
      %p139 = por %p137, %p138
      %p141 = scmp.ne.s32.totalorder %s126, %s140
      %p142 = scmp.eq.s32.totalorder %s32, 0
      %p143 = por %p141, %p142
      %s145 = sadd.s32 %s144, 1
      %p148 = scmp.eq.s32.totalorder %s26, 1
      %p149 = scmp.ne.s32.totalorder %s144, %s146
      %p150 = scmp.eq.s32.totalorder %s26, 0
      %p151 = por %p149, %p150
      %p152 = scmp.ne.s32.totalorder %s144, %s146
      %p153 = scmp.eq.s32.totalorder %s31, 1
      %p154 = por %p152, %p153
      %p155 = scmp.ne.s32.totalorder %s146, %s147
      %p156 = scmp.eq.s32.totalorder %s31, 0
      %p157 = por %p155, %p156
      %p158 = scmp.ne.s32.totalorder %s146, %s147
      %p159 = scmp.eq.s32.totalorder %s32, 1
      %p160 = por %p158, %p159
      %p162 = scmp.ne.s32.totalorder %s147, %s161
      %p163 = scmp.eq.s32.totalorder %s32, 0
      %p164 = por %p162, %p163
      %s166 = sadd.s32 %s165, 1
      %p169 = scmp.eq.s32.totalorder %s26, 1
      %p170 = scmp.ne.s32.totalorder %s165, %s167
      %p171 = scmp.eq.s32.totalorder %s26, 0
      %p172 = por %p170, %p171
      %p173 = scmp.ne.s32.totalorder %s165, %s167
      %p174 = scmp.eq.s32.totalorder %s31, 1
      %p175 = por %p173, %p174
      %p176 = scmp.ne.s32.totalorder %s167, %s168
      %p177 = scmp.eq.s32.totalorder %s31, 0
      %p178 = por %p176, %p177
      %p179 = scmp.ne.s32.totalorder %s167, %s168
      %p180 = scmp.eq.s32.totalorder %s32, 1
      %p181 = por %p179, %p180
      %p183 = scmp.ne.s32.totalorder %s168, %s182
      %p184 = scmp.eq.s32.totalorder %s32, 0
      %p185 = por %p183, %p184
      %s187 = sadd.s32 %s186, 1
      %p190 = scmp.eq.s32.totalorder %s26, 1
      %p191 = scmp.ne.s32.totalorder %s186, %s188
      %p192 = scmp.eq.s32.totalorder %s26, 0
      %p193 = por %p191, %p192
      %p194 = scmp.ne.s32.totalorder %s186, %s188
      %p195 = scmp.eq.s32.totalorder %s31, 1
      %p196 = por %p194, %p195
      %p197 = scmp.ne.s32.totalorder %s188, %s189
      %p198 = scmp.eq.s32.totalorder %s31, 0
      %p199 = por %p197, %p198
      %p200 = scmp.ne.s32.totalorder %s188, %s189
      %p201 = scmp.eq.s32.totalorder %s32, 1
      %p202 = por %p200, %p201
      %p204 = scmp.ne.s32.totalorder %s189, %s203
      %p205 = scmp.eq.s32.totalorder %s32, 0
      %p206 = por %p204, %p205
      %s208 = sadd.s32 %s207, 1
      %p211 = scmp.eq.s32.totalorder %s26, 1
      %p212 = scmp.ne.s32.totalorder %s207, %s209
      %p213 = scmp.eq.s32.totalorder %s26, 0
      %p214 = por %p212, %p213
      %p215 = scmp.ne.s32.totalorder %s207, %s209
      %p216 = scmp.eq.s32.totalorder %s31, 1
      %p217 = por %p215, %p216
      %p218 = scmp.ne.s32.totalorder %s209, %s210
      %p219 = scmp.eq.s32.totalorder %s31, 0
      %p220 = por %p218, %p219
      %p221 = scmp.ne.s32.totalorder %s209, %s210
      %p222 = scmp.eq.s32.totalorder %s32, 1
      %p223 = por %p221, %p222
      %p225 = scmp.ne.s32.totalorder %s210, %s224
      %p226 = scmp.eq.s32.totalorder %s32, 0
      %p227 = por %p225, %p226
      %s229 = sadd.s32 %s228, 1
      %p232 = scmp.eq.s32.totalorder %s26, 1
      %p233 = scmp.ne.s32.totalorder %s228, %s230
      %p234 = scmp.eq.s32.totalorder %s26, 0
      %p235 = por %p233, %p234
      %p236 = scmp.ne.s32.totalorder %s228, %s230
      %p237 = scmp.eq.s32.totalorder %s31, 1
      %p238 = por %p236, %p237
      %p239 = scmp.ne.s32.totalorder %s230, %s231
      %p240 = scmp.eq.s32.totalorder %s31, 0
      %p241 = por %p239, %p240
      %p242 = scmp.ne.s32.totalorder %s230, %s231
      %p243 = scmp.eq.s32.totalorder %s32, 1
      %p244 = por %p242, %p243
      %p246 = scmp.ne.s32.totalorder %s231, %s245
      %p247 = scmp.eq.s32.totalorder %s32, 0
      %p248 = por %p246, %p247
      %s250 = sadd.s32 %s249, 1
      %p253 = scmp.eq.s32.totalorder %s26, 1
      %p254 = scmp.ne.s32.totalorder %s249, %s251
      %p255 = scmp.eq.s32.totalorder %s26, 0
      %p256 = por %p254, %p255
      %p257 = scmp.ne.s32.totalorder %s249, %s251
      %p258 = scmp.eq.s32.totalorder %s31, 1
      %p259 = por %p257, %p258
      %p260 = scmp.ne.s32.totalorder %s251, %s252
      %p261 = scmp.eq.s32.totalorder %s31, 0
      %p262 = por %p260, %p261
      %p263 = scmp.ne.s32.totalorder %s251, %s252
      %p264 = scmp.eq.s32.totalorder %s32, 1
      %p265 = por %p263, %p264
      %p267 = scmp.ne.s32.totalorder %s252, %s266
      %p268 = scmp.eq.s32.totalorder %s32, 0
      %p269 = por %p267, %p268
      %s271 = sadd.s32 %s270, 1
      %p274 = scmp.eq.s32.totalorder %s26, 1
      %p275 = scmp.ne.s32.totalorder %s270, %s272
      %p276 = scmp.eq.s32.totalorder %s26, 0
      %p277 = por %p275, %p276
      %p278 = scmp.ne.s32.totalorder %s270, %s272
      %p279 = scmp.eq.s32.totalorder %s31, 1
      %p280 = por %p278, %p279
      %p281 = scmp.ne.s32.totalorder %s272, %s273
      %p282 = scmp.eq.s32.totalorder %s31, 0
      %p283 = por %p281, %p282
      %p284 = scmp.ne.s32.totalorder %s272, %s273
      %p285 = scmp.eq.s32.totalorder %s32, 1
      %p286 = por %p284, %p285
      %p288 = scmp.ne.s32.totalorder %s273, %s287
      %p289 = scmp.eq.s32.totalorder %s32, 0
      %p290 = por %p288, %p289
      %s292 = sadd.s32 %s291, 1
      %p295 = scmp.eq.s32.totalorder %s26, 1
      %p296 = scmp.ne.s32.totalorder %s291, %s293
      %p297 = scmp.eq.s32.totalorder %s26, 0
      %p298 = por %p296, %p297
      %p299 = scmp.ne.s32.totalorder %s291, %s293
      %p300 = scmp.eq.s32.totalorder %s31, 1
      %p301 = por %p299, %p300
      %p302 = scmp.ne.s32.totalorder %s293, %s294
      %p303 = scmp.eq.s32.totalorder %s31, 0
      %p304 = por %p302, %p303
      %p305 = scmp.ne.s32.totalorder %s293, %s294
      %p306 = scmp.eq.s32.totalorder %s32, 1
      %p307 = por %p305, %p306
      %p309 = scmp.ne.s32.totalorder %s294, %s308
      %p310 = scmp.eq.s32.totalorder %s32, 0
      %p311 = por %p309, %p310
      %s313 = sadd.s32 %s312, 1
      %p316 = scmp.eq.s32.totalorder %s26, 1
      %p317 = scmp.ne.s32.totalorder %s312, %s314
      %p318 = scmp.eq.s32.totalorder %s26, 0
      %p319 = por %p317, %p318
      %p320 = scmp.ne.s32.totalorder %s312, %s314
      %p321 = scmp.eq.s32.totalorder %s31, 1
      %p322 = por %p320, %p321
      %p323 = scmp.ne.s32.totalorder %s314, %s315
      %p324 = scmp.eq.s32.totalorder %s31, 0
      %p325 = por %p323, %p324
      %p326 = scmp.ne.s32.totalorder %s314, %s315
      %p327 = scmp.eq.s32.totalorder %s32, 1
      %p328 = por %p326, %p327
      %p330 = scmp.ne.s32.totalorder %s315, %s329
      %p331 = scmp.eq.s32.totalorder %s32, 0
      %p332 = por %p330, %p331
      %s334 = sadd.s32 %s333, 1
      %p337 = scmp.eq.s32.totalorder %s26, 1
      %p338 = scmp.ne.s32.totalorder %s333, %s335
      %p339 = scmp.eq.s32.totalorder %s26, 0
      %p340 = por %p338, %p339
      %p341 = scmp.ne.s32.totalorder %s333, %s335
      %p342 = scmp.eq.s32.totalorder %s31, 1
      %p343 = por %p341, %p342
      %p344 = scmp.ne.s32.totalorder %s335, %s336
      %p345 = scmp.eq.s32.totalorder %s31, 0
      %p346 = por %p344, %p345
      %p347 = scmp.ne.s32.totalorder %s335, %s336
      %p348 = scmp.eq.s32.totalorder %s32, 1
      %p349 = por %p347, %p348
      %p351 = scmp.ne.s32.totalorder %s336, %s350
      %p352 = scmp.eq.s32.totalorder %s32, 0
      %p353 = por %p351, %p352
      %s355 = sadd.s32 %s354, 1
      %p358 = scmp.eq.s32.totalorder %s26, 1
      %p359 = scmp.ne.s32.totalorder %s354, %s356
      %p360 = scmp.eq.s32.totalorder %s26, 0
      %p361 = por %p359, %p360
      %p362 = scmp.ne.s32.totalorder %s354, %s356
      %p363 = scmp.eq.s32.totalorder %s31, 1
      %p364 = por %p362, %p363
      %p365 = scmp.ne.s32.totalorder %s356, %s357
      %p366 = scmp.eq.s32.totalorder %s31, 0
      %p367 = por %p365, %p366
      %p368 = scmp.ne.s32.totalorder %s356, %s357
      %p369 = scmp.eq.s32.totalorder %s32, 1
      %p370 = por %p368, %p369
      %p372 = scmp.ne.s32.totalorder %s357, %s371
      %p373 = scmp.eq.s32.totalorder %s32, 0
      %p374 = por %p372, %p373
      %s376 = sadd.s32 %s375, 1
      %p379 = scmp.eq.s32.totalorder %s26, 1
      %p380 = scmp.ne.s32.totalorder %s375, %s377
      %p381 = scmp.eq.s32.totalorder %s26, 0
      %p382 = por %p380, %p381
      %p383 = scmp.ne.s32.totalorder %s375, %s377
      %p384 = scmp.eq.s32.totalorder %s31, 1
      %p385 = por %p383, %p384
      %p386 = scmp.ne.s32.totalorder %s377, %s378
      %p387 = scmp.eq.s32.totalorder %s31, 0
      %p388 = por %p386, %p387
      %p389 = scmp.ne.s32.totalorder %s377, %s378
      %p390 = scmp.eq.s32.totalorder %s32, 1
      %p391 = por %p389, %p390
      %p393 = scmp.ne.s32.totalorder %s378, %s392
      %p394 = scmp.eq.s32.totalorder %s32, 0
      %p395 = por %p393, %p394
      %s396 = ssub.s32 %s26, %s33
      %p397 = scmp.eq.s32.totalorder %s396, 0
      %s399 = sadd.s32 %s398, 1
      %s400 = scalar_select %p397, %s398, %s399
      %p403 = pneg %p397
      %p404 = scmp.eq.s32.totalorder %s26, 1
      %p405 = por %p403, %p404
      %p406 = scmp.ne.s32.totalorder %s398, %s401
      %p407 = scmp.eq.s32.totalorder %s26, 0
      %p408 = por %p406, %p407
      %p409 = scmp.ne.s32.totalorder %s398, %s401
      %p410 = scmp.eq.s32.totalorder %s31, 1
      %p411 = por %p409, %p410
      %p412 = scmp.ne.s32.totalorder %s401, %s402
      %p413 = scmp.eq.s32.totalorder %s31, 0
      %p414 = por %p412, %p413
      %p415 = scmp.ne.s32.totalorder %s401, %s402
      %p416 = scmp.eq.s32.totalorder %s32, 1
      %p417 = por %p415, %p416
      %p419 = scmp.ne.s32.totalorder %s402, %s418
      %p420 = scmp.eq.s32.totalorder %s32, 0
      %p421 = por %p419, %p420
      %p422 = scmp.le.s32.totalorder 1, %s26
      %p423 = scmp.lt.s32.totalorder %s26, 3
      %p424 = pnand %p422, %p423
      %p425 = pneg %p424
      // Predicated region
      $region9: #{tpu_custom_call.1} parent=5 // pred_check
        _
      $region10: #{tpu_custom_call.1} parent=5 // pred_check_branch
        %427 = sbr.rel (%p424) target = $region12
      $region11: #{tpu_custom_call.1} parent=5 // pred_region
        %s428 = ssub.s32 %s26, 1
        // Predicated region
        $region13: #{tpu_custom_call.1} parent=11 // pred_check
          %p429 = pneg %p73
        $region14: #{tpu_custom_call.1} parent=11 // pred_check_branch
          %431 = sbr.rel (%p429) target = $region16
        $region15: #{tpu_custom_call.1} parent=11 // pred_region
          _
        $region16: #{tpu_custom_call.1} parent=11 // pred_fallthru
          _
        // Predicated region
        $region17: #{tpu_custom_call.1} parent=11 // pred_check
          %p432 = pneg %p94
        $region18: #{tpu_custom_call.1} parent=11 // pred_check_branch
          %434 = sbr.rel (%p432) target = $region20
        $region19: #{tpu_custom_call.1} parent=11 // pred_region
          _
        $region20: #{tpu_custom_call.1} parent=11 // pred_fallthru
          _
        // Predicated region
        $region21: #{tpu_custom_call.1} parent=11 // pred_check
          %p435 = pneg %p115
        $region22: #{tpu_custom_call.1} parent=11 // pred_check_branch
          %437 = sbr.rel (%p435) target = $region24
        $region23: #{tpu_custom_call.1} parent=11 // pred_region
          _
        $region24: #{tpu_custom_call.1} parent=11 // pred_fallthru
          _
        // Predicated region
        $region25: #{tpu_custom_call.1} parent=11 // pred_check
          %p438 = pneg %p136
        $region26: #{tpu_custom_call.1} parent=11 // pred_check_branch
          %440 = sbr.rel (%p438) target = $region28
        $region27: #{tpu_custom_call.1} parent=11 // pred_region
          _
        $region28: #{tpu_custom_call.1} parent=11 // pred_fallthru
          _
        // Predicated region
        $region29: #{tpu_custom_call.1} parent=11 // pred_check
          %p441 = pneg %p157
        $region30: #{tpu_custom_call.1} parent=11 // pred_check_branch
          %443 = sbr.rel (%p441) target = $region32
        $region31: #{tpu_custom_call.1} parent=11 // pred_region
          _
        $region32: #{tpu_custom_call.1} parent=11 // pred_fallthru
          _
        // Predicated region
        $region33: #{tpu_custom_call.1} parent=11 // pred_check
          %p444 = pneg %p178
        $region34: #{tpu_custom_call.1} parent=11 // pred_check_branch
          %446 = sbr.rel (%p444) target = $region36
        $region35: #{tpu_custom_call.1} parent=11 // pred_region
          _
        $region36: #{tpu_custom_call.1} parent=11 // pred_fallthru
          _
        // Predicated region
        $region37: #{tpu_custom_call.1} parent=11 // pred_check
          %p447 = pneg %p199
        $region38: #{tpu_custom_call.1} parent=11 // pred_check_branch
          %449 = sbr.rel (%p447) target = $region40
        $region39: #{tpu_custom_call.1} parent=11 // pred_region
          _
        $region40: #{tpu_custom_call.1} parent=11 // pred_fallthru
          _
        // Predicated region
        $region41: #{tpu_custom_call.1} parent=11 // pred_check
          %p450 = pneg %p220
        $region42: #{tpu_custom_call.1} parent=11 // pred_check_branch
          %452 = sbr.rel (%p450) target = $region44
        $region43: #{tpu_custom_call.1} parent=11 // pred_region
          _
        $region44: #{tpu_custom_call.1} parent=11 // pred_fallthru
          _
        // Predicated region
        $region45: #{tpu_custom_call.1} parent=11 // pred_check
          %p453 = pneg %p241
        $region46: #{tpu_custom_call.1} parent=11 // pred_check_branch
          %455 = sbr.rel (%p453) target = $region48
        $region47: #{tpu_custom_call.1} parent=11 // pred_region
          _
        $region48: #{tpu_custom_call.1} parent=11 // pred_fallthru
          _
        // Predicated region
        $region49: #{tpu_custom_call.1} parent=11 // pred_check
          %p456 = pneg %p262
        $region50: #{tpu_custom_call.1} parent=11 // pred_check_branch
          %458 = sbr.rel (%p456) target = $region52
        $region51: #{tpu_custom_call.1} parent=11 // pred_region
          _
        $region52: #{tpu_custom_call.1} parent=11 // pred_fallthru
          _
        // Predicated region
        $region53: #{tpu_custom_call.1} parent=11 // pred_check
          %p459 = pneg %p283
        $region54: #{tpu_custom_call.1} parent=11 // pred_check_branch
          %461 = sbr.rel (%p459) target = $region56
        $region55: #{tpu_custom_call.1} parent=11 // pred_region
          _
        $region56: #{tpu_custom_call.1} parent=11 // pred_fallthru
          _
        // Predicated region
        $region57: #{tpu_custom_call.1} parent=11 // pred_check
          %p462 = pneg %p304
        $region58: #{tpu_custom_call.1} parent=11 // pred_check_branch
          %464 = sbr.rel (%p462) target = $region60
        $region59: #{tpu_custom_call.1} parent=11 // pred_region
          _
        $region60: #{tpu_custom_call.1} parent=11 // pred_fallthru
          _
        // Predicated region
        $region61: #{tpu_custom_call.1} parent=11 // pred_check
          %p465 = pneg %p325
        $region62: #{tpu_custom_call.1} parent=11 // pred_check_branch
          %467 = sbr.rel (%p465) target = $region64
        $region63: #{tpu_custom_call.1} parent=11 // pred_region
          _
        $region64: #{tpu_custom_call.1} parent=11 // pred_fallthru
          _
        // Predicated region
        $region65: #{tpu_custom_call.1} parent=11 // pred_check
          %p468 = pneg %p346
        $region66: #{tpu_custom_call.1} parent=11 // pred_check_branch
          %470 = sbr.rel (%p468) target = $region68
        $region67: #{tpu_custom_call.1} parent=11 // pred_region
          _
        $region68: #{tpu_custom_call.1} parent=11 // pred_fallthru
          _
        // Predicated region
        $region69: #{tpu_custom_call.1} parent=11 // pred_check
          %p471 = pneg %p367
        $region70: #{tpu_custom_call.1} parent=11 // pred_check_branch
          %473 = sbr.rel (%p471) target = $region72
        $region71: #{tpu_custom_call.1} parent=11 // pred_region
          _
        $region72: #{tpu_custom_call.1} parent=11 // pred_fallthru
          _
        // Predicated region
        $region73: #{tpu_custom_call.1} parent=11 // pred_check
          %p474 = pneg %p388
        $region74: #{tpu_custom_call.1} parent=11 // pred_check_branch
          %476 = sbr.rel (%p474) target = $region76
        $region75: #{tpu_custom_call.1} parent=11 // pred_region
          _
        $region76: #{tpu_custom_call.1} parent=11 // pred_fallthru
          _
      $region12: #{tpu_custom_call.1} parent=5 // pred_fallthru
        _
      %p477 = scmp.lt.s32.totalorder %s26, 2
      // Predicated region
      $region77: #{tpu_custom_call.1} parent=5 // pred_check
        %p478 = pneg %p477
      $region78: #{tpu_custom_call.1} parent=5 // pred_check_branch
        %480 = sbr.rel (%p478) target = $region80
      $region79: #{tpu_custom_call.1} parent=5 // pred_region
        // Predicated region
        $region81: #{tpu_custom_call.1} parent=79 // pred_check
          %p481 = pneg %p46
        $region82: #{tpu_custom_call.1} parent=79 // pred_check_branch
          %483 = sbr.rel (%p481) target = $region84
        $region83: #{tpu_custom_call.1} parent=79 // pred_region
          %p484 = scmp.lt.s32.totalorder %s26, 1
          %s485 = scalar_select %p484, %s26, 1
          %s486 = smul.addr %s485, 8
          %s487 = scalar_lea.vmem %s0, %s486
        $region84: #{tpu_custom_call.1} parent=79 // pred_fallthru
          _
      $region80: #{tpu_custom_call.1} parent=5 // pred_fallthru
        _
      %p488 = scmp.le.s32.totalorder 1, %s26
      %p489 = scmp.lt.s32.totalorder %s26, 3
      %p490 = pnand %p488, %p489
      %p491 = pneg %p490
      // Predicated region
      $region85: #{tpu_custom_call.1} parent=5 // pred_check
        _
      $region86: #{tpu_custom_call.1} parent=5 // pred_check_branch
        %493 = sbr.rel (%p490) target = $region88
      $region87: #{tpu_custom_call.1} parent=5 // pred_region
        %s494 = ssub.s32 %s26, 1
        %p495 = scmp.lt.s32.totalorder %s31, 1
        %s496 = scalar_select %p495, %s31, 1
        %s497 = smul.addr %s496, 8
        %s498 = scalar_lea.vmem %s0, %s497
        %p499 = pneg %p52
        %p500 = pneg %p49
        %p501 = pneg %p73
        %p502 = pneg %p70
        %p503 = pneg %p94
        %p504 = pneg %p91
        %p505 = pneg %p115
        %p506 = pneg %p112
        %p507 = pneg %p136
        %p508 = pneg %p133
        %p509 = pneg %p157
        %p510 = pneg %p154
        %p511 = pneg %p178
        %p512 = pneg %p175
        %p513 = pneg %p199
        %p514 = pneg %p196
        %p515 = pneg %p220
        %p516 = pneg %p217
        %p517 = pneg %p241
        %p518 = pneg %p238
        %p519 = pneg %p262
        %p520 = pneg %p259
        %p521 = pneg %p283
        %p522 = pneg %p280
        %p523 = pneg %p304
        %p524 = pneg %p301
        %p525 = pneg %p325
        %p526 = pneg %p322
        %p527 = pneg %p346
        %p528 = pneg %p343
        %p529 = pneg %p367
        %p530 = pneg %p364
        %p531 = pneg %p388
        %p532 = pneg %p385
        %p533 = pneg %p414
        %p534 = pneg %p411
        %s535 = sand.u32 %s401, 1
        %s536 = scalar_lea.sflag [#allocation3], %s535
        %s537 = sand.u32 %s401, 1
        %s538 = smul.addr %s537, 8
        %s539 = scalar_lea.vmem [#allocation2], %s538
        %p540 = scmp.lt.s32.totalorder %s31, 1
        %s541 = scalar_select %p540, %s31, 1
        %s542 = smul.addr %s541, 8
        %s543 = scalar_lea.vmem %s0, %s542
        %v544 = vld [vmem:[%s543] sm:$0xff]
        %v545 = vlaneseq
        %v546 = vand.u32 %v545, 127
        %vm547 = vcmp.lt.s32.totalorder %v546, 32
        %v548 = vsel %vm547, 1, 0
        %v549 = vcvt.s32.f32 %v548
        %v550 = vld [vmem:[%s1] sm:$0x1]
        %v551 = vld [vmem:[%s2] sm:$0x1]
        %552 = vadd.xlane.f32.xlu0 %v544
        %v553 = vpop.xlane.xlu0 %552
        %v554 = vmul.f32 %v553, 0.03125
        %v555 = vsub.f32 %v544, %v554
        %v556 = vmul.f32 %v555, %v549
        %v557 = vmul.f32 %v556, %v556
        %558 = vadd.xlane.f32.xlu0 %v557
        %v559 = vpop.xlane.xlu0 %558
        %v560 = vmul.f32 %v559, 0.03125
        %v561 = vadd.f32 %v560, 1e-05
        %v562 = vrsqrt.pop %v561
        %v563 = vmul.f32 %v556, %v562
        %v565 = vlaneseq
        %v566 = vshrl.u32 %v565, 7
        %v567 = vsub.s32 0, %v566
        %v568 = vrot.slane %v550, %v567
        %v570 = vmul.f32 %v563, %v568
        %v572 = vlaneseq
        %v573 = vshrl.u32 %v572, 7
        %v574 = vsub.s32 0, %v573
        %v575 = vrot.slane %v551, %v574
        %v577 = vadd.f32 %v570, %v575
        %v578 = vld [vmem:[%s3] sm:$0xff]
        %v579 = vld [vmem:[%s3 + $0x8] sm:$0xff]
        %v580 = vld [vmem:[%s3 + $0x10] sm:$0xff]
        %v581 = vld [vmem:[%s3 + $0x18] sm:$0xff]
        %v582 = vld [vmem:[%s3 + $0x20] sm:$0xff]
        %v583 = vld [vmem:[%s3 + $0x28] sm:$0xff]
        %v584 = vld [vmem:[%s3 + $0x30] sm:$0xff]
        %v585 = vld [vmem:[%s3 + $0x38] sm:$0xff]
        %v586 = vld [vmem:[%s3 + $0x40] sm:$0xff]
        %v587 = vld [vmem:[%s3 + $0x48] sm:$0xff]
        %v588 = vld [vmem:[%s3 + $0x50] sm:$0xff]
        %v589 = vld [vmem:[%s3 + $0x58] sm:$0xff]
        %v590 = vld [vmem:[%s3 + $0x60] sm:$0xff]
        %v591 = vld [vmem:[%s3 + $0x68] sm:$0xff]
        %v592 = vld [vmem:[%s3 + $0x70] sm:$0xff]
        %v593 = vld [vmem:[%s3 + $0x78] sm:$0xff]
        %v594 = vld [vmem:[%s3 + $0x80] sm:$0xff]
        %v595 = vld [vmem:[%s3 + $0x88] sm:$0xff]
        %v596 = vld [vmem:[%s3 + $0x90] sm:$0xff]
        %v597 = vld [vmem:[%s3 + $0x98] sm:$0xff]
        %v598 = vld [vmem:[%s3 + $0xa0] sm:$0xff]
        %v599 = vld [vmem:[%s3 + $0xa8] sm:$0xff]
        %v600 = vld [vmem:[%s3 + $0xb0] sm:$0xff]
        %v601 = vld [vmem:[%s3 + $0xb8] sm:$0xff]
        %v602 = vld [vmem:[%s3 + $0xc0] sm:$0xff]
        %v603 = vld [vmem:[%s3 + $0xc8] sm:$0xff]
        %v604 = vld [vmem:[%s3 + $0xd0] sm:$0xff]
        %v605 = vld [vmem:[%s3 + $0xd8] sm:$0xff]
        %v606 = vld [vmem:[%s3 + $0xe0] sm:$0xff]
        %v607 = vld [vmem:[%s3 + $0xe8] sm:$0xff]
        %v608 = vld [vmem:[%s3 + $0xf0] sm:$0xff]
        %v609 = vld [vmem:[%s3 + $0xf8] sm:$0xff]
        %v610 = vld [vmem:[%s3 + $0x100] sm:$0xff]
        %v611 = vld [vmem:[%s3 + $0x108] sm:$0xff]
        %v612 = vld [vmem:[%s3 + $0x110] sm:$0xff]
        %v613 = vld [vmem:[%s3 + $0x118] sm:$0xff]
        %v614 = vld [vmem:[%s3 + $0x120] sm:$0xff]
        %v615 = vld [vmem:[%s3 + $0x128] sm:$0xff]
        %v616 = vld [vmem:[%s3 + $0x130] sm:$0xff]
        %v617 = vld [vmem:[%s3 + $0x138] sm:$0xff]
        %v618 = vld [vmem:[%s3 + $0x140] sm:$0xff]
        %v619 = vld [vmem:[%s3 + $0x148] sm:$0xff]
        %v620 = vld [vmem:[%s3 + $0x150] sm:$0xff]
        %v621 = vld [vmem:[%s3 + $0x158] sm:$0xff]
        %v622 = vld [vmem:[%s3 + $0x160] sm:$0xff]
        %v623 = vld [vmem:[%s3 + $0x168] sm:$0xff]
        %v624 = vld [vmem:[%s3 + $0x170] sm:$0xff]
        %v625 = vld [vmem:[%s3 + $0x178] sm:$0xff]
        %v626 = vld [vmem:[%s3 + $0x180] sm:$0xff]
        %v627 = vld [vmem:[%s3 + $0x188] sm:$0xff]
        %v628 = vld [vmem:[%s3 + $0x190] sm:$0xff]
        %v629 = vld [vmem:[%s3 + $0x198] sm:$0xff]
        %v630 = vld [vmem:[%s3 + $0x1a0] sm:$0xff]
        %v631 = vld [vmem:[%s3 + $0x1a8] sm:$0xff]
        %v632 = vld [vmem:[%s3 + $0x1b0] sm:$0xff]
        %v633 = vld [vmem:[%s3 + $0x1b8] sm:$0xff]
        %v634 = vld [vmem:[%s3 + $0x1c0] sm:$0xff]
        %v635 = vld [vmem:[%s3 + $0x1c8] sm:$0xff]
        %v636 = vld [vmem:[%s3 + $0x1d0] sm:$0xff]
        %v637 = vld [vmem:[%s3 + $0x1d8] sm:$0xff]
        %v638 = vld [vmem:[%s3 + $0x1e0] sm:$0xff]
        %v639 = vld [vmem:[%s3 + $0x1e8] sm:$0xff]
        %v640 = vld [vmem:[%s3 + $0x1f0] sm:$0xff]
        %v641 = vld [vmem:[%s3 + $0x1f8] sm:$0xff]
        %v642 = vld [vmem:[%s4] sm:$0x1]
        %v643 = vld [vmem:[%s4 + $0x1] sm:$0x1]
        %v644 = vld [vmem:[%s4 + $0x2] sm:$0x1]
        %v645 = vld [vmem:[%s4 + $0x3] sm:$0x1]
        %v650 = vlaneseq
        %v651 = vshrl.u32 %v650, 7
        %v652 = vsub.s32 0, %v651
        %v653 = vrot.slane %v642, %v652
        %v654 = vlaneseq
        %v655 = vshrl.u32 %v654, 7
        %v656 = vsub.s32 0, %v655
        %v657 = vrot.slane %v643, %v656
        %v658 = vlaneseq
        %v659 = vshrl.u32 %v658, 7
        %v660 = vsub.s32 0, %v659
        %v661 = vrot.slane %v644, %v660
        %v662 = vlaneseq
        %v663 = vshrl.u32 %v662, 7
        %v664 = vsub.s32 0, %v663
        %v665 = vrot.slane %v645, %v664
        %670 = vmatprep.subr.mxu0 0.0
        %671 = vmatpush1.msra.mxu0 %v593
        %672 = vmatprep.subr.mxu0 0.0
        %673 = vmatpush1.msra.mxu0 %v592
        %674 = vmatprep.subr.mxu0 0.0
        %675 = vmatpush1.msra.mxu0 %v591
        %676 = vmatprep.subr.mxu0 0.0
        %677 = vmatpush1.msra.mxu0 %v590
        %678 = vmatprep.subr.mxu0 0.0
        %679 = vmatpush1.msra.mxu0 %v589
        %680 = vmatprep.subr.mxu0 0.0
        %681 = vmatpush1.msra.mxu0 %v588
        %682 = vmatprep.subr.mxu0 0.0
        %683 = vmatpush1.msra.mxu0 %v587
        %684 = vmatprep.subr.mxu0 0.0
        %685 = vmatpush1.msra.mxu0 %v586
        %686 = vmatprep.subr.mxu0 0.0
        %687 = vmatpush1.msra.mxu0 %v585
        %688 = vmatprep.subr.mxu0 0.0
        %689 = vmatpush1.msra.mxu0 %v584
        %690 = vmatprep.subr.mxu0 0.0
        %691 = vmatpush1.msra.mxu0 %v583
        %692 = vmatprep.subr.mxu0 0.0
        %693 = vmatpush1.msra.mxu0 %v582
        %694 = vmatprep.subr.mxu0 0.0
        %695 = vmatpush1.msra.mxu0 %v581
        %696 = vmatprep.subr.mxu0 0.0
        %697 = vmatpush1.msra.mxu0 %v580
        %698 = vmatprep.subr.mxu0 0.0
        %699 = vmatpush1.msra.mxu0 %v579
        %700 = vmatprep.subr.mxu0 0.0
        %701 = vmatpush1.msra.mxu0 %v578
        %702 = vmatprep.subr.mxu0 0.0
        %703 = vmatpush2.msra.mxu0 0.0
        %704 = vmatprep.subr.mxu0 0.0
        %705 = vmatpush2.msra.mxu0 0.0
        %706 = vmatprep.subr.mxu0 0.0
        %707 = vmatpush2.msra.mxu0 0.0
        %708 = vmatprep.subr.mxu0 0.0
        %709 = vmatpush2.msra.mxu0 0.0
        %710 = vmatprep.subr.mxu0 0.0
        %711 = vmatpush2.msra.mxu0 0.0
        %712 = vmatprep.subr.mxu0 0.0
        %713 = vmatpush2.msra.mxu0 0.0
        %714 = vmatprep.subr.mxu0 0.0
        %715 = vmatpush2.msra.mxu0 0.0
        %716 = vmatprep.subr.mxu0 0.0
        %717 = vmatpush2.msra.mxu0 0.0
        %718 = vmatprep.subr.mxu0 0.0
        %719 = vmatpush2.msra.mxu0 0.0
        %720 = vmatprep.subr.mxu0 0.0
        %721 = vmatpush2.msra.mxu0 0.0
        %722 = vmatprep.subr.mxu0 0.0
        %723 = vmatpush2.msra.mxu0 0.0
        %724 = vmatprep.subr.mxu0 0.0
        %725 = vmatpush2.msra.mxu0 0.0
        %726 = vmatprep.subr.mxu0 0.0
        %727 = vmatpush2.msra.mxu0 0.0
        %728 = vmatprep.subr.mxu0 0.0
        %729 = vmatpush2.msra.mxu0 0.0
        %730 = vmatprep.subr.mxu0 0.0
        %731 = vmatpush2.msra.mxu0 0.0
        %732 = vmatprep.subr.mxu0 0.0
        %733 = vmatpush2.msra.mxu0 0.0
        %734 = vmatprep.mubr.f32.mxu0 0.0
        %735 = vmatmul.mubr.f32.gmra.mxu0 %v577
        %v736 = vpop.f32.mrf.mxu0
        %v737 = vadd.f32 %v653, %v736
        %v738 = vpop.f32.mrf.mxu0
        %739 = vdwg.mxu0
        %740 = vmatprep.subr.mxu0 0.0
        %741 = vmatpush1.msra.mxu0 %v609
        %742 = vmatprep.subr.mxu0 0.0
        %743 = vmatpush1.msra.mxu0 %v608
        %744 = vmatprep.subr.mxu0 0.0
        %745 = vmatpush1.msra.mxu0 %v607
        %746 = vmatprep.subr.mxu0 0.0
        %747 = vmatpush1.msra.mxu0 %v606
        %748 = vmatprep.subr.mxu0 0.0
        %749 = vmatpush1.msra.mxu0 %v605
        %750 = vmatprep.subr.mxu0 0.0
        %751 = vmatpush1.msra.mxu0 %v604
        %752 = vmatprep.subr.mxu0 0.0
        %753 = vmatpush1.msra.mxu0 %v603
        %754 = vmatprep.subr.mxu0 0.0
        %755 = vmatpush1.msra.mxu0 %v602
        %756 = vmatprep.subr.mxu0 0.0
        %757 = vmatpush1.msra.mxu0 %v601
        %758 = vmatprep.subr.mxu0 0.0
        %759 = vmatpush1.msra.mxu0 %v600
        %760 = vmatprep.subr.mxu0 0.0
        %761 = vmatpush1.msra.mxu0 %v599
        %762 = vmatprep.subr.mxu0 0.0
        %763 = vmatpush1.msra.mxu0 %v598
        %764 = vmatprep.subr.mxu0 0.0
        %765 = vmatpush1.msra.mxu0 %v597
        %766 = vmatprep.subr.mxu0 0.0
        %767 = vmatpush1.msra.mxu0 %v596
        %768 = vmatprep.subr.mxu0 0.0
        %769 = vmatpush1.msra.mxu0 %v595
        %770 = vmatprep.subr.mxu0 0.0
        %771 = vmatpush1.msra.mxu0 %v594
        %772 = vmatprep.subr.mxu0 0.0
        %773 = vmatpush2.msra.mxu0 0.0
        %774 = vmatprep.subr.mxu0 0.0
        %775 = vmatpush2.msra.mxu0 0.0
        %776 = vmatprep.subr.mxu0 0.0
        %777 = vmatpush2.msra.mxu0 0.0
        %778 = vmatprep.subr.mxu0 0.0
        %779 = vmatpush2.msra.mxu0 0.0
        %780 = vmatprep.subr.mxu0 0.0
        %781 = vmatpush2.msra.mxu0 0.0
        %782 = vmatprep.subr.mxu0 0.0
        %783 = vmatpush2.msra.mxu0 0.0
        %784 = vmatprep.subr.mxu0 0.0
        %785 = vmatpush2.msra.mxu0 0.0
        %786 = vmatprep.subr.mxu0 0.0
        %787 = vmatpush2.msra.mxu0 0.0
        %788 = vmatprep.subr.mxu0 0.0
        %789 = vmatpush2.msra.mxu0 0.0
        %790 = vmatprep.subr.mxu0 0.0
        %791 = vmatpush2.msra.mxu0 0.0
        %792 = vmatprep.subr.mxu0 0.0
        %793 = vmatpush2.msra.mxu0 0.0
        %794 = vmatprep.subr.mxu0 0.0
        %795 = vmatpush2.msra.mxu0 0.0
        %796 = vmatprep.subr.mxu0 0.0
        %797 = vmatpush2.msra.mxu0 0.0
        %798 = vmatprep.subr.mxu0 0.0
        %799 = vmatpush2.msra.mxu0 0.0
        %800 = vmatprep.subr.mxu0 0.0
        %801 = vmatpush2.msra.mxu0 0.0
        %802 = vmatprep.subr.mxu0 0.0
        %803 = vmatpush2.msra.mxu0 0.0
        %804 = vmatprep.mubr.f32.mxu0 0.0
        %805 = vmatmul.mubr.f32.gmra.mxu0 %v577
        %v806 = vpop.f32.mrf.mxu0
        %v807 = vadd.f32 %v657, %v806
        %v808 = vpop.f32.mrf.mxu0
        %809 = vdwg.mxu0
        %810 = vmatprep.subr.mxu0 0.0
        %811 = vmatpush1.msra.mxu0 %v625
        %812 = vmatprep.subr.mxu0 0.0
        %813 = vmatpush1.msra.mxu0 %v624
        %814 = vmatprep.subr.mxu0 0.0
        %815 = vmatpush1.msra.mxu0 %v623
        %816 = vmatprep.subr.mxu0 0.0
        %817 = vmatpush1.msra.mxu0 %v622
        %818 = vmatprep.subr.mxu0 0.0
        %819 = vmatpush1.msra.mxu0 %v621
        %820 = vmatprep.subr.mxu0 0.0
        %821 = vmatpush1.msra.mxu0 %v620
        %822 = vmatprep.subr.mxu0 0.0
        %823 = vmatpush1.msra.mxu0 %v619
        %824 = vmatprep.subr.mxu0 0.0
        %825 = vmatpush1.msra.mxu0 %v618
        %826 = vmatprep.subr.mxu0 0.0
        %827 = vmatpush1.msra.mxu0 %v617
        %828 = vmatprep.subr.mxu0 0.0
        %829 = vmatpush1.msra.mxu0 %v616
        %830 = vmatprep.subr.mxu0 0.0
        %831 = vmatpush1.msra.mxu0 %v615
        %832 = vmatprep.subr.mxu0 0.0
        %833 = vmatpush1.msra.mxu0 %v614
        %834 = vmatprep.subr.mxu0 0.0
        %835 = vmatpush1.msra.mxu0 %v613
        %836 = vmatprep.subr.mxu0 0.0
        %837 = vmatpush1.msra.mxu0 %v612
        %838 = vmatprep.subr.mxu0 0.0
        %839 = vmatpush1.msra.mxu0 %v611
        %840 = vmatprep.subr.mxu0 0.0
        %841 = vmatpush1.msra.mxu0 %v610
        %842 = vmatprep.subr.mxu0 0.0
        %843 = vmatpush2.msra.mxu0 0.0
        %844 = vmatprep.subr.mxu0 0.0
        %845 = vmatpush2.msra.mxu0 0.0
        %846 = vmatprep.subr.mxu0 0.0
        %847 = vmatpush2.msra.mxu0 0.0
        %848 = vmatprep.subr.mxu0 0.0
        %849 = vmatpush2.msra.mxu0 0.0
        %850 = vmatprep.subr.mxu0 0.0
        %851 = vmatpush2.msra.mxu0 0.0
        %852 = vmatprep.subr.mxu0 0.0
        %853 = vmatpush2.msra.mxu0 0.0
        %854 = vmatprep.subr.mxu0 0.0
        %855 = vmatpush2.msra.mxu0 0.0
        %856 = vmatprep.subr.mxu0 0.0
        %857 = vmatpush2.msra.mxu0 0.0
        %858 = vmatprep.subr.mxu0 0.0
        %859 = vmatpush2.msra.mxu0 0.0
        %860 = vmatprep.subr.mxu0 0.0
        %861 = vmatpush2.msra.mxu0 0.0
        %862 = vmatprep.subr.mxu0 0.0
        %863 = vmatpush2.msra.mxu0 0.0
        %864 = vmatprep.subr.mxu0 0.0
        %865 = vmatpush2.msra.mxu0 0.0
        %866 = vmatprep.subr.mxu0 0.0
        %867 = vmatpush2.msra.mxu0 0.0
        %868 = vmatprep.subr.mxu0 0.0
        %869 = vmatpush2.msra.mxu0 0.0
        %870 = vmatprep.subr.mxu0 0.0
        %871 = vmatpush2.msra.mxu0 0.0
        %872 = vmatprep.subr.mxu0 0.0
        %873 = vmatpush2.msra.mxu0 0.0
        %874 = vmatprep.mubr.f32.mxu0 0.0
        %875 = vmatmul.mubr.f32.gmra.mxu0 %v577
        %v876 = vpop.f32.mrf.mxu0
        %v877 = vadd.f32 %v661, %v876
        %v878 = vpop.f32.mrf.mxu0
        %879 = vdwg.mxu0
        %880 = vmatprep.subr.mxu0 0.0
        %881 = vmatpush1.msra.mxu0 %v641
        %882 = vmatprep.subr.mxu0 0.0
        %883 = vmatpush1.msra.mxu0 %v640
        %884 = vmatprep.subr.mxu0 0.0
        %885 = vmatpush1.msra.mxu0 %v639
        %886 = vmatprep.subr.mxu0 0.0
        %887 = vmatpush1.msra.mxu0 %v638
        %888 = vmatprep.subr.mxu0 0.0
        %889 = vmatpush1.msra.mxu0 %v637
        %890 = vmatprep.subr.mxu0 0.0
        %891 = vmatpush1.msra.mxu0 %v636
        %892 = vmatprep.subr.mxu0 0.0
        %893 = vmatpush1.msra.mxu0 %v635
        %894 = vmatprep.subr.mxu0 0.0
        %895 = vmatpush1.msra.mxu0 %v634
        %896 = vmatprep.subr.mxu0 0.0
        %897 = vmatpush1.msra.mxu0 %v633
        %898 = vmatprep.subr.mxu0 0.0
        %899 = vmatpush1.msra.mxu0 %v632
        %900 = vmatprep.subr.mxu0 0.0
        %901 = vmatpush1.msra.mxu0 %v631
        %902 = vmatprep.subr.mxu0 0.0
        %903 = vmatpush1.msra.mxu0 %v630
        %904 = vmatprep.subr.mxu0 0.0
        %905 = vmatpush1.msra.mxu0 %v629
        %906 = vmatprep.subr.mxu0 0.0
        %907 = vmatpush1.msra.mxu0 %v628
        %908 = vmatprep.subr.mxu0 0.0
        %909 = vmatpush1.msra.mxu0 %v627
        %910 = vmatprep.subr.mxu0 0.0
        %911 = vmatpush1.msra.mxu0 %v626
        %912 = vmatprep.subr.mxu0 0.0
        %913 = vmatpush2.msra.mxu0 0.0
        %914 = vmatprep.subr.mxu0 0.0
        %915 = vmatpush2.msra.mxu0 0.0
        %916 = vmatprep.subr.mxu0 0.0
        %917 = vmatpush2.msra.mxu0 0.0
        %918 = vmatprep.subr.mxu0 0.0
        %919 = vmatpush2.msra.mxu0 0.0
        %920 = vmatprep.subr.mxu0 0.0
        %921 = vmatpush2.msra.mxu0 0.0
        %922 = vmatprep.subr.mxu0 0.0
        %923 = vmatpush2.msra.mxu0 0.0
        %924 = vmatprep.subr.mxu0 0.0
        %925 = vmatpush2.msra.mxu0 0.0
        %926 = vmatprep.subr.mxu0 0.0
        %927 = vmatpush2.msra.mxu0 0.0
        %928 = vmatprep.subr.mxu0 0.0
        %929 = vmatpush2.msra.mxu0 0.0
        %930 = vmatprep.subr.mxu0 0.0
        %931 = vmatpush2.msra.mxu0 0.0
        %932 = vmatprep.subr.mxu0 0.0
        %933 = vmatpush2.msra.mxu0 0.0
        %934 = vmatprep.subr.mxu0 0.0
        %935 = vmatpush2.msra.mxu0 0.0
        %936 = vmatprep.subr.mxu0 0.0
        %937 = vmatpush2.msra.mxu0 0.0
        %938 = vmatprep.subr.mxu0 0.0
        %939 = vmatpush2.msra.mxu0 0.0
        %940 = vmatprep.subr.mxu0 0.0
        %941 = vmatpush2.msra.mxu0 0.0
        %942 = vmatprep.subr.mxu0 0.0
        %943 = vmatpush2.msra.mxu0 0.0
        %944 = vmatprep.mubr.f32.mxu0 0.0
        %945 = vmatmul.mubr.f32.gmra.mxu0 %v577
        %v946 = vpop.f32.mrf.mxu0
        %v947 = vadd.f32 %v665, %v946
        %v948 = vpop.f32.mrf.mxu0
        %949 = vdwg.mxu0
        %v950 = vld [vmem:[%s5] sm:$0xff]
        %v951 = vld [vmem:[%s5 + $0x8] sm:$0xff]
        %v952 = vld [vmem:[%s5 + $0x10] sm:$0xff]
        %v953 = vld [vmem:[%s5 + $0x18] sm:$0xff]
        %v954 = vld [vmem:[%s5 + $0x20] sm:$0xff]
        %v955 = vld [vmem:[%s5 + $0x28] sm:$0xff]
        %v956 = vld [vmem:[%s5 + $0x30] sm:$0xff]
        %v957 = vld [vmem:[%s5 + $0x38] sm:$0xff]
        %v958 = vld [vmem:[%s5 + $0x40] sm:$0xff]
        %v959 = vld [vmem:[%s5 + $0x48] sm:$0xff]
        %v960 = vld [vmem:[%s5 + $0x50] sm:$0xff]
        %v961 = vld [vmem:[%s5 + $0x58] sm:$0xff]
        %v962 = vld [vmem:[%s5 + $0x60] sm:$0xff]
        %v963 = vld [vmem:[%s5 + $0x68] sm:$0xff]
        %v964 = vld [vmem:[%s5 + $0x70] sm:$0xff]
        %v965 = vld [vmem:[%s5 + $0x78] sm:$0xff]
        %v966 = vld [vmem:[%s5 + $0x80] sm:$0xff]
        %v967 = vld [vmem:[%s5 + $0x88] sm:$0xff]
        %v968 = vld [vmem:[%s5 + $0x90] sm:$0xff]
        %v969 = vld [vmem:[%s5 + $0x98] sm:$0xff]
        %v970 = vld [vmem:[%s5 + $0xa0] sm:$0xff]
        %v971 = vld [vmem:[%s5 + $0xa8] sm:$0xff]
        %v972 = vld [vmem:[%s5 + $0xb0] sm:$0xff]
        %v973 = vld [vmem:[%s5 + $0xb8] sm:$0xff]
        %v974 = vld [vmem:[%s5 + $0xc0] sm:$0xff]
        %v975 = vld [vmem:[%s5 + $0xc8] sm:$0xff]
        %v976 = vld [vmem:[%s5 + $0xd0] sm:$0xff]
        %v977 = vld [vmem:[%s5 + $0xd8] sm:$0xff]
        %v978 = vld [vmem:[%s5 + $0xe0] sm:$0xff]
        %v979 = vld [vmem:[%s5 + $0xe8] sm:$0xff]
        %v980 = vld [vmem:[%s5 + $0xf0] sm:$0xff]
        %v981 = vld [vmem:[%s5 + $0xf8] sm:$0xff]
        %v982 = vld [vmem:[%s5 + $0x100] sm:$0xff]
        %v983 = vld [vmem:[%s5 + $0x108] sm:$0xff]
        %v984 = vld [vmem:[%s5 + $0x110] sm:$0xff]
        %v985 = vld [vmem:[%s5 + $0x118] sm:$0xff]
        %v986 = vld [vmem:[%s5 + $0x120] sm:$0xff]
        %v987 = vld [vmem:[%s5 + $0x128] sm:$0xff]
        %v988 = vld [vmem:[%s5 + $0x130] sm:$0xff]
        %v989 = vld [vmem:[%s5 + $0x138] sm:$0xff]
        %v990 = vld [vmem:[%s5 + $0x140] sm:$0xff]
        %v991 = vld [vmem:[%s5 + $0x148] sm:$0xff]
        %v992 = vld [vmem:[%s5 + $0x150] sm:$0xff]
        %v993 = vld [vmem:[%s5 + $0x158] sm:$0xff]
        %v994 = vld [vmem:[%s5 + $0x160] sm:$0xff]
        %v995 = vld [vmem:[%s5 + $0x168] sm:$0xff]
        %v996 = vld [vmem:[%s5 + $0x170] sm:$0xff]
        %v997 = vld [vmem:[%s5 + $0x178] sm:$0xff]
        %v998 = vld [vmem:[%s5 + $0x180] sm:$0xff]
        %v999 = vld [vmem:[%s5 + $0x188] sm:$0xff]
        %v1000 = vld [vmem:[%s5 + $0x190] sm:$0xff]
        %v1001 = vld [vmem:[%s5 + $0x198] sm:$0xff]
        %v1002 = vld [vmem:[%s5 + $0x1a0] sm:$0xff]
        %v1003 = vld [vmem:[%s5 + $0x1a8] sm:$0xff]
        %v1004 = vld [vmem:[%s5 + $0x1b0] sm:$0xff]
        %v1005 = vld [vmem:[%s5 + $0x1b8] sm:$0xff]
        %v1006 = vld [vmem:[%s5 + $0x1c0] sm:$0xff]
        %v1007 = vld [vmem:[%s5 + $0x1c8] sm:$0xff]
        %v1008 = vld [vmem:[%s5 + $0x1d0] sm:$0xff]
        %v1009 = vld [vmem:[%s5 + $0x1d8] sm:$0xff]
        %v1010 = vld [vmem:[%s5 + $0x1e0] sm:$0xff]
        %v1011 = vld [vmem:[%s5 + $0x1e8] sm:$0xff]
        %v1012 = vld [vmem:[%s5 + $0x1f0] sm:$0xff]
        %v1013 = vld [vmem:[%s5 + $0x1f8] sm:$0xff]
        %v1014 = vld [vmem:[%s6] sm:$0x1]
        %v1015 = vld [vmem:[%s6 + $0x1] sm:$0x1]
        %v1016 = vld [vmem:[%s6 + $0x2] sm:$0x1]
        %v1017 = vld [vmem:[%s6 + $0x3] sm:$0x1]
        %v1022 = vlaneseq
        %v1023 = vshrl.u32 %v1022, 7
        %v1024 = vsub.s32 0, %v1023
        %v1025 = vrot.slane %v1014, %v1024
        %v1026 = vlaneseq
        %v1027 = vshrl.u32 %v1026, 7
        %v1028 = vsub.s32 0, %v1027
        %v1029 = vrot.slane %v1015, %v1028
        %v1030 = vlaneseq
        %v1031 = vshrl.u32 %v1030, 7
        %v1032 = vsub.s32 0, %v1031
        %v1033 = vrot.slane %v1016, %v1032
        %v1034 = vlaneseq
        %v1035 = vshrl.u32 %v1034, 7
        %v1036 = vsub.s32 0, %v1035
        %v1037 = vrot.slane %v1017, %v1036
        %1042 = vmatprep.subr.mxu0 0.0
        %1043 = vmatpush1.msra.mxu0 %v965
        %1044 = vmatprep.subr.mxu0 0.0
        %1045 = vmatpush1.msra.mxu0 %v964
        %1046 = vmatprep.subr.mxu0 0.0
        %1047 = vmatpush1.msra.mxu0 %v963
        %1048 = vmatprep.subr.mxu0 0.0
        %1049 = vmatpush1.msra.mxu0 %v962
        %1050 = vmatprep.subr.mxu0 0.0
        %1051 = vmatpush1.msra.mxu0 %v961
        %1052 = vmatprep.subr.mxu0 0.0
        %1053 = vmatpush1.msra.mxu0 %v960
        %1054 = vmatprep.subr.mxu0 0.0
        %1055 = vmatpush1.msra.mxu0 %v959
        %1056 = vmatprep.subr.mxu0 0.0
        %1057 = vmatpush1.msra.mxu0 %v958
        %1058 = vmatprep.subr.mxu0 0.0
        %1059 = vmatpush1.msra.mxu0 %v957
        %1060 = vmatprep.subr.mxu0 0.0
        %1061 = vmatpush1.msra.mxu0 %v956
        %1062 = vmatprep.subr.mxu0 0.0
        %1063 = vmatpush1.msra.mxu0 %v955
        %1064 = vmatprep.subr.mxu0 0.0
        %1065 = vmatpush1.msra.mxu0 %v954
        %1066 = vmatprep.subr.mxu0 0.0
        %1067 = vmatpush1.msra.mxu0 %v953
        %1068 = vmatprep.subr.mxu0 0.0
        %1069 = vmatpush1.msra.mxu0 %v952
        %1070 = vmatprep.subr.mxu0 0.0
        %1071 = vmatpush1.msra.mxu0 %v951
        %1072 = vmatprep.subr.mxu0 0.0
        %1073 = vmatpush1.msra.mxu0 %v950
        %1074 = vmatprep.subr.mxu0 0.0
        %1075 = vmatpush2.msra.mxu0 0.0
        %1076 = vmatprep.subr.mxu0 0.0
        %1077 = vmatpush2.msra.mxu0 0.0
        %1078 = vmatprep.subr.mxu0 0.0
        %1079 = vmatpush2.msra.mxu0 0.0
        %1080 = vmatprep.subr.mxu0 0.0
        %1081 = vmatpush2.msra.mxu0 0.0
        %1082 = vmatprep.subr.mxu0 0.0
        %1083 = vmatpush2.msra.mxu0 0.0
        %1084 = vmatprep.subr.mxu0 0.0
        %1085 = vmatpush2.msra.mxu0 0.0
        %1086 = vmatprep.subr.mxu0 0.0
        %1087 = vmatpush2.msra.mxu0 0.0
        %1088 = vmatprep.subr.mxu0 0.0
        %1089 = vmatpush2.msra.mxu0 0.0
        %1090 = vmatprep.subr.mxu0 0.0
        %1091 = vmatpush2.msra.mxu0 0.0
        %1092 = vmatprep.subr.mxu0 0.0
        %1093 = vmatpush2.msra.mxu0 0.0
        %1094 = vmatprep.subr.mxu0 0.0
        %1095 = vmatpush2.msra.mxu0 0.0
        %1096 = vmatprep.subr.mxu0 0.0
        %1097 = vmatpush2.msra.mxu0 0.0
        %1098 = vmatprep.subr.mxu0 0.0
        %1099 = vmatpush2.msra.mxu0 0.0
        %1100 = vmatprep.subr.mxu0 0.0
        %1101 = vmatpush2.msra.mxu0 0.0
        %1102 = vmatprep.subr.mxu0 0.0
        %1103 = vmatpush2.msra.mxu0 0.0
        %1104 = vmatprep.subr.mxu0 0.0
        %1105 = vmatpush2.msra.mxu0 0.0
        %1106 = vmatprep.mubr.f32.mxu0 0.0
        %1107 = vmatmul.mubr.f32.gmra.mxu0 %v577
        %v1108 = vpop.f32.mrf.mxu0
        %v1109 = vadd.f32 %v1025, %v1108
        %v1110 = vpop.f32.mrf.mxu0
        %1111 = vdwg.mxu0
        %1112 = vmatprep.subr.mxu0 0.0
        %1113 = vmatpush1.msra.mxu0 %v981
        %1114 = vmatprep.subr.mxu0 0.0
        %1115 = vmatpush1.msra.mxu0 %v980
        %1116 = vmatprep.subr.mxu0 0.0
        %1117 = vmatpush1.msra.mxu0 %v979
        %1118 = vmatprep.subr.mxu0 0.0
        %1119 = vmatpush1.msra.mxu0 %v978
        %1120 = vmatprep.subr.mxu0 0.0
        %1121 = vmatpush1.msra.mxu0 %v977
        %1122 = vmatprep.subr.mxu0 0.0
        %1123 = vmatpush1.msra.mxu0 %v976
        %1124 = vmatprep.subr.mxu0 0.0
        %1125 = vmatpush1.msra.mxu0 %v975
        %1126 = vmatprep.subr.mxu0 0.0
        %1127 = vmatpush1.msra.mxu0 %v974
        %1128 = vmatprep.subr.mxu0 0.0
        %1129 = vmatpush1.msra.mxu0 %v973
        %1130 = vmatprep.subr.mxu0 0.0
        %1131 = vmatpush1.msra.mxu0 %v972
        %1132 = vmatprep.subr.mxu0 0.0
        %1133 = vmatpush1.msra.mxu0 %v971
        %1134 = vmatprep.subr.mxu0 0.0
        %1135 = vmatpush1.msra.mxu0 %v970
        %1136 = vmatprep.subr.mxu0 0.0
        %1137 = vmatpush1.msra.mxu0 %v969
        %1138 = vmatprep.subr.mxu0 0.0
        %1139 = vmatpush1.msra.mxu0 %v968
        %1140 = vmatprep.subr.mxu0 0.0
        %1141 = vmatpush1.msra.mxu0 %v967
        %1142 = vmatprep.subr.mxu0 0.0
        %1143 = vmatpush1.msra.mxu0 %v966
        %1144 = vmatprep.subr.mxu0 0.0
        %1145 = vmatpush2.msra.mxu0 0.0
        %1146 = vmatprep.subr.mxu0 0.0
        %1147 = vmatpush2.msra.mxu0 0.0
        %1148 = vmatprep.subr.mxu0 0.0
        %1149 = vmatpush2.msra.mxu0 0.0
        %1150 = vmatprep.subr.mxu0 0.0
        %1151 = vmatpush2.msra.mxu0 0.0
        %1152 = vmatprep.subr.mxu0 0.0
        %1153 = vmatpush2.msra.mxu0 0.0
        %1154 = vmatprep.subr.mxu0 0.0
        %1155 = vmatpush2.msra.mxu0 0.0
        %1156 = vmatprep.subr.mxu0 0.0
        %1157 = vmatpush2.msra.mxu0 0.0
        %1158 = vmatprep.subr.mxu0 0.0
        %1159 = vmatpush2.msra.mxu0 0.0
        %1160 = vmatprep.subr.mxu0 0.0
        %1161 = vmatpush2.msra.mxu0 0.0
        %1162 = vmatprep.subr.mxu0 0.0
        %1163 = vmatpush2.msra.mxu0 0.0
        %1164 = vmatprep.subr.mxu0 0.0
        %1165 = vmatpush2.msra.mxu0 0.0
        %1166 = vmatprep.subr.mxu0 0.0
        %1167 = vmatpush2.msra.mxu0 0.0
        %1168 = vmatprep.subr.mxu0 0.0
        %1169 = vmatpush2.msra.mxu0 0.0
        %1170 = vmatprep.subr.mxu0 0.0
        %1171 = vmatpush2.msra.mxu0 0.0
        %1172 = vmatprep.subr.mxu0 0.0
        %1173 = vmatpush2.msra.mxu0 0.0
        %1174 = vmatprep.subr.mxu0 0.0
        %1175 = vmatpush2.msra.mxu0 0.0
        %1176 = vmatprep.mubr.f32.mxu0 0.0
        %1177 = vmatmul.mubr.f32.gmra.mxu0 %v577
        %v1178 = vpop.f32.mrf.mxu0
        %v1179 = vadd.f32 %v1029, %v1178
        %v1180 = vpop.f32.mrf.mxu0
        %1181 = vdwg.mxu0
        %1182 = vmatprep.subr.mxu0 0.0
        %1183 = vmatpush1.msra.mxu0 %v997
        %1184 = vmatprep.subr.mxu0 0.0
        %1185 = vmatpush1.msra.mxu0 %v996
        %1186 = vmatprep.subr.mxu0 0.0
        %1187 = vmatpush1.msra.mxu0 %v995
        %1188 = vmatprep.subr.mxu0 0.0
        %1189 = vmatpush1.msra.mxu0 %v994
        %1190 = vmatprep.subr.mxu0 0.0
        %1191 = vmatpush1.msra.mxu0 %v993
        %1192 = vmatprep.subr.mxu0 0.0
        %1193 = vmatpush1.msra.mxu0 %v992
        %1194 = vmatprep.subr.mxu0 0.0
        %1195 = vmatpush1.msra.mxu0 %v991
        %1196 = vmatprep.subr.mxu0 0.0
        %1197 = vmatpush1.msra.mxu0 %v990
        %1198 = vmatprep.subr.mxu0 0.0
        %1199 = vmatpush1.msra.mxu0 %v989
        %1200 = vmatprep.subr.mxu0 0.0
        %1201 = vmatpush1.msra.mxu0 %v988
        %1202 = vmatprep.subr.mxu0 0.0
        %1203 = vmatpush1.msra.mxu0 %v987
        %1204 = vmatprep.subr.mxu0 0.0
        %1205 = vmatpush1.msra.mxu0 %v986
        %1206 = vmatprep.subr.mxu0 0.0
        %1207 = vmatpush1.msra.mxu0 %v985
        %1208 = vmatprep.subr.mxu0 0.0
        %1209 = vmatpush1.msra.mxu0 %v984
        %1210 = vmatprep.subr.mxu0 0.0
        %1211 = vmatpush1.msra.mxu0 %v983
        %1212 = vmatprep.subr.mxu0 0.0
        %1213 = vmatpush1.msra.mxu0 %v982
        %1214 = vmatprep.subr.mxu0 0.0
        %1215 = vmatpush2.msra.mxu0 0.0
        %1216 = vmatprep.subr.mxu0 0.0
        %1217 = vmatpush2.msra.mxu0 0.0
        %1218 = vmatprep.subr.mxu0 0.0
        %1219 = vmatpush2.msra.mxu0 0.0
        %1220 = vmatprep.subr.mxu0 0.0
        %1221 = vmatpush2.msra.mxu0 0.0
        %1222 = vmatprep.subr.mxu0 0.0
        %1223 = vmatpush2.msra.mxu0 0.0
        %1224 = vmatprep.subr.mxu0 0.0
        %1225 = vmatpush2.msra.mxu0 0.0
        %1226 = vmatprep.subr.mxu0 0.0
        %1227 = vmatpush2.msra.mxu0 0.0
        %1228 = vmatprep.subr.mxu0 0.0
        %1229 = vmatpush2.msra.mxu0 0.0
        %1230 = vmatprep.subr.mxu0 0.0
        %1231 = vmatpush2.msra.mxu0 0.0
        %1232 = vmatprep.subr.mxu0 0.0
        %1233 = vmatpush2.msra.mxu0 0.0
        %1234 = vmatprep.subr.mxu0 0.0
        %1235 = vmatpush2.msra.mxu0 0.0
        %1236 = vmatprep.subr.mxu0 0.0
        %1237 = vmatpush2.msra.mxu0 0.0
        %1238 = vmatprep.subr.mxu0 0.0
        %1239 = vmatpush2.msra.mxu0 0.0
        %1240 = vmatprep.subr.mxu0 0.0
        %1241 = vmatpush2.msra.mxu0 0.0
        %1242 = vmatprep.subr.mxu0 0.0
        %1243 = vmatpush2.msra.mxu0 0.0
        %1244 = vmatprep.subr.mxu0 0.0
        %1245 = vmatpush2.msra.mxu0 0.0
        %1246 = vmatprep.mubr.f32.mxu0 0.0
        %1247 = vmatmul.mubr.f32.gmra.mxu0 %v577
        %v1248 = vpop.f32.mrf.mxu0
        %v1249 = vadd.f32 %v1033, %v1248
        %v1250 = vpop.f32.mrf.mxu0
        %1251 = vdwg.mxu0
        %1252 = vmatprep.subr.mxu0 0.0
        %1253 = vmatpush1.msra.mxu0 %v1013
        %1254 = vmatprep.subr.mxu0 0.0
        %1255 = vmatpush1.msra.mxu0 %v1012
        %1256 = vmatprep.subr.mxu0 0.0
        %1257 = vmatpush1.msra.mxu0 %v1011
        %1258 = vmatprep.subr.mxu0 0.0
        %1259 = vmatpush1.msra.mxu0 %v1010
        %1260 = vmatprep.subr.mxu0 0.0
        %1261 = vmatpush1.msra.mxu0 %v1009
        %1262 = vmatprep.subr.mxu0 0.0
        %1263 = vmatpush1.msra.mxu0 %v1008
        %1264 = vmatprep.subr.mxu0 0.0
        %1265 = vmatpush1.msra.mxu0 %v1007
        %1266 = vmatprep.subr.mxu0 0.0
        %1267 = vmatpush1.msra.mxu0 %v1006
        %1268 = vmatprep.subr.mxu0 0.0
        %1269 = vmatpush1.msra.mxu0 %v1005
        %1270 = vmatprep.subr.mxu0 0.0
        %1271 = vmatpush1.msra.mxu0 %v1004
        %1272 = vmatprep.subr.mxu0 0.0
        %1273 = vmatpush1.msra.mxu0 %v1003
        %1274 = vmatprep.subr.mxu0 0.0
        %1275 = vmatpush1.msra.mxu0 %v1002
        %1276 = vmatprep.subr.mxu0 0.0
        %1277 = vmatpush1.msra.mxu0 %v1001
        %1278 = vmatprep.subr.mxu0 0.0
        %1279 = vmatpush1.msra.mxu0 %v1000
        %1280 = vmatprep.subr.mxu0 0.0
        %1281 = vmatpush1.msra.mxu0 %v999
        %1282 = vmatprep.subr.mxu0 0.0
        %1283 = vmatpush1.msra.mxu0 %v998
        %1284 = vmatprep.subr.mxu0 0.0
        %1285 = vmatpush2.msra.mxu0 0.0
        %1286 = vmatprep.subr.mxu0 0.0
        %1287 = vmatpush2.msra.mxu0 0.0
        %1288 = vmatprep.subr.mxu0 0.0
        %1289 = vmatpush2.msra.mxu0 0.0
        %1290 = vmatprep.subr.mxu0 0.0
        %1291 = vmatpush2.msra.mxu0 0.0
        %1292 = vmatprep.subr.mxu0 0.0
        %1293 = vmatpush2.msra.mxu0 0.0
        %1294 = vmatprep.subr.mxu0 0.0
        %1295 = vmatpush2.msra.mxu0 0.0
        %1296 = vmatprep.subr.mxu0 0.0
        %1297 = vmatpush2.msra.mxu0 0.0
        %1298 = vmatprep.subr.mxu0 0.0
        %1299 = vmatpush2.msra.mxu0 0.0
        %1300 = vmatprep.subr.mxu0 0.0
        %1301 = vmatpush2.msra.mxu0 0.0
        %1302 = vmatprep.subr.mxu0 0.0
        %1303 = vmatpush2.msra.mxu0 0.0
        %1304 = vmatprep.subr.mxu0 0.0
        %1305 = vmatpush2.msra.mxu0 0.0
        %1306 = vmatprep.subr.mxu0 0.0
        %1307 = vmatpush2.msra.mxu0 0.0
        %1308 = vmatprep.subr.mxu0 0.0
        %1309 = vmatpush2.msra.mxu0 0.0
        %1310 = vmatprep.subr.mxu0 0.0
        %1311 = vmatpush2.msra.mxu0 0.0
        %1312 = vmatprep.subr.mxu0 0.0
        %1313 = vmatpush2.msra.mxu0 0.0
        %1314 = vmatprep.subr.mxu0 0.0
        %1315 = vmatpush2.msra.mxu0 0.0
        %1316 = vmatprep.mubr.f32.mxu0 0.0
        %1317 = vmatmul.mubr.f32.gmra.mxu0 %v577
        %v1318 = vpop.f32.mrf.mxu0
        %v1319 = vadd.f32 %v1037, %v1318
        %v1320 = vpop.f32.mrf.mxu0
        %1321 = vdwg.mxu0
        %v1322 = vld [vmem:[%s7] sm:$0xff]
        %v1323 = vld [vmem:[%s7 + $0x8] sm:$0xff]
        %v1324 = vld [vmem:[%s7 + $0x10] sm:$0xff]
        %v1325 = vld [vmem:[%s7 + $0x18] sm:$0xff]
        %v1326 = vld [vmem:[%s7 + $0x20] sm:$0xff]
        %v1327 = vld [vmem:[%s7 + $0x28] sm:$0xff]
        %v1328 = vld [vmem:[%s7 + $0x30] sm:$0xff]
        %v1329 = vld [vmem:[%s7 + $0x38] sm:$0xff]
        %v1330 = vld [vmem:[%s7 + $0x40] sm:$0xff]
        %v1331 = vld [vmem:[%s7 + $0x48] sm:$0xff]
        %v1332 = vld [vmem:[%s7 + $0x50] sm:$0xff]
        %v1333 = vld [vmem:[%s7 + $0x58] sm:$0xff]
        %v1334 = vld [vmem:[%s7 + $0x60] sm:$0xff]
        %v1335 = vld [vmem:[%s7 + $0x68] sm:$0xff]
        %v1336 = vld [vmem:[%s7 + $0x70] sm:$0xff]
        %v1337 = vld [vmem:[%s7 + $0x78] sm:$0xff]
        %v1338 = vld [vmem:[%s7 + $0x80] sm:$0xff]
        %v1339 = vld [vmem:[%s7 + $0x88] sm:$0xff]
        %v1340 = vld [vmem:[%s7 + $0x90] sm:$0xff]
        %v1341 = vld [vmem:[%s7 + $0x98] sm:$0xff]
        %v1342 = vld [vmem:[%s7 + $0xa0] sm:$0xff]
        %v1343 = vld [vmem:[%s7 + $0xa8] sm:$0xff]
        %v1344 = vld [vmem:[%s7 + $0xb0] sm:$0xff]
        %v1345 = vld [vmem:[%s7 + $0xb8] sm:$0xff]
        %v1346 = vld [vmem:[%s7 + $0xc0] sm:$0xff]
        %v1347 = vld [vmem:[%s7 + $0xc8] sm:$0xff]
        %v1348 = vld [vmem:[%s7 + $0xd0] sm:$0xff]
        %v1349 = vld [vmem:[%s7 + $0xd8] sm:$0xff]
        %v1350 = vld [vmem:[%s7 + $0xe0] sm:$0xff]
        %v1351 = vld [vmem:[%s7 + $0xe8] sm:$0xff]
        %v1352 = vld [vmem:[%s7 + $0xf0] sm:$0xff]
        %v1353 = vld [vmem:[%s7 + $0xf8] sm:$0xff]
        %v1354 = vld [vmem:[%s7 + $0x100] sm:$0xff]
        %v1355 = vld [vmem:[%s7 + $0x108] sm:$0xff]
        %v1356 = vld [vmem:[%s7 + $0x110] sm:$0xff]
        %v1357 = vld [vmem:[%s7 + $0x118] sm:$0xff]
        %v1358 = vld [vmem:[%s7 + $0x120] sm:$0xff]
        %v1359 = vld [vmem:[%s7 + $0x128] sm:$0xff]
        %v1360 = vld [vmem:[%s7 + $0x130] sm:$0xff]
        %v1361 = vld [vmem:[%s7 + $0x138] sm:$0xff]
        %v1362 = vld [vmem:[%s7 + $0x140] sm:$0xff]
        %v1363 = vld [vmem:[%s7 + $0x148] sm:$0xff]
        %v1364 = vld [vmem:[%s7 + $0x150] sm:$0xff]
        %v1365 = vld [vmem:[%s7 + $0x158] sm:$0xff]
        %v1366 = vld [vmem:[%s7 + $0x160] sm:$0xff]
        %v1367 = vld [vmem:[%s7 + $0x168] sm:$0xff]
        %v1368 = vld [vmem:[%s7 + $0x170] sm:$0xff]
        %v1369 = vld [vmem:[%s7 + $0x178] sm:$0xff]
        %v1370 = vld [vmem:[%s7 + $0x180] sm:$0xff]
        %v1371 = vld [vmem:[%s7 + $0x188] sm:$0xff]
        %v1372 = vld [vmem:[%s7 + $0x190] sm:$0xff]
        %v1373 = vld [vmem:[%s7 + $0x198] sm:$0xff]
        %v1374 = vld [vmem:[%s7 + $0x1a0] sm:$0xff]
        %v1375 = vld [vmem:[%s7 + $0x1a8] sm:$0xff]
        %v1376 = vld [vmem:[%s7 + $0x1b0] sm:$0xff]
        %v1377 = vld [vmem:[%s7 + $0x1b8] sm:$0xff]
        %v1378 = vld [vmem:[%s7 + $0x1c0] sm:$0xff]
        %v1379 = vld [vmem:[%s7 + $0x1c8] sm:$0xff]
        %v1380 = vld [vmem:[%s7 + $0x1d0] sm:$0xff]
        %v1381 = vld [vmem:[%s7 + $0x1d8] sm:$0xff]
        %v1382 = vld [vmem:[%s7 + $0x1e0] sm:$0xff]
        %v1383 = vld [vmem:[%s7 + $0x1e8] sm:$0xff]
        %v1384 = vld [vmem:[%s7 + $0x1f0] sm:$0xff]
        %v1385 = vld [vmem:[%s7 + $0x1f8] sm:$0xff]
        %v1386 = vld [vmem:[%s8] sm:$0x1]
        %v1387 = vld [vmem:[%s8 + $0x1] sm:$0x1]
        %v1388 = vld [vmem:[%s8 + $0x2] sm:$0x1]
        %v1389 = vld [vmem:[%s8 + $0x3] sm:$0x1]
        %v1394 = vlaneseq
        %v1395 = vshrl.u32 %v1394, 7
        %v1396 = vsub.s32 0, %v1395
        %v1397 = vrot.slane %v1386, %v1396
        %v1398 = vlaneseq
        %v1399 = vshrl.u32 %v1398, 7
        %v1400 = vsub.s32 0, %v1399
        %v1401 = vrot.slane %v1387, %v1400
        %v1402 = vlaneseq
        %v1403 = vshrl.u32 %v1402, 7
        %v1404 = vsub.s32 0, %v1403
        %v1405 = vrot.slane %v1388, %v1404
        %v1406 = vlaneseq
        %v1407 = vshrl.u32 %v1406, 7
        %v1408 = vsub.s32 0, %v1407
        %v1409 = vrot.slane %v1389, %v1408
        %1414 = vmatprep.subr.mxu0 0.0
        %1415 = vmatpush1.msra.mxu0 %v1337
        %1416 = vmatprep.subr.mxu0 0.0
        %1417 = vmatpush1.msra.mxu0 %v1336
        %1418 = vmatprep.subr.mxu0 0.0
        %1419 = vmatpush1.msra.mxu0 %v1335
        %1420 = vmatprep.subr.mxu0 0.0
        %1421 = vmatpush1.msra.mxu0 %v1334
        %1422 = vmatprep.subr.mxu0 0.0
        %1423 = vmatpush1.msra.mxu0 %v1333
        %1424 = vmatprep.subr.mxu0 0.0
        %1425 = vmatpush1.msra.mxu0 %v1332
        %1426 = vmatprep.subr.mxu0 0.0
        %1427 = vmatpush1.msra.mxu0 %v1331
        %1428 = vmatprep.subr.mxu0 0.0
        %1429 = vmatpush1.msra.mxu0 %v1330
        %1430 = vmatprep.subr.mxu0 0.0
        %1431 = vmatpush1.msra.mxu0 %v1329
        %1432 = vmatprep.subr.mxu0 0.0
        %1433 = vmatpush1.msra.mxu0 %v1328
        %1434 = vmatprep.subr.mxu0 0.0
        %1435 = vmatpush1.msra.mxu0 %v1327
        %1436 = vmatprep.subr.mxu0 0.0
        %1437 = vmatpush1.msra.mxu0 %v1326
        %1438 = vmatprep.subr.mxu0 0.0
        %1439 = vmatpush1.msra.mxu0 %v1325
        %1440 = vmatprep.subr.mxu0 0.0
        %1441 = vmatpush1.msra.mxu0 %v1324
        %1442 = vmatprep.subr.mxu0 0.0
        %1443 = vmatpush1.msra.mxu0 %v1323
        %1444 = vmatprep.subr.mxu0 0.0
        %1445 = vmatpush1.msra.mxu0 %v1322
        %1446 = vmatprep.subr.mxu0 0.0
        %1447 = vmatpush2.msra.mxu0 0.0
        %1448 = vmatprep.subr.mxu0 0.0
        %1449 = vmatpush2.msra.mxu0 0.0
        %1450 = vmatprep.subr.mxu0 0.0
        %1451 = vmatpush2.msra.mxu0 0.0
        %1452 = vmatprep.subr.mxu0 0.0
        %1453 = vmatpush2.msra.mxu0 0.0
        %1454 = vmatprep.subr.mxu0 0.0
        %1455 = vmatpush2.msra.mxu0 0.0
        %1456 = vmatprep.subr.mxu0 0.0
        %1457 = vmatpush2.msra.mxu0 0.0
        %1458 = vmatprep.subr.mxu0 0.0
        %1459 = vmatpush2.msra.mxu0 0.0
        %1460 = vmatprep.subr.mxu0 0.0
        %1461 = vmatpush2.msra.mxu0 0.0
        %1462 = vmatprep.subr.mxu0 0.0
        %1463 = vmatpush2.msra.mxu0 0.0
        %1464 = vmatprep.subr.mxu0 0.0
        %1465 = vmatpush2.msra.mxu0 0.0
        %1466 = vmatprep.subr.mxu0 0.0
        %1467 = vmatpush2.msra.mxu0 0.0
        %1468 = vmatprep.subr.mxu0 0.0
        %1469 = vmatpush2.msra.mxu0 0.0
        %1470 = vmatprep.subr.mxu0 0.0
        %1471 = vmatpush2.msra.mxu0 0.0
        %1472 = vmatprep.subr.mxu0 0.0
        %1473 = vmatpush2.msra.mxu0 0.0
        %1474 = vmatprep.subr.mxu0 0.0
        %1475 = vmatpush2.msra.mxu0 0.0
        %1476 = vmatprep.subr.mxu0 0.0
        %1477 = vmatpush2.msra.mxu0 0.0
        %1478 = vmatprep.mubr.f32.mxu0 0.0
        %1479 = vmatmul.mubr.f32.gmra.mxu0 %v577
        %v1480 = vpop.f32.mrf.mxu0
        %v1481 = vadd.f32 %v1397, %v1480
        %v1482 = vpop.f32.mrf.mxu0
        %1483 = vdwg.mxu0
        %1484 = vmatprep.subr.mxu0 0.0
        %1485 = vmatpush1.msra.mxu0 %v1353
        %1486 = vmatprep.subr.mxu0 0.0
        %1487 = vmatpush1.msra.mxu0 %v1352
        %1488 = vmatprep.subr.mxu0 0.0
        %1489 = vmatpush1.msra.mxu0 %v1351
        %1490 = vmatprep.subr.mxu0 0.0
        %1491 = vmatpush1.msra.mxu0 %v1350
        %1492 = vmatprep.subr.mxu0 0.0
        %1493 = vmatpush1.msra.mxu0 %v1349
        %1494 = vmatprep.subr.mxu0 0.0
        %1495 = vmatpush1.msra.mxu0 %v1348
        %1496 = vmatprep.subr.mxu0 0.0
        %1497 = vmatpush1.msra.mxu0 %v1347
        %1498 = vmatprep.subr.mxu0 0.0
        %1499 = vmatpush1.msra.mxu0 %v1346
        %1500 = vmatprep.subr.mxu0 0.0
        %1501 = vmatpush1.msra.mxu0 %v1345
        %1502 = vmatprep.subr.mxu0 0.0
        %1503 = vmatpush1.msra.mxu0 %v1344
        %1504 = vmatprep.subr.mxu0 0.0
        %1505 = vmatpush1.msra.mxu0 %v1343
        %1506 = vmatprep.subr.mxu0 0.0
        %1507 = vmatpush1.msra.mxu0 %v1342
        %1508 = vmatprep.subr.mxu0 0.0
        %1509 = vmatpush1.msra.mxu0 %v1341
        %1510 = vmatprep.subr.mxu0 0.0
        %1511 = vmatpush1.msra.mxu0 %v1340
        %1512 = vmatprep.subr.mxu0 0.0
        %1513 = vmatpush1.msra.mxu0 %v1339
        %1514 = vmatprep.subr.mxu0 0.0
        %1515 = vmatpush1.msra.mxu0 %v1338
        %1516 = vmatprep.subr.mxu0 0.0
        %1517 = vmatpush2.msra.mxu0 0.0
        %1518 = vmatprep.subr.mxu0 0.0
        %1519 = vmatpush2.msra.mxu0 0.0
        %1520 = vmatprep.subr.mxu0 0.0
        %1521 = vmatpush2.msra.mxu0 0.0
        %1522 = vmatprep.subr.mxu0 0.0
        %1523 = vmatpush2.msra.mxu0 0.0
        %1524 = vmatprep.subr.mxu0 0.0
        %1525 = vmatpush2.msra.mxu0 0.0
        %1526 = vmatprep.subr.mxu0 0.0
        %1527 = vmatpush2.msra.mxu0 0.0
        %1528 = vmatprep.subr.mxu0 0.0
        %1529 = vmatpush2.msra.mxu0 0.0
        %1530 = vmatprep.subr.mxu0 0.0
        %1531 = vmatpush2.msra.mxu0 0.0
        %1532 = vmatprep.subr.mxu0 0.0
        %1533 = vmatpush2.msra.mxu0 0.0
        %1534 = vmatprep.subr.mxu0 0.0
        %1535 = vmatpush2.msra.mxu0 0.0
        %1536 = vmatprep.subr.mxu0 0.0
        %1537 = vmatpush2.msra.mxu0 0.0
        %1538 = vmatprep.subr.mxu0 0.0
        %1539 = vmatpush2.msra.mxu0 0.0
        %1540 = vmatprep.subr.mxu0 0.0
        %1541 = vmatpush2.msra.mxu0 0.0
        %1542 = vmatprep.subr.mxu0 0.0
        %1543 = vmatpush2.msra.mxu0 0.0
        %1544 = vmatprep.subr.mxu0 0.0
        %1545 = vmatpush2.msra.mxu0 0.0
        %1546 = vmatprep.subr.mxu0 0.0
        %1547 = vmatpush2.msra.mxu0 0.0
        %1548 = vmatprep.mubr.f32.mxu0 0.0
        %1549 = vmatmul.mubr.f32.gmra.mxu0 %v577
        %v1550 = vpop.f32.mrf.mxu0
        %v1551 = vadd.f32 %v1401, %v1550
        %v1552 = vpop.f32.mrf.mxu0
        %1553 = vdwg.mxu0
        %1554 = vmatprep.subr.mxu0 0.0
        %1555 = vmatpush1.msra.mxu0 %v1369
        %1556 = vmatprep.subr.mxu0 0.0
        %1557 = vmatpush1.msra.mxu0 %v1368
        %1558 = vmatprep.subr.mxu0 0.0
        %1559 = vmatpush1.msra.mxu0 %v1367
        %1560 = vmatprep.subr.mxu0 0.0
        %1561 = vmatpush1.msra.mxu0 %v1366
        %1562 = vmatprep.subr.mxu0 0.0
        %1563 = vmatpush1.msra.mxu0 %v1365
        %1564 = vmatprep.subr.mxu0 0.0
        %1565 = vmatpush1.msra.mxu0 %v1364
        %1566 = vmatprep.subr.mxu0 0.0
        %1567 = vmatpush1.msra.mxu0 %v1363
        %1568 = vmatprep.subr.mxu0 0.0
        %1569 = vmatpush1.msra.mxu0 %v1362
        %1570 = vmatprep.subr.mxu0 0.0
        %1571 = vmatpush1.msra.mxu0 %v1361
        %1572 = vmatprep.subr.mxu0 0.0
        %1573 = vmatpush1.msra.mxu0 %v1360
        %1574 = vmatprep.subr.mxu0 0.0
        %1575 = vmatpush1.msra.mxu0 %v1359
        %1576 = vmatprep.subr.mxu0 0.0
        %1577 = vmatpush1.msra.mxu0 %v1358
        %1578 = vmatprep.subr.mxu0 0.0
        %1579 = vmatpush1.msra.mxu0 %v1357
        %1580 = vmatprep.subr.mxu0 0.0
        %1581 = vmatpush1.msra.mxu0 %v1356
        %1582 = vmatprep.subr.mxu0 0.0
        %1583 = vmatpush1.msra.mxu0 %v1355
        %1584 = vmatprep.subr.mxu0 0.0
        %1585 = vmatpush1.msra.mxu0 %v1354
        %1586 = vmatprep.subr.mxu0 0.0
        %1587 = vmatpush2.msra.mxu0 0.0
        %1588 = vmatprep.subr.mxu0 0.0
        %1589 = vmatpush2.msra.mxu0 0.0
        %1590 = vmatprep.subr.mxu0 0.0
        %1591 = vmatpush2.msra.mxu0 0.0
        %1592 = vmatprep.subr.mxu0 0.0
        %1593 = vmatpush2.msra.mxu0 0.0
        %1594 = vmatprep.subr.mxu0 0.0
        %1595 = vmatpush2.msra.mxu0 0.0
        %1596 = vmatprep.subr.mxu0 0.0
        %1597 = vmatpush2.msra.mxu0 0.0
        %1598 = vmatprep.subr.mxu0 0.0
        %1599 = vmatpush2.msra.mxu0 0.0
        %1600 = vmatprep.subr.mxu0 0.0
        %1601 = vmatpush2.msra.mxu0 0.0
        %1602 = vmatprep.subr.mxu0 0.0
        %1603 = vmatpush2.msra.mxu0 0.0
        %1604 = vmatprep.subr.mxu0 0.0
        %1605 = vmatpush2.msra.mxu0 0.0
        %1606 = vmatprep.subr.mxu0 0.0
        %1607 = vmatpush2.msra.mxu0 0.0
        %1608 = vmatprep.subr.mxu0 0.0
        %1609 = vmatpush2.msra.mxu0 0.0
        %1610 = vmatprep.subr.mxu0 0.0
        %1611 = vmatpush2.msra.mxu0 0.0
        %1612 = vmatprep.subr.mxu0 0.0
        %1613 = vmatpush2.msra.mxu0 0.0
        %1614 = vmatprep.subr.mxu0 0.0
        %1615 = vmatpush2.msra.mxu0 0.0
        %1616 = vmatprep.subr.mxu0 0.0
        %1617 = vmatpush2.msra.mxu0 0.0
        %1618 = vmatprep.mubr.f32.mxu0 0.0
        %1619 = vmatmul.mubr.f32.gmra.mxu0 %v577
        %v1620 = vpop.f32.mrf.mxu0
        %v1621 = vadd.f32 %v1405, %v1620
        %v1622 = vpop.f32.mrf.mxu0
        %1623 = vdwg.mxu0
        %1624 = vmatprep.subr.mxu0 0.0
        %1625 = vmatpush1.msra.mxu0 %v1385
        %1626 = vmatprep.subr.mxu0 0.0
        %1627 = vmatpush1.msra.mxu0 %v1384
        %1628 = vmatprep.subr.mxu0 0.0
        %1629 = vmatpush1.msra.mxu0 %v1383
        %1630 = vmatprep.subr.mxu0 0.0
        %1631 = vmatpush1.msra.mxu0 %v1382
        %1632 = vmatprep.subr.mxu0 0.0
        %1633 = vmatpush1.msra.mxu0 %v1381
        %1634 = vmatprep.subr.mxu0 0.0
        %1635 = vmatpush1.msra.mxu0 %v1380
        %1636 = vmatprep.subr.mxu0 0.0
        %1637 = vmatpush1.msra.mxu0 %v1379
        %1638 = vmatprep.subr.mxu0 0.0
        %1639 = vmatpush1.msra.mxu0 %v1378
        %1640 = vmatprep.subr.mxu0 0.0
        %1641 = vmatpush1.msra.mxu0 %v1377
        %1642 = vmatprep.subr.mxu0 0.0
        %1643 = vmatpush1.msra.mxu0 %v1376
        %1644 = vmatprep.subr.mxu0 0.0
        %1645 = vmatpush1.msra.mxu0 %v1375
        %1646 = vmatprep.subr.mxu0 0.0
        %1647 = vmatpush1.msra.mxu0 %v1374
        %1648 = vmatprep.subr.mxu0 0.0
        %1649 = vmatpush1.msra.mxu0 %v1373
        %1650 = vmatprep.subr.mxu0 0.0
        %1651 = vmatpush1.msra.mxu0 %v1372
        %1652 = vmatprep.subr.mxu0 0.0
        %1653 = vmatpush1.msra.mxu0 %v1371
        %1654 = vmatprep.subr.mxu0 0.0
        %1655 = vmatpush1.msra.mxu0 %v1370
        %1656 = vmatprep.subr.mxu0 0.0
        %1657 = vmatpush2.msra.mxu0 0.0
        %1658 = vmatprep.subr.mxu0 0.0
        %1659 = vmatpush2.msra.mxu0 0.0
        %1660 = vmatprep.subr.mxu0 0.0
        %1661 = vmatpush2.msra.mxu0 0.0
        %1662 = vmatprep.subr.mxu0 0.0
        %1663 = vmatpush2.msra.mxu0 0.0
        %1664 = vmatprep.subr.mxu0 0.0
        %1665 = vmatpush2.msra.mxu0 0.0
        %1666 = vmatprep.subr.mxu0 0.0
        %1667 = vmatpush2.msra.mxu0 0.0
        %1668 = vmatprep.subr.mxu0 0.0
        %1669 = vmatpush2.msra.mxu0 0.0
        %1670 = vmatprep.subr.mxu0 0.0
        %1671 = vmatpush2.msra.mxu0 0.0
        %1672 = vmatprep.subr.mxu0 0.0
        %1673 = vmatpush2.msra.mxu0 0.0
        %1674 = vmatprep.subr.mxu0 0.0
        %1675 = vmatpush2.msra.mxu0 0.0
        %1676 = vmatprep.subr.mxu0 0.0
        %1677 = vmatpush2.msra.mxu0 0.0
        %1678 = vmatprep.subr.mxu0 0.0
        %1679 = vmatpush2.msra.mxu0 0.0
        %1680 = vmatprep.subr.mxu0 0.0
        %1681 = vmatpush2.msra.mxu0 0.0
        %1682 = vmatprep.subr.mxu0 0.0
        %1683 = vmatpush2.msra.mxu0 0.0
        %1684 = vmatprep.subr.mxu0 0.0
        %1685 = vmatpush2.msra.mxu0 0.0
        %1686 = vmatprep.subr.mxu0 0.0
        %1687 = vmatpush2.msra.mxu0 0.0
        %1688 = vmatprep.mubr.f32.mxu0 0.0
        %1689 = vmatmul.mubr.f32.gmra.mxu0 %v577
        %v1690 = vpop.f32.mrf.mxu0
        %v1691 = vadd.f32 %v1409, %v1690
        %v1692 = vpop.f32.mrf.mxu0
        %1693 = vdwg.mxu0
        %vm1694 = vcmask 64512
        %v1696 = vsel %vm1694, %v737, 0
        %v1699 = vsel %vm1694, %v1109, 0
        %1701 = vmatprep.subr.mxu0 0.0
        %1702 = vmatpush1.xpose.msra.mxu0 0.0
        %1703 = vmatprep.subr.mxu0 0.0
        %1704 = vmatpush1.xpose.msra.mxu0 0.0
        %1705 = vmatprep.subr.mxu0 0.0
        %1706 = vmatpush1.xpose.msra.mxu0 0.0
        %1707 = vmatprep.subr.mxu0 0.0
        %1708 = vmatpush1.xpose.msra.mxu0 0.0
        %1709 = vmatprep.subr.mxu0 0.0
        %1710 = vmatpush1.xpose.msra.mxu0 0.0
        %1711 = vmatprep.subr.mxu0 0.0
        %1712 = vmatpush1.xpose.msra.mxu0 0.0
        %1713 = vmatprep.subr.mxu0 0.0
        %1714 = vmatpush1.xpose.msra.mxu0 0.0
        %1715 = vmatprep.subr.mxu0 0.0
        %1716 = vmatpush1.xpose.msra.mxu0 0.0
        %1717 = vmatprep.subr.mxu0 0.0
        %1718 = vmatpush1.xpose.msra.mxu0 0.0
        %1719 = vmatprep.subr.mxu0 0.0
        %1720 = vmatpush1.xpose.msra.mxu0 0.0
        %1721 = vmatprep.subr.mxu0 0.0
        %1722 = vmatpush1.xpose.msra.mxu0 0.0
        %1723 = vmatprep.subr.mxu0 0.0
        %1724 = vmatpush1.xpose.msra.mxu0 0.0
        %1725 = vmatprep.subr.mxu0 0.0
        %1726 = vmatpush1.xpose.msra.mxu0 0.0
        %1727 = vmatprep.subr.mxu0 0.0
        %1728 = vmatpush1.xpose.msra.mxu0 0.0
        %1729 = vmatprep.subr.mxu0 0.0
        %1730 = vmatpush1.xpose.msra.mxu0 0.0
        %1731 = vmatprep.subr.mxu0 0.0
        %1732 = vmatpush1.xpose.msra.mxu0 %v1699
        %1733 = vmatprep.subr.mxu0 0.0
        %1734 = vmatpush2.xpose.msra.mxu0 0.0
        %1735 = vmatprep.subr.mxu0 0.0
        %1736 = vmatpush2.xpose.msra.mxu0 0.0
        %1737 = vmatprep.subr.mxu0 0.0
        %1738 = vmatpush2.xpose.msra.mxu0 0.0
        %1739 = vmatprep.subr.mxu0 0.0
        %1740 = vmatpush2.xpose.msra.mxu0 0.0
        %1741 = vmatprep.subr.mxu0 0.0
        %1742 = vmatpush2.xpose.msra.mxu0 0.0
        %1743 = vmatprep.subr.mxu0 0.0
        %1744 = vmatpush2.xpose.msra.mxu0 0.0
        %1745 = vmatprep.subr.mxu0 0.0
        %1746 = vmatpush2.xpose.msra.mxu0 0.0
        %1747 = vmatprep.subr.mxu0 0.0
        %1748 = vmatpush2.xpose.msra.mxu0 0.0
        %1749 = vmatprep.subr.mxu0 0.0
        %1750 = vmatpush2.xpose.msra.mxu0 0.0
        %1751 = vmatprep.subr.mxu0 0.0
        %1752 = vmatpush2.xpose.msra.mxu0 0.0
        %1753 = vmatprep.subr.mxu0 0.0
        %1754 = vmatpush2.xpose.msra.mxu0 0.0
        %1755 = vmatprep.subr.mxu0 0.0
        %1756 = vmatpush2.xpose.msra.mxu0 0.0
        %1757 = vmatprep.subr.mxu0 0.0
        %1758 = vmatpush2.xpose.msra.mxu0 0.0
        %1759 = vmatprep.subr.mxu0 0.0
        %1760 = vmatpush2.xpose.msra.mxu0 0.0
        %1761 = vmatprep.subr.mxu0 0.0
        %1762 = vmatpush2.xpose.msra.mxu0 0.0
        %1763 = vmatprep.subr.mxu0 0.0
        %1764 = vmatpush2.xpose.msra.mxu0 0.0
        %1765 = vmatprep.mubr.f32.mxu0 0.0
        %1766 = vmatmul.mubr.f32.gmra.mxu0 %v1696
        %v1767 = vpop.f32.mrf.mxu0
        %v1768 = vadd.f32 0.0, %v1767
        %v1769 = vpop.f32.mrf.mxu0
        %1770 = vdwg.mxu0
        %v1772 = vsel %vm1694, %v807, 0
        %v1775 = vsel %vm1694, %v1179, 0
        %1777 = vmatprep.subr.mxu0 0.0
        %1778 = vmatpush1.xpose.msra.mxu0 0.0
        %1779 = vmatprep.subr.mxu0 0.0
        %1780 = vmatpush1.xpose.msra.mxu0 0.0
        %1781 = vmatprep.subr.mxu0 0.0
        %1782 = vmatpush1.xpose.msra.mxu0 0.0
        %1783 = vmatprep.subr.mxu0 0.0
        %1784 = vmatpush1.xpose.msra.mxu0 0.0
        %1785 = vmatprep.subr.mxu0 0.0
        %1786 = vmatpush1.xpose.msra.mxu0 0.0
        %1787 = vmatprep.subr.mxu0 0.0
        %1788 = vmatpush1.xpose.msra.mxu0 0.0
        %1789 = vmatprep.subr.mxu0 0.0
        %1790 = vmatpush1.xpose.msra.mxu0 0.0
        %1791 = vmatprep.subr.mxu0 0.0
        %1792 = vmatpush1.xpose.msra.mxu0 0.0
        %1793 = vmatprep.subr.mxu0 0.0
        %1794 = vmatpush1.xpose.msra.mxu0 0.0
        %1795 = vmatprep.subr.mxu0 0.0
        %1796 = vmatpush1.xpose.msra.mxu0 0.0
        %1797 = vmatprep.subr.mxu0 0.0
        %1798 = vmatpush1.xpose.msra.mxu0 0.0
        %1799 = vmatprep.subr.mxu0 0.0
        %1800 = vmatpush1.xpose.msra.mxu0 0.0
        %1801 = vmatprep.subr.mxu0 0.0
        %1802 = vmatpush1.xpose.msra.mxu0 0.0
        %1803 = vmatprep.subr.mxu0 0.0
        %1804 = vmatpush1.xpose.msra.mxu0 0.0
        %1805 = vmatprep.subr.mxu0 0.0
        %1806 = vmatpush1.xpose.msra.mxu0 0.0
        %1807 = vmatprep.subr.mxu0 0.0
        %1808 = vmatpush1.xpose.msra.mxu0 %v1775
        %1809 = vmatprep.subr.mxu0 0.0
        %1810 = vmatpush2.xpose.msra.mxu0 0.0
        %1811 = vmatprep.subr.mxu0 0.0
        %1812 = vmatpush2.xpose.msra.mxu0 0.0
        %1813 = vmatprep.subr.mxu0 0.0
        %1814 = vmatpush2.xpose.msra.mxu0 0.0
        %1815 = vmatprep.subr.mxu0 0.0
        %1816 = vmatpush2.xpose.msra.mxu0 0.0
        %1817 = vmatprep.subr.mxu0 0.0
        %1818 = vmatpush2.xpose.msra.mxu0 0.0
        %1819 = vmatprep.subr.mxu0 0.0
        %1820 = vmatpush2.xpose.msra.mxu0 0.0
        %1821 = vmatprep.subr.mxu0 0.0
        %1822 = vmatpush2.xpose.msra.mxu0 0.0
        %1823 = vmatprep.subr.mxu0 0.0
        %1824 = vmatpush2.xpose.msra.mxu0 0.0
        %1825 = vmatprep.subr.mxu0 0.0
        %1826 = vmatpush2.xpose.msra.mxu0 0.0
        %1827 = vmatprep.subr.mxu0 0.0
        %1828 = vmatpush2.xpose.msra.mxu0 0.0
        %1829 = vmatprep.subr.mxu0 0.0
        %1830 = vmatpush2.xpose.msra.mxu0 0.0
        %1831 = vmatprep.subr.mxu0 0.0
        %1832 = vmatpush2.xpose.msra.mxu0 0.0
        %1833 = vmatprep.subr.mxu0 0.0
        %1834 = vmatpush2.xpose.msra.mxu0 0.0
        %1835 = vmatprep.subr.mxu0 0.0
        %1836 = vmatpush2.xpose.msra.mxu0 0.0
        %1837 = vmatprep.subr.mxu0 0.0
        %1838 = vmatpush2.xpose.msra.mxu0 0.0
        %1839 = vmatprep.subr.mxu0 0.0
        %1840 = vmatpush2.xpose.msra.mxu0 0.0
        %1841 = vmatprep.mubr.f32.mxu0 0.0
        %1842 = vmatmul.mubr.f32.gmra.mxu0 %v1772
        %v1843 = vpop.f32.mrf.mxu0
        %v1844 = vadd.f32 0.0, %v1843
        %v1845 = vpop.f32.mrf.mxu0
        %1846 = vdwg.mxu0
        %v1848 = vsel %vm1694, %v877, 0
        %v1851 = vsel %vm1694, %v1249, 0
        %1853 = vmatprep.subr.mxu0 0.0
        %1854 = vmatpush1.xpose.msra.mxu0 0.0
        %1855 = vmatprep.subr.mxu0 0.0
        %1856 = vmatpush1.xpose.msra.mxu0 0.0
        %1857 = vmatprep.subr.mxu0 0.0
        %1858 = vmatpush1.xpose.msra.mxu0 0.0
        %1859 = vmatprep.subr.mxu0 0.0
        %1860 = vmatpush1.xpose.msra.mxu0 0.0
        %1861 = vmatprep.subr.mxu0 0.0
        %1862 = vmatpush1.xpose.msra.mxu0 0.0
        %1863 = vmatprep.subr.mxu0 0.0
        %1864 = vmatpush1.xpose.msra.mxu0 0.0
        %1865 = vmatprep.subr.mxu0 0.0
        %1866 = vmatpush1.xpose.msra.mxu0 0.0
        %1867 = vmatprep.subr.mxu0 0.0
        %1868 = vmatpush1.xpose.msra.mxu0 0.0
        %1869 = vmatprep.subr.mxu0 0.0
        %1870 = vmatpush1.xpose.msra.mxu0 0.0
        %1871 = vmatprep.subr.mxu0 0.0
        %1872 = vmatpush1.xpose.msra.mxu0 0.0
        %1873 = vmatprep.subr.mxu0 0.0
        %1874 = vmatpush1.xpose.msra.mxu0 0.0
        %1875 = vmatprep.subr.mxu0 0.0
        %1876 = vmatpush1.xpose.msra.mxu0 0.0
        %1877 = vmatprep.subr.mxu0 0.0
        %1878 = vmatpush1.xpose.msra.mxu0 0.0
        %1879 = vmatprep.subr.mxu0 0.0
        %1880 = vmatpush1.xpose.msra.mxu0 0.0
        %1881 = vmatprep.subr.mxu0 0.0
        %1882 = vmatpush1.xpose.msra.mxu0 0.0
        %1883 = vmatprep.subr.mxu0 0.0
        %1884 = vmatpush1.xpose.msra.mxu0 %v1851
        %1885 = vmatprep.subr.mxu0 0.0
        %1886 = vmatpush2.xpose.msra.mxu0 0.0
        %1887 = vmatprep.subr.mxu0 0.0
        %1888 = vmatpush2.xpose.msra.mxu0 0.0
        %1889 = vmatprep.subr.mxu0 0.0
        %1890 = vmatpush2.xpose.msra.mxu0 0.0
        %1891 = vmatprep.subr.mxu0 0.0
        %1892 = vmatpush2.xpose.msra.mxu0 0.0
        %1893 = vmatprep.subr.mxu0 0.0
        %1894 = vmatpush2.xpose.msra.mxu0 0.0
        %1895 = vmatprep.subr.mxu0 0.0
        %1896 = vmatpush2.xpose.msra.mxu0 0.0
        %1897 = vmatprep.subr.mxu0 0.0
        %1898 = vmatpush2.xpose.msra.mxu0 0.0
        %1899 = vmatprep.subr.mxu0 0.0
        %1900 = vmatpush2.xpose.msra.mxu0 0.0
        %1901 = vmatprep.subr.mxu0 0.0
        %1902 = vmatpush2.xpose.msra.mxu0 0.0
        %1903 = vmatprep.subr.mxu0 0.0
        %1904 = vmatpush2.xpose.msra.mxu0 0.0
        %1905 = vmatprep.subr.mxu0 0.0
        %1906 = vmatpush2.xpose.msra.mxu0 0.0
        %1907 = vmatprep.subr.mxu0 0.0
        %1908 = vmatpush2.xpose.msra.mxu0 0.0
        %1909 = vmatprep.subr.mxu0 0.0
        %1910 = vmatpush2.xpose.msra.mxu0 0.0
        %1911 = vmatprep.subr.mxu0 0.0
        %1912 = vmatpush2.xpose.msra.mxu0 0.0
        %1913 = vmatprep.subr.mxu0 0.0
        %1914 = vmatpush2.xpose.msra.mxu0 0.0
        %1915 = vmatprep.subr.mxu0 0.0
        %1916 = vmatpush2.xpose.msra.mxu0 0.0
        %1917 = vmatprep.mubr.f32.mxu0 0.0
        %1918 = vmatmul.mubr.f32.gmra.mxu0 %v1848
        %v1919 = vpop.f32.mrf.mxu0
        %v1920 = vadd.f32 0.0, %v1919
        %v1921 = vpop.f32.mrf.mxu0
        %1922 = vdwg.mxu0
        %v1924 = vsel %vm1694, %v947, 0
        %v1927 = vsel %vm1694, %v1319, 0
        %1929 = vmatprep.subr.mxu0 0.0
        %1930 = vmatpush1.xpose.msra.mxu0 0.0
        %1931 = vmatprep.subr.mxu0 0.0
        %1932 = vmatpush1.xpose.msra.mxu0 0.0
        %1933 = vmatprep.subr.mxu0 0.0
        %1934 = vmatpush1.xpose.msra.mxu0 0.0
        %1935 = vmatprep.subr.mxu0 0.0
        %1936 = vmatpush1.xpose.msra.mxu0 0.0
        %1937 = vmatprep.subr.mxu0 0.0
        %1938 = vmatpush1.xpose.msra.mxu0 0.0
        %1939 = vmatprep.subr.mxu0 0.0
        %1940 = vmatpush1.xpose.msra.mxu0 0.0
        %1941 = vmatprep.subr.mxu0 0.0
        %1942 = vmatpush1.xpose.msra.mxu0 0.0
        %1943 = vmatprep.subr.mxu0 0.0
        %1944 = vmatpush1.xpose.msra.mxu0 0.0
        %1945 = vmatprep.subr.mxu0 0.0
        %1946 = vmatpush1.xpose.msra.mxu0 0.0
        %1947 = vmatprep.subr.mxu0 0.0
        %1948 = vmatpush1.xpose.msra.mxu0 0.0
        %1949 = vmatprep.subr.mxu0 0.0
        %1950 = vmatpush1.xpose.msra.mxu0 0.0
        %1951 = vmatprep.subr.mxu0 0.0
        %1952 = vmatpush1.xpose.msra.mxu0 0.0
        %1953 = vmatprep.subr.mxu0 0.0
        %1954 = vmatpush1.xpose.msra.mxu0 0.0
        %1955 = vmatprep.subr.mxu0 0.0
        %1956 = vmatpush1.xpose.msra.mxu0 0.0
        %1957 = vmatprep.subr.mxu0 0.0
        %1958 = vmatpush1.xpose.msra.mxu0 0.0
        %1959 = vmatprep.subr.mxu0 0.0
        %1960 = vmatpush1.xpose.msra.mxu0 %v1927
        %1961 = vmatprep.subr.mxu0 0.0
        %1962 = vmatpush2.xpose.msra.mxu0 0.0
        %1963 = vmatprep.subr.mxu0 0.0
        %1964 = vmatpush2.xpose.msra.mxu0 0.0
        %1965 = vmatprep.subr.mxu0 0.0
        %1966 = vmatpush2.xpose.msra.mxu0 0.0
        %1967 = vmatprep.subr.mxu0 0.0
        %1968 = vmatpush2.xpose.msra.mxu0 0.0
        %1969 = vmatprep.subr.mxu0 0.0
        %1970 = vmatpush2.xpose.msra.mxu0 0.0
        %1971 = vmatprep.subr.mxu0 0.0
        %1972 = vmatpush2.xpose.msra.mxu0 0.0
        %1973 = vmatprep.subr.mxu0 0.0
        %1974 = vmatpush2.xpose.msra.mxu0 0.0
        %1975 = vmatprep.subr.mxu0 0.0
        %1976 = vmatpush2.xpose.msra.mxu0 0.0
        %1977 = vmatprep.subr.mxu0 0.0
        %1978 = vmatpush2.xpose.msra.mxu0 0.0
        %1979 = vmatprep.subr.mxu0 0.0
        %1980 = vmatpush2.xpose.msra.mxu0 0.0
        %1981 = vmatprep.subr.mxu0 0.0
        %1982 = vmatpush2.xpose.msra.mxu0 0.0
        %1983 = vmatprep.subr.mxu0 0.0
        %1984 = vmatpush2.xpose.msra.mxu0 0.0
        %1985 = vmatprep.subr.mxu0 0.0
        %1986 = vmatpush2.xpose.msra.mxu0 0.0
        %1987 = vmatprep.subr.mxu0 0.0
        %1988 = vmatpush2.xpose.msra.mxu0 0.0
        %1989 = vmatprep.subr.mxu0 0.0
        %1990 = vmatpush2.xpose.msra.mxu0 0.0
        %1991 = vmatprep.subr.mxu0 0.0
        %1992 = vmatpush2.xpose.msra.mxu0 0.0
        %1993 = vmatprep.mubr.f32.mxu0 0.0
        %1994 = vmatmul.mubr.f32.gmra.mxu0 %v1924
        %v1995 = vpop.f32.mrf.mxu0
        %v1996 = vadd.f32 0.0, %v1995
        %v1997 = vpop.f32.mrf.mxu0
        %1998 = vdwg.mxu0
        %v1999 = vsel %vm1694, %v1768, -inf
        %2000 = vmax.xlane.f32.xlu0 %v1999
        %v2001 = vpop.xlane.xlu0 %2000
        %v2002 = vsel %vm1694, %v1844, -inf
        %2003 = vmax.xlane.f32.xlu0 %v2002
        %v2004 = vpop.xlane.xlu0 %2003
        %v2005 = vsel %vm1694, %v1920, -inf
        %2006 = vmax.xlane.f32.xlu0 %v2005
        %v2007 = vpop.xlane.xlu0 %2006
        %v2008 = vsel %vm1694, %v1996, -inf
        %2009 = vmax.xlane.f32.xlu0 %v2008
        %v2010 = vpop.xlane.xlu0 %2009
        %v2011 = vsub.f32 %v1768, %v2001
        %v2012 = vsub.f32 %v1844, %v2004
        %v2013 = vsub.f32 %v1920, %v2007
        %v2014 = vsub.f32 %v1996, %v2010
        %v2015 = vmul.f32 %v2011, 1.442695
        %v2016 = vpow.pop %v2015
        %v2017 = vmul.f32 %v2012, 1.442695
        %v2018 = vpow.pop %v2017
        %v2019 = vmul.f32 %v2013, 1.442695
        %v2020 = vpow.pop %v2019
        %v2021 = vmul.f32 %v2014, 1.442695
        %v2022 = vpow.pop %v2021
        %v2023 = vsel %vm1694, %v2016, 0.0
        %2024 = vadd.xlane.f32.xlu0 %v2023
        %v2025 = vpop.xlane.xlu0 %2024
        %v2026 = vsel %vm1694, %v2018, 0.0
        %2027 = vadd.xlane.f32.xlu0 %v2026
        %v2028 = vpop.xlane.xlu0 %2027
        %v2029 = vsel %vm1694, %v2020, 0.0
        %2030 = vadd.xlane.f32.xlu0 %v2029
        %v2031 = vpop.xlane.xlu0 %2030
        %v2032 = vsel %vm1694, %v2022, 0.0
        %2033 = vadd.xlane.f32.xlu0 %v2032
        %v2034 = vpop.xlane.xlu0 %2033
        %v2035 = vrcp.pop %v2025
        %v2036 = vrcp.pop %v2028
        %v2037 = vrcp.pop %v2031
        %v2038 = vrcp.pop %v2034
        %v2039 = vmul.f32 %v2016, %v2035
        %v2040 = vmul.f32 %v2018, %v2036
        %v2041 = vmul.f32 %v2020, %v2037
        %v2042 = vmul.f32 %v2022, %v2038
        %v2044 = vsel %vm1694, %v2039, 0
        %2046 = vmatprep.subr.mxu0 0.0
        %2047 = vmatpush1.msra.mxu0 0.0
        %2048 = vmatprep.subr.mxu0 0.0
        %2049 = vmatpush1.msra.mxu0 0.0
        %2050 = vmatprep.subr.mxu0 0.0
        %2051 = vmatpush1.msra.mxu0 0.0
        %2052 = vmatprep.subr.mxu0 0.0
        %2053 = vmatpush1.msra.mxu0 0.0
        %2054 = vmatprep.subr.mxu0 0.0
        %2055 = vmatpush1.msra.mxu0 0.0
        %2056 = vmatprep.subr.mxu0 0.0
        %2057 = vmatpush1.msra.mxu0 0.0
        %2058 = vmatprep.subr.mxu0 0.0
        %2059 = vmatpush1.msra.mxu0 0.0
        %2060 = vmatprep.subr.mxu0 0.0
        %2061 = vmatpush1.msra.mxu0 0.0
        %2062 = vmatprep.subr.mxu0 0.0
        %2063 = vmatpush1.msra.mxu0 0.0
        %2064 = vmatprep.subr.mxu0 0.0
        %2065 = vmatpush1.msra.mxu0 0.0
        %2066 = vmatprep.subr.mxu0 0.0
        %2067 = vmatpush1.msra.mxu0 0.0
        %2068 = vmatprep.subr.mxu0 0.0
        %2069 = vmatpush1.msra.mxu0 0.0
        %2070 = vmatprep.subr.mxu0 0.0
        %2071 = vmatpush1.msra.mxu0 0.0
        %2072 = vmatprep.subr.mxu0 0.0
        %2073 = vmatpush1.msra.mxu0 0.0
        %2074 = vmatprep.subr.mxu0 0.0
        %2075 = vmatpush1.msra.mxu0 0.0
        %2076 = vmatprep.subr.mxu0 0.0
        %2077 = vmatpush1.msra.mxu0 %v1481
        %2078 = vmatprep.subr.mxu0 0.0
        %2079 = vmatpush2.msra.mxu0 0.0
        %2080 = vmatprep.subr.mxu0 0.0
        %2081 = vmatpush2.msra.mxu0 0.0
        %2082 = vmatprep.subr.mxu0 0.0
        %2083 = vmatpush2.msra.mxu0 0.0
        %2084 = vmatprep.subr.mxu0 0.0
        %2085 = vmatpush2.msra.mxu0 0.0
        %2086 = vmatprep.subr.mxu0 0.0
        %2087 = vmatpush2.msra.mxu0 0.0
        %2088 = vmatprep.subr.mxu0 0.0
        %2089 = vmatpush2.msra.mxu0 0.0
        %2090 = vmatprep.subr.mxu0 0.0
        %2091 = vmatpush2.msra.mxu0 0.0
        %2092 = vmatprep.subr.mxu0 0.0
        %2093 = vmatpush2.msra.mxu0 0.0
        %2094 = vmatprep.subr.mxu0 0.0
        %2095 = vmatpush2.msra.mxu0 0.0
        %2096 = vmatprep.subr.mxu0 0.0
        %2097 = vmatpush2.msra.mxu0 0.0
        %2098 = vmatprep.subr.mxu0 0.0
        %2099 = vmatpush2.msra.mxu0 0.0
        %2100 = vmatprep.subr.mxu0 0.0
        %2101 = vmatpush2.msra.mxu0 0.0
        %2102 = vmatprep.subr.mxu0 0.0
        %2103 = vmatpush2.msra.mxu0 0.0
        %2104 = vmatprep.subr.mxu0 0.0
        %2105 = vmatpush2.msra.mxu0 0.0
        %2106 = vmatprep.subr.mxu0 0.0
        %2107 = vmatpush2.msra.mxu0 0.0
        %2108 = vmatprep.subr.mxu0 0.0
        %2109 = vmatpush2.msra.mxu0 0.0
        %2110 = vmatprep.mubr.f32.mxu0 0.0
        %2111 = vmatmul.mubr.f32.gmra.mxu0 %v2044
        %v2112 = vpop.f32.mrf.mxu0
        %v2113 = vadd.f32 0.0, %v2112
        %v2114 = vpop.f32.mrf.mxu0
        %2115 = vdwg.mxu0
        %v2117 = vsel %vm1694, %v2040, 0
        %2119 = vmatprep.subr.mxu0 0.0
        %2120 = vmatpush1.msra.mxu0 0.0
        %2121 = vmatprep.subr.mxu0 0.0
        %2122 = vmatpush1.msra.mxu0 0.0
        %2123 = vmatprep.subr.mxu0 0.0
        %2124 = vmatpush1.msra.mxu0 0.0
        %2125 = vmatprep.subr.mxu0 0.0
        %2126 = vmatpush1.msra.mxu0 0.0
        %2127 = vmatprep.subr.mxu0 0.0
        %2128 = vmatpush1.msra.mxu0 0.0
        %2129 = vmatprep.subr.mxu0 0.0
        %2130 = vmatpush1.msra.mxu0 0.0
        %2131 = vmatprep.subr.mxu0 0.0
        %2132 = vmatpush1.msra.mxu0 0.0
        %2133 = vmatprep.subr.mxu0 0.0
        %2134 = vmatpush1.msra.mxu0 0.0
        %2135 = vmatprep.subr.mxu0 0.0
        %2136 = vmatpush1.msra.mxu0 0.0
        %2137 = vmatprep.subr.mxu0 0.0
        %2138 = vmatpush1.msra.mxu0 0.0
        %2139 = vmatprep.subr.mxu0 0.0
        %2140 = vmatpush1.msra.mxu0 0.0
        %2141 = vmatprep.subr.mxu0 0.0
        %2142 = vmatpush1.msra.mxu0 0.0
        %2143 = vmatprep.subr.mxu0 0.0
        %2144 = vmatpush1.msra.mxu0 0.0
        %2145 = vmatprep.subr.mxu0 0.0
        %2146 = vmatpush1.msra.mxu0 0.0
        %2147 = vmatprep.subr.mxu0 0.0
        %2148 = vmatpush1.msra.mxu0 0.0
        %2149 = vmatprep.subr.mxu0 0.0
        %2150 = vmatpush1.msra.mxu0 %v1551
        %2151 = vmatprep.subr.mxu0 0.0
        %2152 = vmatpush2.msra.mxu0 0.0
        %2153 = vmatprep.subr.mxu0 0.0
        %2154 = vmatpush2.msra.mxu0 0.0
        %2155 = vmatprep.subr.mxu0 0.0
        %2156 = vmatpush2.msra.mxu0 0.0
        %2157 = vmatprep.subr.mxu0 0.0
        %2158 = vmatpush2.msra.mxu0 0.0
        %2159 = vmatprep.subr.mxu0 0.0
        %2160 = vmatpush2.msra.mxu0 0.0
        %2161 = vmatprep.subr.mxu0 0.0
        %2162 = vmatpush2.msra.mxu0 0.0
        %2163 = vmatprep.subr.mxu0 0.0
        %2164 = vmatpush2.msra.mxu0 0.0
        %2165 = vmatprep.subr.mxu0 0.0
        %2166 = vmatpush2.msra.mxu0 0.0
        %2167 = vmatprep.subr.mxu0 0.0
        %2168 = vmatpush2.msra.mxu0 0.0
        %2169 = vmatprep.subr.mxu0 0.0
        %2170 = vmatpush2.msra.mxu0 0.0
        %2171 = vmatprep.subr.mxu0 0.0
        %2172 = vmatpush2.msra.mxu0 0.0
        %2173 = vmatprep.subr.mxu0 0.0
        %2174 = vmatpush2.msra.mxu0 0.0
        %2175 = vmatprep.subr.mxu0 0.0
        %2176 = vmatpush2.msra.mxu0 0.0
        %2177 = vmatprep.subr.mxu0 0.0
        %2178 = vmatpush2.msra.mxu0 0.0
        %2179 = vmatprep.subr.mxu0 0.0
        %2180 = vmatpush2.msra.mxu0 0.0
        %2181 = vmatprep.subr.mxu0 0.0
        %2182 = vmatpush2.msra.mxu0 0.0
        %2183 = vmatprep.mubr.f32.mxu0 0.0
        %2184 = vmatmul.mubr.f32.gmra.mxu0 %v2117
        %v2185 = vpop.f32.mrf.mxu0
        %v2186 = vadd.f32 0.0, %v2185
        %v2187 = vpop.f32.mrf.mxu0
        %2188 = vdwg.mxu0
        %v2190 = vsel %vm1694, %v2041, 0
        %2192 = vmatprep.subr.mxu0 0.0
        %2193 = vmatpush1.msra.mxu0 0.0
        %2194 = vmatprep.subr.mxu0 0.0
        %2195 = vmatpush1.msra.mxu0 0.0
        %2196 = vmatprep.subr.mxu0 0.0
        %2197 = vmatpush1.msra.mxu0 0.0
        %2198 = vmatprep.subr.mxu0 0.0
        %2199 = vmatpush1.msra.mxu0 0.0
        %2200 = vmatprep.subr.mxu0 0.0
        %2201 = vmatpush1.msra.mxu0 0.0
        %2202 = vmatprep.subr.mxu0 0.0
        %2203 = vmatpush1.msra.mxu0 0.0
        %2204 = vmatprep.subr.mxu0 0.0
        %2205 = vmatpush1.msra.mxu0 0.0
        %2206 = vmatprep.subr.mxu0 0.0
        %2207 = vmatpush1.msra.mxu0 0.0
        %2208 = vmatprep.subr.mxu0 0.0
        %2209 = vmatpush1.msra.mxu0 0.0
        %2210 = vmatprep.subr.mxu0 0.0
        %2211 = vmatpush1.msra.mxu0 0.0
        %2212 = vmatprep.subr.mxu0 0.0
        %2213 = vmatpush1.msra.mxu0 0.0
        %2214 = vmatprep.subr.mxu0 0.0
        %2215 = vmatpush1.msra.mxu0 0.0
        %2216 = vmatprep.subr.mxu0 0.0
        %2217 = vmatpush1.msra.mxu0 0.0
        %2218 = vmatprep.subr.mxu0 0.0
        %2219 = vmatpush1.msra.mxu0 0.0
        %2220 = vmatprep.subr.mxu0 0.0
        %2221 = vmatpush1.msra.mxu0 0.0
        %2222 = vmatprep.subr.mxu0 0.0
        %2223 = vmatpush1.msra.mxu0 %v1621
        %2224 = vmatprep.subr.mxu0 0.0
        %2225 = vmatpush2.msra.mxu0 0.0
        %2226 = vmatprep.subr.mxu0 0.0
        %2227 = vmatpush2.msra.mxu0 0.0
        %2228 = vmatprep.subr.mxu0 0.0
        %2229 = vmatpush2.msra.mxu0 0.0
        %2230 = vmatprep.subr.mxu0 0.0
        %2231 = vmatpush2.msra.mxu0 0.0
        %2232 = vmatprep.subr.mxu0 0.0
        %2233 = vmatpush2.msra.mxu0 0.0
        %2234 = vmatprep.subr.mxu0 0.0
        %2235 = vmatpush2.msra.mxu0 0.0
        %2236 = vmatprep.subr.mxu0 0.0
        %2237 = vmatpush2.msra.mxu0 0.0
        %2238 = vmatprep.subr.mxu0 0.0
        %2239 = vmatpush2.msra.mxu0 0.0
        %2240 = vmatprep.subr.mxu0 0.0
        %2241 = vmatpush2.msra.mxu0 0.0
        %2242 = vmatprep.subr.mxu0 0.0
        %2243 = vmatpush2.msra.mxu0 0.0
        %2244 = vmatprep.subr.mxu0 0.0
        %2245 = vmatpush2.msra.mxu0 0.0
        %2246 = vmatprep.subr.mxu0 0.0
        %2247 = vmatpush2.msra.mxu0 0.0
        %2248 = vmatprep.subr.mxu0 0.0
        %2249 = vmatpush2.msra.mxu0 0.0
        %2250 = vmatprep.subr.mxu0 0.0
        %2251 = vmatpush2.msra.mxu0 0.0
        %2252 = vmatprep.subr.mxu0 0.0
        %2253 = vmatpush2.msra.mxu0 0.0
        %2254 = vmatprep.subr.mxu0 0.0
        %2255 = vmatpush2.msra.mxu0 0.0
        %2256 = vmatprep.mubr.f32.mxu0 0.0
        %2257 = vmatmul.mubr.f32.gmra.mxu0 %v2190
        %v2258 = vpop.f32.mrf.mxu0
        %v2259 = vadd.f32 0.0, %v2258
        %v2260 = vpop.f32.mrf.mxu0
        %2261 = vdwg.mxu0
        %v2263 = vsel %vm1694, %v2042, 0
        %2265 = vmatprep.subr.mxu0 0.0
        %2266 = vmatpush1.msra.mxu0 0.0
        %2267 = vmatprep.subr.mxu0 0.0
        %2268 = vmatpush1.msra.mxu0 0.0
        %2269 = vmatprep.subr.mxu0 0.0
        %2270 = vmatpush1.msra.mxu0 0.0
        %2271 = vmatprep.subr.mxu0 0.0
        %2272 = vmatpush1.msra.mxu0 0.0
        %2273 = vmatprep.subr.mxu0 0.0
        %2274 = vmatpush1.msra.mxu0 0.0
        %2275 = vmatprep.subr.mxu0 0.0
        %2276 = vmatpush1.msra.mxu0 0.0
        %2277 = vmatprep.subr.mxu0 0.0
        %2278 = vmatpush1.msra.mxu0 0.0
        %2279 = vmatprep.subr.mxu0 0.0
        %2280 = vmatpush1.msra.mxu0 0.0
        %2281 = vmatprep.subr.mxu0 0.0
        %2282 = vmatpush1.msra.mxu0 0.0
        %2283 = vmatprep.subr.mxu0 0.0
        %2284 = vmatpush1.msra.mxu0 0.0
        %2285 = vmatprep.subr.mxu0 0.0
        %2286 = vmatpush1.msra.mxu0 0.0
        %2287 = vmatprep.subr.mxu0 0.0
        %2288 = vmatpush1.msra.mxu0 0.0
        %2289 = vmatprep.subr.mxu0 0.0
        %2290 = vmatpush1.msra.mxu0 0.0
        %2291 = vmatprep.subr.mxu0 0.0
        %2292 = vmatpush1.msra.mxu0 0.0
        %2293 = vmatprep.subr.mxu0 0.0
        %2294 = vmatpush1.msra.mxu0 0.0
        %2295 = vmatprep.subr.mxu0 0.0
        %2296 = vmatpush1.msra.mxu0 %v1691
        %2297 = vmatprep.subr.mxu0 0.0
        %2298 = vmatpush2.msra.mxu0 0.0
        %2299 = vmatprep.subr.mxu0 0.0
        %2300 = vmatpush2.msra.mxu0 0.0
        %2301 = vmatprep.subr.mxu0 0.0
        %2302 = vmatpush2.msra.mxu0 0.0
        %2303 = vmatprep.subr.mxu0 0.0
        %2304 = vmatpush2.msra.mxu0 0.0
        %2305 = vmatprep.subr.mxu0 0.0
        %2306 = vmatpush2.msra.mxu0 0.0
        %2307 = vmatprep.subr.mxu0 0.0
        %2308 = vmatpush2.msra.mxu0 0.0
        %2309 = vmatprep.subr.mxu0 0.0
        %2310 = vmatpush2.msra.mxu0 0.0
        %2311 = vmatprep.subr.mxu0 0.0
        %2312 = vmatpush2.msra.mxu0 0.0
        %2313 = vmatprep.subr.mxu0 0.0
        %2314 = vmatpush2.msra.mxu0 0.0
        %2315 = vmatprep.subr.mxu0 0.0
        %2316 = vmatpush2.msra.mxu0 0.0
        %2317 = vmatprep.subr.mxu0 0.0
        %2318 = vmatpush2.msra.mxu0 0.0
        %2319 = vmatprep.subr.mxu0 0.0
        %2320 = vmatpush2.msra.mxu0 0.0
        %2321 = vmatprep.subr.mxu0 0.0
        %2322 = vmatpush2.msra.mxu0 0.0
        %2323 = vmatprep.subr.mxu0 0.0
        %2324 = vmatpush2.msra.mxu0 0.0
        %2325 = vmatprep.subr.mxu0 0.0
        %2326 = vmatpush2.msra.mxu0 0.0
        %2327 = vmatprep.subr.mxu0 0.0
        %2328 = vmatpush2.msra.mxu0 0.0
        %2329 = vmatprep.mubr.f32.mxu0 0.0
        %2330 = vmatmul.mubr.f32.gmra.mxu0 %v2263
        %v2331 = vpop.f32.mrf.mxu0
        %v2332 = vadd.f32 0.0, %v2331
        %v2333 = vpop.f32.mrf.mxu0
        %2334 = vdwg.mxu0
        %v2335 = vld [vmem:[%s9] sm:$0xff]
        %v2336 = vld [vmem:[%s9 + $0x8] sm:$0xff]
        %v2337 = vld [vmem:[%s9 + $0x10] sm:$0xff]
        %v2338 = vld [vmem:[%s9 + $0x18] sm:$0xff]
        %v2340 = vsel %vm1694, %v2113, 0
        %2342 = vmatprep.subr.mxu0 0.0
        %2343 = vmatpush1.msra.mxu0 0.0
        %2344 = vmatprep.subr.mxu0 0.0
        %2345 = vmatpush1.msra.mxu0 0.0
        %2346 = vmatprep.subr.mxu0 0.0
        %2347 = vmatpush1.msra.mxu0 0.0
        %2348 = vmatprep.subr.mxu0 0.0
        %2349 = vmatpush1.msra.mxu0 0.0
        %2350 = vmatprep.subr.mxu0 0.0
        %2351 = vmatpush1.msra.mxu0 0.0
        %2352 = vmatprep.subr.mxu0 0.0
        %2353 = vmatpush1.msra.mxu0 0.0
        %2354 = vmatprep.subr.mxu0 0.0
        %2355 = vmatpush1.msra.mxu0 0.0
        %2356 = vmatprep.subr.mxu0 0.0
        %2357 = vmatpush1.msra.mxu0 0.0
        %2358 = vmatprep.subr.mxu0 0.0
        %2359 = vmatpush1.msra.mxu0 0.0
        %2360 = vmatprep.subr.mxu0 0.0
        %2361 = vmatpush1.msra.mxu0 0.0
        %2362 = vmatprep.subr.mxu0 0.0
        %2363 = vmatpush1.msra.mxu0 0.0
        %2364 = vmatprep.subr.mxu0 0.0
        %2365 = vmatpush1.msra.mxu0 0.0
        %2366 = vmatprep.subr.mxu0 0.0
        %2367 = vmatpush1.msra.mxu0 0.0
        %2368 = vmatprep.subr.mxu0 0.0
        %2369 = vmatpush1.msra.mxu0 0.0
        %2370 = vmatprep.subr.mxu0 0.0
        %2371 = vmatpush1.msra.mxu0 0.0
        %2372 = vmatprep.subr.mxu0 0.0
        %2373 = vmatpush1.msra.mxu0 %v2335
        %2374 = vmatprep.subr.mxu0 0.0
        %2375 = vmatpush2.msra.mxu0 0.0
        %2376 = vmatprep.subr.mxu0 0.0
        %2377 = vmatpush2.msra.mxu0 0.0
        %2378 = vmatprep.subr.mxu0 0.0
        %2379 = vmatpush2.msra.mxu0 0.0
        %2380 = vmatprep.subr.mxu0 0.0
        %2381 = vmatpush2.msra.mxu0 0.0
        %2382 = vmatprep.subr.mxu0 0.0
        %2383 = vmatpush2.msra.mxu0 0.0
        %2384 = vmatprep.subr.mxu0 0.0
        %2385 = vmatpush2.msra.mxu0 0.0
        %2386 = vmatprep.subr.mxu0 0.0
        %2387 = vmatpush2.msra.mxu0 0.0
        %2388 = vmatprep.subr.mxu0 0.0
        %2389 = vmatpush2.msra.mxu0 0.0
        %2390 = vmatprep.subr.mxu0 0.0
        %2391 = vmatpush2.msra.mxu0 0.0
        %2392 = vmatprep.subr.mxu0 0.0
        %2393 = vmatpush2.msra.mxu0 0.0
        %2394 = vmatprep.subr.mxu0 0.0
        %2395 = vmatpush2.msra.mxu0 0.0
        %2396 = vmatprep.subr.mxu0 0.0
        %2397 = vmatpush2.msra.mxu0 0.0
        %2398 = vmatprep.subr.mxu0 0.0
        %2399 = vmatpush2.msra.mxu0 0.0
        %2400 = vmatprep.subr.mxu0 0.0
        %2401 = vmatpush2.msra.mxu0 0.0
        %2402 = vmatprep.subr.mxu0 0.0
        %2403 = vmatpush2.msra.mxu0 0.0
        %2404 = vmatprep.subr.mxu0 0.0
        %2405 = vmatpush2.msra.mxu0 0.0
        %2406 = vmatprep.mubr.f32.mxu0 0.0
        %2407 = vmatmul.mubr.f32.gmra.mxu0 %v2340
        %v2408 = vpop.f32.mrf.mxu0
        %v2409 = vadd.f32 0.0, %v2408
        %v2410 = vpop.f32.mrf.mxu0
        %2411 = vdwg.mxu0
        %v2413 = vsel %vm1694, %v2186, 0
        %2415 = vmatprep.subr.mxu0 0.0
        %2416 = vmatpush1.msra.mxu0 0.0
        %2417 = vmatprep.subr.mxu0 0.0
        %2418 = vmatpush1.msra.mxu0 0.0
        %2419 = vmatprep.subr.mxu0 0.0
        %2420 = vmatpush1.msra.mxu0 0.0
        %2421 = vmatprep.subr.mxu0 0.0
        %2422 = vmatpush1.msra.mxu0 0.0
        %2423 = vmatprep.subr.mxu0 0.0
        %2424 = vmatpush1.msra.mxu0 0.0
        %2425 = vmatprep.subr.mxu0 0.0
        %2426 = vmatpush1.msra.mxu0 0.0
        %2427 = vmatprep.subr.mxu0 0.0
        %2428 = vmatpush1.msra.mxu0 0.0
        %2429 = vmatprep.subr.mxu0 0.0
        %2430 = vmatpush1.msra.mxu0 0.0
        %2431 = vmatprep.subr.mxu0 0.0
        %2432 = vmatpush1.msra.mxu0 0.0
        %2433 = vmatprep.subr.mxu0 0.0
        %2434 = vmatpush1.msra.mxu0 0.0
        %2435 = vmatprep.subr.mxu0 0.0
        %2436 = vmatpush1.msra.mxu0 0.0
        %2437 = vmatprep.subr.mxu0 0.0
        %2438 = vmatpush1.msra.mxu0 0.0
        %2439 = vmatprep.subr.mxu0 0.0
        %2440 = vmatpush1.msra.mxu0 0.0
        %2441 = vmatprep.subr.mxu0 0.0
        %2442 = vmatpush1.msra.mxu0 0.0
        %2443 = vmatprep.subr.mxu0 0.0
        %2444 = vmatpush1.msra.mxu0 0.0
        %2445 = vmatprep.subr.mxu0 0.0
        %2446 = vmatpush1.msra.mxu0 %v2336
        %2447 = vmatprep.subr.mxu0 0.0
        %2448 = vmatpush2.msra.mxu0 0.0
        %2449 = vmatprep.subr.mxu0 0.0
        %2450 = vmatpush2.msra.mxu0 0.0
        %2451 = vmatprep.subr.mxu0 0.0
        %2452 = vmatpush2.msra.mxu0 0.0
        %2453 = vmatprep.subr.mxu0 0.0
        %2454 = vmatpush2.msra.mxu0 0.0
        %2455 = vmatprep.subr.mxu0 0.0
        %2456 = vmatpush2.msra.mxu0 0.0
        %2457 = vmatprep.subr.mxu0 0.0
        %2458 = vmatpush2.msra.mxu0 0.0
        %2459 = vmatprep.subr.mxu0 0.0
        %2460 = vmatpush2.msra.mxu0 0.0
        %2461 = vmatprep.subr.mxu0 0.0
        %2462 = vmatpush2.msra.mxu0 0.0
        %2463 = vmatprep.subr.mxu0 0.0
        %2464 = vmatpush2.msra.mxu0 0.0
        %2465 = vmatprep.subr.mxu0 0.0
        %2466 = vmatpush2.msra.mxu0 0.0
        %2467 = vmatprep.subr.mxu0 0.0
        %2468 = vmatpush2.msra.mxu0 0.0
        %2469 = vmatprep.subr.mxu0 0.0
        %2470 = vmatpush2.msra.mxu0 0.0
        %2471 = vmatprep.subr.mxu0 0.0
        %2472 = vmatpush2.msra.mxu0 0.0
        %2473 = vmatprep.subr.mxu0 0.0
        %2474 = vmatpush2.msra.mxu0 0.0
        %2475 = vmatprep.subr.mxu0 0.0
        %2476 = vmatpush2.msra.mxu0 0.0
        %2477 = vmatprep.subr.mxu0 0.0
        %2478 = vmatpush2.msra.mxu0 0.0
        %2479 = vmatprep.mubr.f32.mxu0 0.0
        %2480 = vmatmul.mubr.f32.gmra.mxu0 %v2413
        %v2481 = vpop.f32.mrf.mxu0
        %v2482 = vadd.f32 0.0, %v2481
        %v2483 = vpop.f32.mrf.mxu0
        %2484 = vdwg.mxu0
        %v2486 = vsel %vm1694, %v2259, 0
        %2488 = vmatprep.subr.mxu0 0.0
        %2489 = vmatpush1.msra.mxu0 0.0
        %2490 = vmatprep.subr.mxu0 0.0
        %2491 = vmatpush1.msra.mxu0 0.0
        %2492 = vmatprep.subr.mxu0 0.0
        %2493 = vmatpush1.msra.mxu0 0.0
        %2494 = vmatprep.subr.mxu0 0.0
        %2495 = vmatpush1.msra.mxu0 0.0
        %2496 = vmatprep.subr.mxu0 0.0
        %2497 = vmatpush1.msra.mxu0 0.0
        %2498 = vmatprep.subr.mxu0 0.0
        %2499 = vmatpush1.msra.mxu0 0.0
        %2500 = vmatprep.subr.mxu0 0.0
        %2501 = vmatpush1.msra.mxu0 0.0
        %2502 = vmatprep.subr.mxu0 0.0
        %2503 = vmatpush1.msra.mxu0 0.0
        %2504 = vmatprep.subr.mxu0 0.0
        %2505 = vmatpush1.msra.mxu0 0.0
        %2506 = vmatprep.subr.mxu0 0.0
        %2507 = vmatpush1.msra.mxu0 0.0
        %2508 = vmatprep.subr.mxu0 0.0
        %2509 = vmatpush1.msra.mxu0 0.0
        %2510 = vmatprep.subr.mxu0 0.0
        %2511 = vmatpush1.msra.mxu0 0.0
        %2512 = vmatprep.subr.mxu0 0.0
        %2513 = vmatpush1.msra.mxu0 0.0
        %2514 = vmatprep.subr.mxu0 0.0
        %2515 = vmatpush1.msra.mxu0 0.0
        %2516 = vmatprep.subr.mxu0 0.0
        %2517 = vmatpush1.msra.mxu0 0.0
        %2518 = vmatprep.subr.mxu0 0.0
        %2519 = vmatpush1.msra.mxu0 %v2337
        %2520 = vmatprep.subr.mxu0 0.0
        %2521 = vmatpush2.msra.mxu0 0.0
        %2522 = vmatprep.subr.mxu0 0.0
        %2523 = vmatpush2.msra.mxu0 0.0
        %2524 = vmatprep.subr.mxu0 0.0
        %2525 = vmatpush2.msra.mxu0 0.0
        %2526 = vmatprep.subr.mxu0 0.0
        %2527 = vmatpush2.msra.mxu0 0.0
        %2528 = vmatprep.subr.mxu0 0.0
        %2529 = vmatpush2.msra.mxu0 0.0
        %2530 = vmatprep.subr.mxu0 0.0
        %2531 = vmatpush2.msra.mxu0 0.0
        %2532 = vmatprep.subr.mxu0 0.0
        %2533 = vmatpush2.msra.mxu0 0.0
        %2534 = vmatprep.subr.mxu0 0.0
        %2535 = vmatpush2.msra.mxu0 0.0
        %2536 = vmatprep.subr.mxu0 0.0
        %2537 = vmatpush2.msra.mxu0 0.0
        %2538 = vmatprep.subr.mxu0 0.0
        %2539 = vmatpush2.msra.mxu0 0.0
        %2540 = vmatprep.subr.mxu0 0.0
        %2541 = vmatpush2.msra.mxu0 0.0
        %2542 = vmatprep.subr.mxu0 0.0
        %2543 = vmatpush2.msra.mxu0 0.0
        %2544 = vmatprep.subr.mxu0 0.0
        %2545 = vmatpush2.msra.mxu0 0.0
        %2546 = vmatprep.subr.mxu0 0.0
        %2547 = vmatpush2.msra.mxu0 0.0
        %2548 = vmatprep.subr.mxu0 0.0
        %2549 = vmatpush2.msra.mxu0 0.0
        %2550 = vmatprep.subr.mxu0 0.0
        %2551 = vmatpush2.msra.mxu0 0.0
        %2552 = vmatprep.mubr.f32.mxu0 0.0
        %2553 = vmatmul.mubr.f32.gmra.mxu0 %v2486
        %v2554 = vpop.f32.mrf.mxu0
        %v2555 = vadd.f32 0.0, %v2554
        %v2556 = vpop.f32.mrf.mxu0
        %2557 = vdwg.mxu0
        %v2559 = vsel %vm1694, %v2332, 0
        %2561 = vmatprep.subr.mxu0 0.0
        %2562 = vmatpush1.msra.mxu0 0.0
        %2563 = vmatprep.subr.mxu0 0.0
        %2564 = vmatpush1.msra.mxu0 0.0
        %2565 = vmatprep.subr.mxu0 0.0
        %2566 = vmatpush1.msra.mxu0 0.0
        %2567 = vmatprep.subr.mxu0 0.0
        %2568 = vmatpush1.msra.mxu0 0.0
        %2569 = vmatprep.subr.mxu0 0.0
        %2570 = vmatpush1.msra.mxu0 0.0
        %2571 = vmatprep.subr.mxu0 0.0
        %2572 = vmatpush1.msra.mxu0 0.0
        %2573 = vmatprep.subr.mxu0 0.0
        %2574 = vmatpush1.msra.mxu0 0.0
        %2575 = vmatprep.subr.mxu0 0.0
        %2576 = vmatpush1.msra.mxu0 0.0
        %2577 = vmatprep.subr.mxu0 0.0
        %2578 = vmatpush1.msra.mxu0 0.0
        %2579 = vmatprep.subr.mxu0 0.0
        %2580 = vmatpush1.msra.mxu0 0.0
        %2581 = vmatprep.subr.mxu0 0.0
        %2582 = vmatpush1.msra.mxu0 0.0
        %2583 = vmatprep.subr.mxu0 0.0
        %2584 = vmatpush1.msra.mxu0 0.0
        %2585 = vmatprep.subr.mxu0 0.0
        %2586 = vmatpush1.msra.mxu0 0.0
        %2587 = vmatprep.subr.mxu0 0.0
        %2588 = vmatpush1.msra.mxu0 0.0
        %2589 = vmatprep.subr.mxu0 0.0
        %2590 = vmatpush1.msra.mxu0 0.0
        %2591 = vmatprep.subr.mxu0 0.0
        %2592 = vmatpush1.msra.mxu0 %v2338
        %2593 = vmatprep.subr.mxu0 0.0
        %2594 = vmatpush2.msra.mxu0 0.0
        %2595 = vmatprep.subr.mxu0 0.0
        %2596 = vmatpush2.msra.mxu0 0.0
        %2597 = vmatprep.subr.mxu0 0.0
        %2598 = vmatpush2.msra.mxu0 0.0
        %2599 = vmatprep.subr.mxu0 0.0
        %2600 = vmatpush2.msra.mxu0 0.0
        %2601 = vmatprep.subr.mxu0 0.0
        %2602 = vmatpush2.msra.mxu0 0.0
        %2603 = vmatprep.subr.mxu0 0.0
        %2604 = vmatpush2.msra.mxu0 0.0
        %2605 = vmatprep.subr.mxu0 0.0
        %2606 = vmatpush2.msra.mxu0 0.0
        %2607 = vmatprep.subr.mxu0 0.0
        %2608 = vmatpush2.msra.mxu0 0.0
        %2609 = vmatprep.subr.mxu0 0.0
        %2610 = vmatpush2.msra.mxu0 0.0
        %2611 = vmatprep.subr.mxu0 0.0
        %2612 = vmatpush2.msra.mxu0 0.0
        %2613 = vmatprep.subr.mxu0 0.0
        %2614 = vmatpush2.msra.mxu0 0.0
        %2615 = vmatprep.subr.mxu0 0.0
        %2616 = vmatpush2.msra.mxu0 0.0
        %2617 = vmatprep.subr.mxu0 0.0
        %2618 = vmatpush2.msra.mxu0 0.0
        %2619 = vmatprep.subr.mxu0 0.0
        %2620 = vmatpush2.msra.mxu0 0.0
        %2621 = vmatprep.subr.mxu0 0.0
        %2622 = vmatpush2.msra.mxu0 0.0
        %2623 = vmatprep.subr.mxu0 0.0
        %2624 = vmatpush2.msra.mxu0 0.0
        %2625 = vmatprep.mubr.f32.mxu0 0.0
        %2626 = vmatmul.mubr.f32.gmra.mxu0 %v2559
        %v2627 = vpop.f32.mrf.mxu0
        %v2628 = vadd.f32 0.0, %v2627
        %v2629 = vpop.f32.mrf.mxu0
        %2630 = vdwg.mxu0
        %v2631 = vadd.f32 %v2409, %v2482
        %v2632 = vadd.f32 %v2631, %v2555
        %v2633 = vadd.f32 %v2632, %v2628
        %v2634 = vld [vmem:[%s10] sm:$0x1]
        %v2636 = vlaneseq
        %v2637 = vshrl.u32 %v2636, 7
        %v2638 = vsub.s32 0, %v2637
        %v2639 = vrot.slane %v2634, %v2638
        %v2641 = vadd.f32 %v2633, %v2639
        %v2642 = vadd.f32 %v544, %v2641
        %v2643 = vld [vmem:[%s11] sm:$0x1]
        %v2644 = vld [vmem:[%s12] sm:$0x1]
        %2645 = vadd.xlane.f32.xlu0 %v2642
        %v2646 = vpop.xlane.xlu0 %2645
        %v2647 = vmul.f32 %v2646, 0.03125
        %v2648 = vsub.f32 %v2642, %v2647
        %v2649 = vmul.f32 %v2648, %v549
        %v2650 = vmul.f32 %v2649, %v2649
        %2651 = vadd.xlane.f32.xlu0 %v2650
        %v2652 = vpop.xlane.xlu0 %2651
        %v2653 = vmul.f32 %v2652, 0.03125
        %v2654 = vadd.f32 %v2653, 1e-05
        %v2655 = vrsqrt.pop %v2654
        %v2656 = vmul.f32 %v2649, %v2655
        %v2658 = vlaneseq
        %v2659 = vshrl.u32 %v2658, 7
        %v2660 = vsub.s32 0, %v2659
        %v2661 = vrot.slane %v2643, %v2660
        %v2663 = vmul.f32 %v2656, %v2661
        %v2665 = vlaneseq
        %v2666 = vshrl.u32 %v2665, 7
        %v2667 = vsub.s32 0, %v2666
        %v2668 = vrot.slane %v2644, %v2667
        %v2670 = vadd.f32 %v2663, %v2668
        %v2671 = vld [vmem:[%s13] sm:$0xff]
        %v2672 = vld [vmem:[%s13 + $0x8] sm:$0xff]
        %v2673 = vld [vmem:[%s13 + $0x10] sm:$0xff]
        %v2674 = vld [vmem:[%s13 + $0x18] sm:$0xff]
        %v2675 = vld [vmem:[%s13 + $0x20] sm:$0xff]
        %v2676 = vld [vmem:[%s13 + $0x28] sm:$0xff]
        %v2677 = vld [vmem:[%s13 + $0x30] sm:$0xff]
        %v2678 = vld [vmem:[%s13 + $0x38] sm:$0xff]
        %v2679 = vld [vmem:[%s13 + $0x40] sm:$0xff]
        %v2680 = vld [vmem:[%s13 + $0x48] sm:$0xff]
        %v2681 = vld [vmem:[%s13 + $0x50] sm:$0xff]
        %v2682 = vld [vmem:[%s13 + $0x58] sm:$0xff]
        %v2683 = vld [vmem:[%s13 + $0x60] sm:$0xff]
        %v2684 = vld [vmem:[%s13 + $0x68] sm:$0xff]
        %v2685 = vld [vmem:[%s13 + $0x70] sm:$0xff]
        %v2686 = vld [vmem:[%s13 + $0x78] sm:$0xff]
        %v2687 = vld [vmem:[%s14] sm:$0x1]
        %v2689 = vlaneseq
        %v2690 = vshrl.u32 %v2689, 7
        %v2691 = vsub.s32 0, %v2690
        %v2692 = vrot.slane %v2687, %v2691
        %2694 = vmatprep.subr.mxu0 0.0
        %2695 = vmatpush1.msra.mxu0 %v2686
        %2696 = vmatprep.subr.mxu0 0.0
        %2697 = vmatpush1.msra.mxu0 %v2685
        %2698 = vmatprep.subr.mxu0 0.0
        %2699 = vmatpush1.msra.mxu0 %v2684
        %2700 = vmatprep.subr.mxu0 0.0
        %2701 = vmatpush1.msra.mxu0 %v2683
        %2702 = vmatprep.subr.mxu0 0.0
        %2703 = vmatpush1.msra.mxu0 %v2682
        %2704 = vmatprep.subr.mxu0 0.0
        %2705 = vmatpush1.msra.mxu0 %v2681
        %2706 = vmatprep.subr.mxu0 0.0
        %2707 = vmatpush1.msra.mxu0 %v2680
        %2708 = vmatprep.subr.mxu0 0.0
        %2709 = vmatpush1.msra.mxu0 %v2679
        %2710 = vmatprep.subr.mxu0 0.0
        %2711 = vmatpush1.msra.mxu0 %v2678
        %2712 = vmatprep.subr.mxu0 0.0
        %2713 = vmatpush1.msra.mxu0 %v2677
        %2714 = vmatprep.subr.mxu0 0.0
        %2715 = vmatpush1.msra.mxu0 %v2676
        %2716 = vmatprep.subr.mxu0 0.0
        %2717 = vmatpush1.msra.mxu0 %v2675
        %2718 = vmatprep.subr.mxu0 0.0
        %2719 = vmatpush1.msra.mxu0 %v2674
        %2720 = vmatprep.subr.mxu0 0.0
        %2721 = vmatpush1.msra.mxu0 %v2673
        %2722 = vmatprep.subr.mxu0 0.0
        %2723 = vmatpush1.msra.mxu0 %v2672
        %2724 = vmatprep.subr.mxu0 0.0
        %2725 = vmatpush1.msra.mxu0 %v2671
        %2726 = vmatprep.subr.mxu0 0.0
        %2727 = vmatpush2.msra.mxu0 0.0
        %2728 = vmatprep.subr.mxu0 0.0
        %2729 = vmatpush2.msra.mxu0 0.0
        %2730 = vmatprep.subr.mxu0 0.0
        %2731 = vmatpush2.msra.mxu0 0.0
        %2732 = vmatprep.subr.mxu0 0.0
        %2733 = vmatpush2.msra.mxu0 0.0
        %2734 = vmatprep.subr.mxu0 0.0
        %2735 = vmatpush2.msra.mxu0 0.0
        %2736 = vmatprep.subr.mxu0 0.0
        %2737 = vmatpush2.msra.mxu0 0.0
        %2738 = vmatprep.subr.mxu0 0.0
        %2739 = vmatpush2.msra.mxu0 0.0
        %2740 = vmatprep.subr.mxu0 0.0
        %2741 = vmatpush2.msra.mxu0 0.0
        %2742 = vmatprep.subr.mxu0 0.0
        %2743 = vmatpush2.msra.mxu0 0.0
        %2744 = vmatprep.subr.mxu0 0.0
        %2745 = vmatpush2.msra.mxu0 0.0
        %2746 = vmatprep.subr.mxu0 0.0
        %2747 = vmatpush2.msra.mxu0 0.0
        %2748 = vmatprep.subr.mxu0 0.0
        %2749 = vmatpush2.msra.mxu0 0.0
        %2750 = vmatprep.subr.mxu0 0.0
        %2751 = vmatpush2.msra.mxu0 0.0
        %2752 = vmatprep.subr.mxu0 0.0
        %2753 = vmatpush2.msra.mxu0 0.0
        %2754 = vmatprep.subr.mxu0 0.0
        %2755 = vmatpush2.msra.mxu0 0.0
        %2756 = vmatprep.subr.mxu0 0.0
        %2757 = vmatpush2.msra.mxu0 0.0
        %2758 = vmatprep.mubr.f32.mxu0 0.0
        %2759 = vmatmul.mubr.f32.gmra.mxu0 %v2670
        %v2760 = vpop.f32.mrf.mxu0
        %v2761 = vadd.f32 %v2692, %v2760
        %v2762 = vpop.f32.mrf.mxu0
        %2763 = vdwg.mxu0
        %v2764 = vmax.f32 %v2761, 0.0
        %v2765 = vld [vmem:[%s15] sm:$0xff]
        %v2766 = vld [vmem:[%s15 + $0x8] sm:$0xff]
        %v2767 = vld [vmem:[%s15 + $0x10] sm:$0xff]
        %v2768 = vld [vmem:[%s15 + $0x18] sm:$0xff]
        %v2769 = vld [vmem:[%s15 + $0x20] sm:$0xff]
        %v2770 = vld [vmem:[%s15 + $0x28] sm:$0xff]
        %v2771 = vld [vmem:[%s15 + $0x30] sm:$0xff]
        %v2772 = vld [vmem:[%s15 + $0x38] sm:$0xff]
        %v2773 = vld [vmem:[%s16] sm:$0x1]
        %v2775 = vlaneseq
        %v2776 = vshrl.u32 %v2775, 7
        %v2777 = vsub.s32 0, %v2776
        %v2778 = vrot.slane %v2773, %v2777
        %vm2780 = vcmask 523264
        %v2782 = vsel %vm2780, %v2764, 0
        %2784 = vmatprep.subr.mxu0 0.0
        %2785 = vmatpush1.msra.mxu0 0.0
        %2786 = vmatprep.subr.mxu0 0.0
        %2787 = vmatpush1.msra.mxu0 0.0
        %2788 = vmatprep.subr.mxu0 0.0
        %2789 = vmatpush1.msra.mxu0 0.0
        %2790 = vmatprep.subr.mxu0 0.0
        %2791 = vmatpush1.msra.mxu0 0.0
        %2792 = vmatprep.subr.mxu0 0.0
        %2793 = vmatpush1.msra.mxu0 0.0
        %2794 = vmatprep.subr.mxu0 0.0
        %2795 = vmatpush1.msra.mxu0 0.0
        %2796 = vmatprep.subr.mxu0 0.0
        %2797 = vmatpush1.msra.mxu0 0.0
        %2798 = vmatprep.subr.mxu0 0.0
        %2799 = vmatpush1.msra.mxu0 0.0
        %2800 = vmatprep.subr.mxu0 0.0
        %2801 = vmatpush1.msra.mxu0 %v2772
        %2802 = vmatprep.subr.mxu0 0.0
        %2803 = vmatpush1.msra.mxu0 %v2771
        %2804 = vmatprep.subr.mxu0 0.0
        %2805 = vmatpush1.msra.mxu0 %v2770
        %2806 = vmatprep.subr.mxu0 0.0
        %2807 = vmatpush1.msra.mxu0 %v2769
        %2808 = vmatprep.subr.mxu0 0.0
        %2809 = vmatpush1.msra.mxu0 %v2768
        %2810 = vmatprep.subr.mxu0 0.0
        %2811 = vmatpush1.msra.mxu0 %v2767
        %2812 = vmatprep.subr.mxu0 0.0
        %2813 = vmatpush1.msra.mxu0 %v2766
        %2814 = vmatprep.subr.mxu0 0.0
        %2815 = vmatpush1.msra.mxu0 %v2765
        %2816 = vmatprep.subr.mxu0 0.0
        %2817 = vmatpush2.msra.mxu0 0.0
        %2818 = vmatprep.subr.mxu0 0.0
        %2819 = vmatpush2.msra.mxu0 0.0
        %2820 = vmatprep.subr.mxu0 0.0
        %2821 = vmatpush2.msra.mxu0 0.0
        %2822 = vmatprep.subr.mxu0 0.0
        %2823 = vmatpush2.msra.mxu0 0.0
        %2824 = vmatprep.subr.mxu0 0.0
        %2825 = vmatpush2.msra.mxu0 0.0
        %2826 = vmatprep.subr.mxu0 0.0
        %2827 = vmatpush2.msra.mxu0 0.0
        %2828 = vmatprep.subr.mxu0 0.0
        %2829 = vmatpush2.msra.mxu0 0.0
        %2830 = vmatprep.subr.mxu0 0.0
        %2831 = vmatpush2.msra.mxu0 0.0
        %2832 = vmatprep.subr.mxu0 0.0
        %2833 = vmatpush2.msra.mxu0 0.0
        %2834 = vmatprep.subr.mxu0 0.0
        %2835 = vmatpush2.msra.mxu0 0.0
        %2836 = vmatprep.subr.mxu0 0.0
        %2837 = vmatpush2.msra.mxu0 0.0
        %2838 = vmatprep.subr.mxu0 0.0
        %2839 = vmatpush2.msra.mxu0 0.0
        %2840 = vmatprep.subr.mxu0 0.0
        %2841 = vmatpush2.msra.mxu0 0.0
        %2842 = vmatprep.subr.mxu0 0.0
        %2843 = vmatpush2.msra.mxu0 0.0
        %2844 = vmatprep.subr.mxu0 0.0
        %2845 = vmatpush2.msra.mxu0 0.0
        %2846 = vmatprep.subr.mxu0 0.0
        %2847 = vmatpush2.msra.mxu0 0.0
        %2848 = vmatprep.mubr.f32.mxu0 0.0
        %2849 = vmatmul.mubr.f32.gmra.mxu0 %v2782
        %v2850 = vpop.f32.mrf.mxu0
        %v2851 = vadd.f32 %v2778, %v2850
        %v2852 = vpop.f32.mrf.mxu0
        %2853 = vdwg.mxu0
        %v2854 = vadd.f32 %v2642, %v2851
        %2855 = vst [vmem:[%s539] sm:$0xff] %v2854
        %s2856 = sand.u32 %s401, 1
        %s2857 = scalar_lea.sflag [#allocation3], %s2856
        %s2858 = sand.u32 %s401, 1
        %s2859 = smul.addr %s2858, 8
        %s2860 = scalar_lea.vmem [#allocation2], %s2859
        // Predicated region
        $region89: #{tpu_custom_call.1} parent=87 // pred_check
          %p2861 = pneg %p411
        $region90: #{tpu_custom_call.1} parent=87 // pred_check_branch
          %2863 = sbr.rel (%p2861) target = $region92
        $region91: #{tpu_custom_call.1} parent=87 // pred_region
          %s2865 = ssub.s32 128, 128
          %2866 = vsyncadd %s2857, %s2865
          %s2867 = smul.addr %s31, 128
          %s2868 = scalar_lea.hbm %s17, %s2867
          %s2870 = sshll.u32 %s2860, 4
          %s2871 = int_to_ptr.vmem [resolvable:$true] %s2870
          %2873 = dma.vmem_to_hbm [thread:$0]  %s2871, 128, %s2868, %s2857
        $region92: #{tpu_custom_call.1} parent=87 // pred_fallthru
          _
      $region88: #{tpu_custom_call.1} parent=5 // pred_fallthru
        _
      %p2874 = scmp.le.s32.totalorder 2, %s26
      // Predicated region
      $region93: #{tpu_custom_call.1} parent=5 // pred_check
        %p2875 = pneg %p2874
      $region94: #{tpu_custom_call.1} parent=5 // pred_check_branch
        %2877 = sbr.rel (%p2875) target = $region96
      $region95: #{tpu_custom_call.1} parent=5 // pred_region
        %s2878 = ssub.s32 %s26, 2
        // Predicated region
        $region97: #{tpu_custom_call.1} parent=95 // pred_check
          %p2879 = pneg %p417
        $region98: #{tpu_custom_call.1} parent=95 // pred_check_branch
          %2881 = sbr.rel (%p2879) target = $region100
        $region99: #{tpu_custom_call.1} parent=95 // pred_region
          %s2882 = sand.u32 %s402, 1
          %s2883 = scalar_lea.sflag [#allocation3], %s2882
          %s2884 = sand.u32 %s402, 1
          %s2885 = smul.addr %s2884, 8
          %s2886 = scalar_lea.vmem [#allocation2], %s2885
          %2887 = dma.done %s2883, 128
        $region100: #{tpu_custom_call.1} parent=95 // pred_fallthru
          _
      $region96: #{tpu_custom_call.1} parent=5 // pred_fallthru
        _
    $region6: #{tpu_custom_call.1} parent=1 // loop_footer
      %s30 = sadd.s32 1, %s26
    $region7: #{tpu_custom_call.1} parent=1 // loop_footer_branch
      %25 = sbr.rel target = $region3
    $region8: #{tpu_custom_call.1} parent=1 // loop_exit
      _
    %2888 = vsyncpa [#allocation3], 1
    %s2889 = scalar_lea.sflag [#allocation3], 1
    %2890 = vsyncpa %s2889, 1

</llo_original>
